<compile_context>
chip_gen: v7x
topology: tpu7x:2x2x1
jax: 0.10.0
libtpu: 0.0.40
codegen_flags: <defaults>
</compile_context>

<pallas_src>
import functools

import jax
import jax.numpy as jnp
from jax import lax
from jax.experimental import pallas as pl
from jax.experimental.pallas import tpu as pltpu


def _layer_norm(x, w, b, eps=1e-5):
    # x: (R, C) f32 ; w, b: (1, C) f32
    mean = jnp.mean(x, axis=-1, keepdims=True)
    var = jnp.mean((x - mean) ** 2, axis=-1, keepdims=True)
    return (x - mean) * lax.rsqrt(var + eps) * w + b


def block_kernel(x_ref,
                 ln1w_ref, ln1b_ref,
                 wq_ref, wk_ref, wv_ref,
                 wproj_ref, bproj_ref,
                 ln2w_ref, ln2b_ref,
                 w1_ref, b1_ref,
                 w2_ref, b2_ref,
                 o_ref,
                 *, n_heads, bb, seq_len, mm_dtype):
    T = seq_len
    R, C = x_ref.shape            # R = bb * T rows of this batch-tile
    hs = C // n_heads

    x = x_ref[...].astype(jnp.float32)                      # (R, C) f32

    # ------------------ self-attention branch -----------------------------
    ln1 = _layer_norm(x, ln1w_ref[...], ln1b_ref[...])      # (R, C) f32
    ln1_m = ln1.astype(mm_dtype)

    # Full-width QKV projections; softmax scale already folded into Wq.
    q3 = jnp.dot(ln1_m, wq_ref[...], preferred_element_type=jnp.float32
                 ).reshape(bb, T, C).astype(mm_dtype)        # (bb, T, C)
    k3 = jnp.dot(ln1_m, wk_ref[...], preferred_element_type=jnp.float32
                 ).reshape(bb, T, C).astype(mm_dtype)
    v3 = jnp.dot(ln1_m, wv_ref[...], preferred_element_type=jnp.float32
                 ).reshape(bb, T, C).astype(mm_dtype)

    # Causal mask (scores stay f32 so -1e30 / max-subtract are safe).
    row = lax.broadcasted_iota(jnp.int32, (T, T), 0)
    col = lax.broadcasted_iota(jnp.int32, (T, T), 1)
    causal = (row >= col)[None, :, :]                        # (1, T, T)
    neg_inf = jnp.float32(-1e30)

    # Per-head attention with batched (bb) 3-D einsums; head outputs are
    # concatenated once and projected with a SINGLE full-K (R,C)@(C,C) matmul.
    head_outs = []
    for h in range(n_heads):                                 # static unroll
        sl = slice(h * hs, (h + 1) * hs)
        qh = q3[:, :, sl]                                    # (bb, T, hs)
        kh = k3[:, :, sl]
        vh = v3[:, :, sl]

        s = jnp.einsum('btd,bsd->bts', qh, kh,
                       preferred_element_type=jnp.float32)   # (bb, T, T) f32
        s = jnp.where(causal, s, neg_inf)
        s = s - jnp.max(s, axis=-1, keepdims=True)
        p = jnp.exp(s)
        p = p / jnp.sum(p, axis=-1, keepdims=True)           # exact softmax

        head_outs.append(jnp.einsum('bts,bsd->btd', p.astype(mm_dtype), vh,
                                    preferred_element_type=jnp.float32))

    attn = jnp.concatenate(head_outs, axis=-1).reshape(R, C)  # (R, C) f32
    sa = jnp.dot(attn.astype(mm_dtype), wproj_ref[...],
                 preferred_element_type=jnp.float32) + bproj_ref[...]
    x1 = x + sa                                              # residual 1

    # ------------------ feed-forward branch -------------------------------
    ln2 = _layer_norm(x1, ln2w_ref[...], ln2b_ref[...])      # (R, C) f32
    h1 = jnp.dot(ln2.astype(mm_dtype), w1_ref[...],
                 preferred_element_type=jnp.float32) + b1_ref[...]
    h1 = jnp.maximum(h1, 0.0)                                # ReLU (f32)
    ffn = jnp.dot(h1.astype(mm_dtype), w2_ref[...],
                  preferred_element_type=jnp.float32) + b2_ref[...]

    o_ref[...] = (x1 + ffn).astype(o_ref.dtype)              # residual 2


# ----------------------------- sizing helpers -------------------------------

def _vmem_budget_bytes():
    """Per-core physical VMEM with headroom for compiler scratch/spill."""
    try:
        phys = int(pltpu.get_tpu_info().vmem_capacity_bytes)
    except Exception:
        phys = 64 * 1024 * 1024          # conservative default (v7x-sized)
    return int(phys * 0.85)              # ~54 MiB v7x, ~108 MiB v5e/v6e


def _vmem_need_bytes(bb, T, C, Hd, x_itemsize, mm_dtype):
    """Honest (conservative) estimate of kernel VMEM use for a batch-tile."""
    R = bb * T
    wbits = jnp.dtype(mm_dtype).itemsize
    weight_bytes = 2 * (4 * C * C + 2 * C * Hd) * wbits   # worst case 2x-buffered
    small_bytes = 2 * (6 * C + Hd) * 4                    # LN params + biases
    io_bytes = 2 * 2 * R * C * x_itemsize                 # x in + out, 2x-buffered
    act_bytes = R * (12 * C + 3 * Hd) * 4                 # ln/q/k/v/attn/ffn temps
    score_bytes = 3 * bb * T * T * 4                      # (bb,T,T) score/prob temps
    return weight_bytes + small_bytes + io_bytes + act_bytes + score_bytes + (4 << 20)


def _pick_batch_tile(B, T, C, Hd, target_rows, budget, x_itemsize, mm_dtype):
    divisors = [d for d in range(1, B + 1) if B % d == 0]
    # (8,128) rule only applies when the block is not the full array.
    valid = [d for d in divisors
             if d == B or ((d * T) % 8 == 0 and C % 128 == 0)]
    pick = None
    # Prefer >= 2 grid steps (v7x megacore can shard the parallel axis).
    for d in valid:
        if d * T >= target_rows and (B // d) >= 2:
            pick = d
            break
    if pick is None:
        for d in valid:
            if d * T >= target_rows:
                pick = d
                break
    if pick is None:
        pick = valid[-1]                 # whole batch (always valid)
    # Shrink if the estimated VMEM footprint exceeds the per-core budget.
    while _vmem_need_bytes(pick, T, C, Hd, x_itemsize, mm_dtype) > budget:
        smaller = [d for d in valid if d < pick]
        if not smaller:
            break
        pick = smaller[-1]
    return pick


# ------------------------------- wrapper ------------------------------------

def prepare_params(params, *, n_heads, mm_dtype=jnp.bfloat16):
    """One-time weight prep: cast matmul weights to bf16 and fold the 1/sqrt(hs)
    softmax scale into Wq. LN params / biases stay f32."""
    C = params["wq"].shape[0]
    hs = C // n_heads
    scale = jnp.float32(hs) ** -0.5
    out = dict(params)
    out["wq"] = (params["wq"] * scale).astype(mm_dtype)
    for k in ("wk", "wv", "wproj", "w1", "w2"):
        out[k] = params[k].astype(mm_dtype)
    return out


def transformer_block(x, params, *, n_heads, mm_dtype=jnp.bfloat16,
                      target_rows=512):
    """params must come from prepare_params (bf16 weights, scale folded in Wq)."""
    B, T, C = x.shape
    Hd = params["w1"].shape[1]            # hidden = expand * C
    assert C % n_heads == 0

    budget = _vmem_budget_bytes()
    bb = _pick_batch_tile(B, T, C, Hd, target_rows, budget,
                          x.dtype.itemsize, mm_dtype)
    R = bb * T
    grid = (B // bb,)

    vmem_limit = int(min(budget, max(32 << 20,
                                     _vmem_need_bytes(bb, T, C, Hd,
                                                      x.dtype.itemsize,
                                                      mm_dtype))))

    # Flatten activations to a lane/sublane-dense (B*T, C) slab.
    x2 = x.reshape(B * T, C)

    def as_mm(w):                         # no-op for prepared params
        return w if w.dtype == mm_dtype else w.astype(mm_dtype)

    kernel = functools.partial(block_kernel, n_heads=n_heads, bb=bb,
                               seq_len=T, mm_dtype=mm_dtype)

    def _build(single_buffer_weights):
        def const_spec(shape):
            if single_buffer_weights:
                return pl.BlockSpec(shape, lambda i: (0, 0),
                                    pipeline_mode=pl.Buffered(1))
            return pl.BlockSpec(shape, lambda i: (0, 0))

        in_specs = [
            pl.BlockSpec((R, C), lambda i: (i, 0)),     # x rows (batch-tile)
            const_spec((1, C)), const_spec((1, C)),     # ln1 w, b
            const_spec((C, C)), const_spec((C, C)), const_spec((C, C)),  # Wq/Wk/Wv
            const_spec((C, C)), const_spec((1, C)),     # Wproj, bproj
            const_spec((1, C)), const_spec((1, C)),     # ln2 w, b
            const_spec((C, Hd)), const_spec((1, Hd)),   # W1, b1
            const_spec((Hd, C)), const_spec((1, C)),    # W2, b2
        ]
        return pl.pallas_call(
            kernel,
            out_shape=jax.ShapeDtypeStruct((B * T, C), x.dtype),
            grid_spec=pltpu.PrefetchScalarGridSpec(
                num_scalar_prefetch=0,
                grid=grid,
                in_specs=in_specs,
                out_specs=pl.BlockSpec((R, C), lambda i: (i, 0)),
            ),
            compiler_params=pltpu.CompilerParams(
                dimension_semantics=("parallel",),
                vmem_limit_bytes=vmem_limit),
        )

    args = (x2,
            params["ln1_w"], params["ln1_b"],
            as_mm(params["wq"]), as_mm(params["wk"]), as_mm(params["wv"]),
            as_mm(params["wproj"]), params["bproj"],
            params["ln2_w"], params["ln2_b"],
            as_mm(params["w1"]), params["b1"],
            as_mm(params["w2"]), params["b2"])

    use_single = hasattr(pl, "Buffered")
    try:
        out2 = _build(use_single)(*args)
    except Exception:
        if not use_single:
            raise
        out2 = _build(False)(*args)       # fallback: default double-buffering

    return out2.reshape(B, T, C)


# ------------------------------ reference -----------------------------------

def reference_block(x, pp, *, n_heads, mm_dtype=jnp.bfloat16):
    """Pure-JAX reference mirroring the kernel's exact op sequence and
    mixed-precision policy (bf16 matmul operands with f32 accumulation, f32
    element-wise math, softmax scale folded into Wq). Takes prepared params."""
    B, T, C = x.shape
    hs = C // n_heads

    def ln(v, w, b):
        m = jnp.mean(v, -1, keepdims=True)
        var = jnp.mean((v - m) ** 2, -1, keepdims=True)
        return (v - m) * lax.rsqrt(var + 1e-5) * w.reshape(-1) + b.reshape(-1)

    def mm(a, w):
        return jnp.dot(a.astype(mm_dtype), w, preferred_element_type=jnp.float32)

    x = x.astype(jnp.float32)
    l1 = ln(x, pp["ln1_w"], pp["ln1_b"])
    q = mm(l1, pp["wq"]).astype(mm_dtype).reshape(B, T, n_heads, hs)
    k = mm(l1, pp["wk"]).astype(mm_dtype).reshape(B, T, n_heads, hs)
    v = mm(l1, pp["wv"]).astype(mm_dtype).reshape(B, T, n_heads, hs)
    s = jnp.einsum("bthd,bshd->bhts", q, k, preferred_element_type=jnp.float32)
    mask = jnp.tril(jnp.ones((T, T), bool))[None, None]
    s = jnp.where(mask, s, jnp.float32(-1e30))
    s = s - jnp.max(s, -1, keepdims=True)
    p = jnp.exp(s)
    p = p / jnp.sum(p, -1, keepdims=True)
    o = jnp.einsum("bhts,bshd->bthd", p.astype(mm_dtype), v,
                   preferred_element_type=jnp.float32).reshape(B, T, C)
    sa = mm(o, pp["wproj"]) + pp["bproj"].reshape(-1)
    x1 = x + sa
    l2 = ln(x1, pp["ln2_w"], pp["ln2_b"])
    h1 = jnp.maximum(mm(l2, pp["w1"]) + pp["b1"].reshape(-1), 0.0)
    ffn = mm(h1, pp["w2"]) + pp["b2"].reshape(-1)
    return x1 + ffn


def init_params(key, n_embed, expand):
    C, H = n_embed, expand * n_embed
    ks = jax.random.split(key, 6)
    s = 0.2
    return {
        "ln1_w": jnp.ones((1, C), jnp.float32),
        "ln1_b": jnp.zeros((1, C), jnp.float32),
        "wq": jax.random.normal(ks[0], (C, C), jnp.float32) * s,
        "wk": jax.random.normal(ks[1], (C, C), jnp.float32) * s,
        "wv": jax.random.normal(ks[2], (C, C), jnp.float32) * s,
        "wproj": jax.random.normal(ks[3], (C, C), jnp.float32) * s,
        "bproj": jnp.zeros((1, C), jnp.float32),
        "ln2_w": jnp.ones((1, C), jnp.float32),
        "ln2_b": jnp.zeros((1, C), jnp.float32),
        "w1": jax.random.normal(ks[4], (C, H), jnp.float32) * s,
        "b1": jnp.zeros((1, H), jnp.float32),
        "w2": jax.random.normal(ks[5], (H, C), jnp.float32) * s,
        "b2": jnp.zeros((1, C), jnp.float32),
    }


if __name__ == "__main__":
    # Block(n_heads=4, n_embed=32, block_size=8, dropout=0.0, expand=4)
    n_heads, n_embed, block_size, expand = 4, 32, 8, 4
    B, T, C = 2, block_size, n_embed

    key = jax.random.PRNGKey(0)
    kx, kp = jax.random.split(key)
    x = jax.random.normal(kx, (B, T, C), jnp.float32)
    raw_params = init_params(kp, n_embed, expand)
    params = prepare_params(raw_params, n_heads=n_heads)   # one-time bf16 prep

    out = transformer_block(x, params, n_heads=n_heads)
    out = jax.block_until_ready(out)

    ref = reference_block(x, params, n_heads=n_heads)
    assert out.shape == (B, T, C)
    max_err = float(jnp.max(jnp.abs(out - ref)))
    assert max_err < 2e-2, f"max abs err {max_err}"

    print("KERNEL_OK")
</pallas_src>

<mosaic_0001>
module attributes {stable_mosaic.version = 11 : i64} {
  func.func @block_kernel(%arg0: i32, %arg1: memref<16x32xf32, #tpu.memory_space<vmem>>, %arg2: memref<1x32xf32, #tpu.memory_space<vmem>>, %arg3: memref<1x32xf32, #tpu.memory_space<vmem>>, %arg4: memref<32x32xbf16, #tpu.memory_space<vmem>>, %arg5: memref<32x32xbf16, #tpu.memory_space<vmem>>, %arg6: memref<32x32xbf16, #tpu.memory_space<vmem>>, %arg7: memref<32x32xbf16, #tpu.memory_space<vmem>>, %arg8: memref<1x32xf32, #tpu.memory_space<vmem>>, %arg9: memref<1x32xf32, #tpu.memory_space<vmem>>, %arg10: memref<1x32xf32, #tpu.memory_space<vmem>>, %arg11: memref<32x128xbf16, #tpu.memory_space<vmem>>, %arg12: memref<1x128xf32, #tpu.memory_space<vmem>>, %arg13: memref<128x32xbf16, #tpu.memory_space<vmem>>, %arg14: memref<1x32xf32, #tpu.memory_space<vmem>>, %arg15: memref<16x32xf32, #tpu.memory_space<vmem>>) attributes {dimension_semantics = [#tpu.dimension_semantics<parallel>], iteration_bounds = array<i64: 1>, scalar_prefetch = 0 : i64, scratch_operands = 0 : i64, tpu.core_type = #tpu.core_type<tc>, window_params = [{transform_indices = @transform_0, window_bounds = array<i64: 16, 32>}, {pipeline_mode = #tpu.pipeline_mode<synchronous>, transform_indices = @transform_1, window_bounds = array<i64: 1, 32>}, {pipeline_mode = #tpu.pipeline_mode<synchronous>, transform_indices = @transform_2, window_bounds = array<i64: 1, 32>}, {pipeline_mode = #tpu.pipeline_mode<synchronous>, transform_indices = @transform_3, window_bounds = array<i64: 32, 32>}, {pipeline_mode = #tpu.pipeline_mode<synchronous>, transform_indices = @transform_4, window_bounds = array<i64: 32, 32>}, {pipeline_mode = #tpu.pipeline_mode<synchronous>, transform_indices = @transform_5, window_bounds = array<i64: 32, 32>}, {pipeline_mode = #tpu.pipeline_mode<synchronous>, transform_indices = @transform_6, window_bounds = array<i64: 32, 32>}, {pipeline_mode = #tpu.pipeline_mode<synchronous>, transform_indices = @transform_7, window_bounds = array<i64: 1, 32>}, {pipeline_mode = #tpu.pipeline_mode<synchronous>, transform_indices = @transform_8, window_bounds = array<i64: 1, 32>}, {pipeline_mode = #tpu.pipeline_mode<synchronous>, transform_indices = @transform_9, window_bounds = array<i64: 1, 32>}, {pipeline_mode = #tpu.pipeline_mode<synchronous>, transform_indices = @transform_10, window_bounds = array<i64: 32, 128>}, {pipeline_mode = #tpu.pipeline_mode<synchronous>, transform_indices = @transform_11, window_bounds = array<i64: 1, 128>}, {pipeline_mode = #tpu.pipeline_mode<synchronous>, transform_indices = @transform_12, window_bounds = array<i64: 128, 32>}, {pipeline_mode = #tpu.pipeline_mode<synchronous>, transform_indices = @transform_13, window_bounds = array<i64: 1, 32>}, {transform_indices = @transform_14, window_bounds = array<i64: 16, 32>}]} {
    %c0 = arith.constant 0 : index
    %c0_0 = arith.constant 0 : index
    %0 = vector.load %arg1[%c0, %c0_0] : memref<16x32xf32, #tpu.memory_space<vmem>>, vector<16x32xf32>
    %c0_1 = arith.constant 0 : index
    %c0_2 = arith.constant 0 : index
    %1 = vector.load %arg2[%c0_1, %c0_2] : memref<1x32xf32, #tpu.memory_space<vmem>>, vector<1x32xf32>
    %c0_3 = arith.constant 0 : index
    %c0_4 = arith.constant 0 : index
    %2 = vector.load %arg3[%c0_3, %c0_4] : memref<1x32xf32, #tpu.memory_space<vmem>>, vector<1x32xf32>
    %cst = arith.constant dense<0.000000e+00> : vector<16xf32>
    %3 = vector.multi_reduction <add>, %0, %cst [1] : vector<16x32xf32> to vector<16xf32>
    %4 = vector.shape_cast %3 : vector<16xf32> to vector<16x1xf32>
    %cst_5 = arith.constant 3.200000e+01 : f32
    %5 = vector.broadcast %cst_5 : f32 to vector<16x1xf32>
    %6 = arith.divf %4, %5 : vector<16x1xf32>
    %7 = vector.broadcast %6 : vector<16x1xf32> to vector<16x32xf32>
    %8 = arith.subf %0, %7 : vector<16x32xf32>
    %9 = arith.mulf %8, %8 : vector<16x32xf32>
    %cst_6 = arith.constant dense<0.000000e+00> : vector<16xf32>
    %10 = vector.multi_reduction <add>, %9, %cst_6 [1] : vector<16x32xf32> to vector<16xf32>
    %11 = vector.shape_cast %10 : vector<16xf32> to vector<16x1xf32>
    %cst_7 = arith.constant 3.200000e+01 : f32
    %12 = vector.broadcast %cst_7 : f32 to vector<16x1xf32>
    %13 = arith.divf %11, %12 : vector<16x1xf32>
    %14 = vector.broadcast %6 : vector<16x1xf32> to vector<16x32xf32>
    %15 = arith.subf %0, %14 : vector<16x32xf32>
    %cst_8 = arith.constant 9.99999974E-6 : f32
    %16 = vector.broadcast %cst_8 : f32 to vector<16x1xf32>
    %17 = arith.addf %13, %16 : vector<16x1xf32>
    %18 = math.rsqrt %17 : vector<16x1xf32>
    %19 = vector.broadcast %18 : vector<16x1xf32> to vector<16x32xf32>
    %20 = arith.mulf %15, %19 : vector<16x32xf32>
    %21 = vector.broadcast %1 : vector<1x32xf32> to vector<16x32xf32>
    %22 = arith.mulf %20, %21 : vector<16x32xf32>
    %23 = vector.broadcast %2 : vector<1x32xf32> to vector<16x32xf32>
    %24 = arith.addf %22, %23 : vector<16x32xf32>
    %25 = arith.truncf %24 : vector<16x32xf32> to vector<16x32xbf16>
    %c0_9 = arith.constant 0 : index
    %c0_10 = arith.constant 0 : index
    %26 = vector.load %arg4[%c0_9, %c0_10] : memref<32x32xbf16, #tpu.memory_space<vmem>>, vector<32x32xbf16>
    %cst_11 = arith.constant dense<0.000000e+00> : vector<16x32xf32>
    %27 = tpu.matmul %25, %26, %cst_11 {dimension_numbers = #tpu.dot_dimension_numbers<[1], [0], [0], [1], [0, 0, 1, 1], [], []>} : vector<16x32xbf16>, vector<32x32xbf16>, vector<16x32xf32> -> vector<16x32xf32>
    %28 = vector.shape_cast %27 : vector<16x32xf32> to vector<2x8x32xf32>
    %29 = arith.truncf %28 : vector<2x8x32xf32> to vector<2x8x32xbf16>
    %c0_12 = arith.constant 0 : index
    %c0_13 = arith.constant 0 : index
    %30 = vector.load %arg5[%c0_12, %c0_13] : memref<32x32xbf16, #tpu.memory_space<vmem>>, vector<32x32xbf16>
    %cst_14 = arith.constant dense<0.000000e+00> : vector<16x32xf32>
    %31 = tpu.matmul %25, %30, %cst_14 {dimension_numbers = #tpu.dot_dimension_numbers<[1], [0], [0], [1], [0, 0, 1, 1], [], []>} : vector<16x32xbf16>, vector<32x32xbf16>, vector<16x32xf32> -> vector<16x32xf32>
    %32 = vector.shape_cast %31 : vector<16x32xf32> to vector<2x8x32xf32>
    %33 = arith.truncf %32 : vector<2x8x32xf32> to vector<2x8x32xbf16>
    %c0_15 = arith.constant 0 : index
    %c0_16 = arith.constant 0 : index
    %34 = vector.load %arg6[%c0_15, %c0_16] : memref<32x32xbf16, #tpu.memory_space<vmem>>, vector<32x32xbf16>
    %cst_17 = arith.constant dense<0.000000e+00> : vector<16x32xf32>
    %35 = tpu.matmul %25, %34, %cst_17 {dimension_numbers = #tpu.dot_dimension_numbers<[1], [0], [0], [1], [0, 0, 1, 1], [], []>} : vector<16x32xbf16>, vector<32x32xbf16>, vector<16x32xf32> -> vector<16x32xf32>
    %36 = vector.shape_cast %35 : vector<16x32xf32> to vector<2x8x32xf32>
    %37 = arith.truncf %36 : vector<2x8x32xf32> to vector<2x8x32xbf16>
    %38 = tpu.iota {dimensions = array<i32: 0>} : vector<8x8xi32>
    %39 = tpu.iota {dimensions = array<i32: 1>} : vector<8x8xi32>
    %40 = arith.cmpi sge, %38, %39 : vector<8x8xi32>
    %41 = vector.shape_cast %40 : vector<8x8xi1> to vector<1x8x8xi1>
    %42 = vector.extract_strided_slice %29 {offsets = [0, 0, 0], sizes = [2, 8, 8], strides = [1, 1, 1]} : vector<2x8x32xbf16> to vector<2x8x8xbf16>
    %43 = vector.extract_strided_slice %33 {offsets = [0, 0, 0], sizes = [2, 8, 8], strides = [1, 1, 1]} : vector<2x8x32xbf16> to vector<2x8x8xbf16>
    %44 = vector.extract_strided_slice %37 {offsets = [0, 0, 0], sizes = [2, 8, 8], strides = [1, 1, 1]} : vector<2x8x32xbf16> to vector<2x8x8xbf16>
    "tpu.trace_start"() <{level = 10 : i32, message = "btd,bsd->bts"}> : () -> ()
    %cst_18 = arith.constant dense<0.000000e+00> : vector<2x8x8xf32>
    %45 = tpu.matmul %42, %43, %cst_18 {dimension_numbers = #tpu.dot_dimension_numbers<[2], [2], [1], [1], [0, 0, 0, 1, 1, 1], [0], [0]>} : vector<2x8x8xbf16>, vector<2x8x8xbf16>, vector<2x8x8xf32> -> vector<2x8x8xf32>
    %cst_19 = arith.constant -1.000000e+30 : f32
    "tpu.trace_stop"() : () -> ()
    %46 = vector.shape_cast %41 : vector<1x8x8xi1> to vector<1x8x8xi1>
    %47 = vector.broadcast %46 : vector<1x8x8xi1> to vector<2x8x8xi1>
    %48 = vector.broadcast %cst_19 : f32 to vector<2x8x8xf32>
    %49 = arith.select %47, %45, %48 : vector<2x8x8xi1>, vector<2x8x8xf32>
    %cst_20 = arith.constant dense<0xFF800000> : vector<2x8xf32>
    %50 = vector.multi_reduction <maximumf>, %49, %cst_20 [2] : vector<2x8x8xf32> to vector<2x8xf32>
    %51 = vector.shape_cast %50 : vector<2x8xf32> to vector<2x8x1xf32>
    %52 = vector.broadcast %51 : vector<2x8x1xf32> to vector<2x8x8xf32>
    %53 = arith.subf %49, %52 : vector<2x8x8xf32>
    %54 = math.exp %53 : vector<2x8x8xf32>
    %cst_21 = arith.constant dense<0.000000e+00> : vector<2x8xf32>
    %55 = vector.multi_reduction <add>, %54, %cst_21 [2] : vector<2x8x8xf32> to vector<2x8xf32>
    %56 = vector.shape_cast %55 : vector<2x8xf32> to vector<2x8x1xf32>
    %57 = vector.broadcast %56 : vector<2x8x1xf32> to vector<2x8x8xf32>
    %58 = arith.divf %54, %57 : vector<2x8x8xf32>
    %59 = arith.truncf %58 : vector<2x8x8xf32> to vector<2x8x8xbf16>
    "tpu.trace_start"() <{level = 10 : i32, message = "bts,bsd->btd"}> : () -> ()
    %cst_22 = arith.constant dense<0.000000e+00> : vector<2x8x8xf32>
    %60 = tpu.matmul %59, %44, %cst_22 {dimension_numbers = #tpu.dot_dimension_numbers<[2], [1], [1], [2], [0, 0, 0, 1, 1, 2], [0], [0]>} : vector<2x8x8xbf16>, vector<2x8x8xbf16>, vector<2x8x8xf32> -> vector<2x8x8xf32>
    "tpu.trace_stop"() : () -> ()
    %61 = vector.extract_strided_slice %29 {offsets = [0, 0, 8], sizes = [2, 8, 8], strides = [1, 1, 1]} : vector<2x8x32xbf16> to vector<2x8x8xbf16>
    %62 = vector.extract_strided_slice %33 {offsets = [0, 0, 8], sizes = [2, 8, 8], strides = [1, 1, 1]} : vector<2x8x32xbf16> to vector<2x8x8xbf16>
    %63 = vector.extract_strided_slice %37 {offsets = [0, 0, 8], sizes = [2, 8, 8], strides = [1, 1, 1]} : vector<2x8x32xbf16> to vector<2x8x8xbf16>
    "tpu.trace_start"() <{level = 10 : i32, message = "btd,bsd->bts"}> : () -> ()
    %cst_23 = arith.constant dense<0.000000e+00> : vector<2x8x8xf32>
    %64 = tpu.matmul %61, %62, %cst_23 {dimension_numbers = #tpu.dot_dimension_numbers<[2], [2], [1], [1], [0, 0, 0, 1, 1, 1], [0], [0]>} : vector<2x8x8xbf16>, vector<2x8x8xbf16>, vector<2x8x8xf32> -> vector<2x8x8xf32>
    %cst_24 = arith.constant -1.000000e+30 : f32
    "tpu.trace_stop"() : () -> ()
    %65 = vector.shape_cast %41 : vector<1x8x8xi1> to vector<1x8x8xi1>
    %66 = vector.broadcast %65 : vector<1x8x8xi1> to vector<2x8x8xi1>
    %67 = vector.broadcast %cst_24 : f32 to vector<2x8x8xf32>
    %68 = arith.select %66, %64, %67 : vector<2x8x8xi1>, vector<2x8x8xf32>
    %cst_25 = arith.constant dense<0xFF800000> : vector<2x8xf32>
    %69 = vector.multi_reduction <maximumf>, %68, %cst_25 [2] : vector<2x8x8xf32> to vector<2x8xf32>
    %70 = vector.shape_cast %69 : vector<2x8xf32> to vector<2x8x1xf32>
    %71 = vector.broadcast %70 : vector<2x8x1xf32> to vector<2x8x8xf32>
    %72 = arith.subf %68, %71 : vector<2x8x8xf32>
    %73 = math.exp %72 : vector<2x8x8xf32>
    %cst_26 = arith.constant dense<0.000000e+00> : vector<2x8xf32>
    %74 = vector.multi_reduction <add>, %73, %cst_26 [2] : vector<2x8x8xf32> to vector<2x8xf32>
    %75 = vector.shape_cast %74 : vector<2x8xf32> to vector<2x8x1xf32>
    %76 = vector.broadcast %75 : vector<2x8x1xf32> to vector<2x8x8xf32>
    %77 = arith.divf %73, %76 : vector<2x8x8xf32>
    %78 = arith.truncf %77 : vector<2x8x8xf32> to vector<2x8x8xbf16>
    "tpu.trace_start"() <{level = 10 : i32, message = "bts,bsd->btd"}> : () -> ()
    %cst_27 = arith.constant dense<0.000000e+00> : vector<2x8x8xf32>
    %79 = tpu.matmul %78, %63, %cst_27 {dimension_numbers = #tpu.dot_dimension_numbers<[2], [1], [1], [2], [0, 0, 0, 1, 1, 2], [0], [0]>} : vector<2x8x8xbf16>, vector<2x8x8xbf16>, vector<2x8x8xf32> -> vector<2x8x8xf32>
    "tpu.trace_stop"() : () -> ()
    %80 = vector.extract_strided_slice %29 {offsets = [0, 0, 16], sizes = [2, 8, 8], strides = [1, 1, 1]} : vector<2x8x32xbf16> to vector<2x8x8xbf16>
    %81 = vector.extract_strided_slice %33 {offsets = [0, 0, 16], sizes = [2, 8, 8], strides = [1, 1, 1]} : vector<2x8x32xbf16> to vector<2x8x8xbf16>
    %82 = vector.extract_strided_slice %37 {offsets = [0, 0, 16], sizes = [2, 8, 8], strides = [1, 1, 1]} : vector<2x8x32xbf16> to vector<2x8x8xbf16>
    "tpu.trace_start"() <{level = 10 : i32, message = "btd,bsd->bts"}> : () -> ()
    %cst_28 = arith.constant dense<0.000000e+00> : vector<2x8x8xf32>
    %83 = tpu.matmul %80, %81, %cst_28 {dimension_numbers = #tpu.dot_dimension_numbers<[2], [2], [1], [1], [0, 0, 0, 1, 1, 1], [0], [0]>} : vector<2x8x8xbf16>, vector<2x8x8xbf16>, vector<2x8x8xf32> -> vector<2x8x8xf32>
    %cst_29 = arith.constant -1.000000e+30 : f32
    "tpu.trace_stop"() : () -> ()
    %84 = vector.shape_cast %41 : vector<1x8x8xi1> to vector<1x8x8xi1>
    %85 = vector.broadcast %84 : vector<1x8x8xi1> to vector<2x8x8xi1>
    %86 = vector.broadcast %cst_29 : f32 to vector<2x8x8xf32>
    %87 = arith.select %85, %83, %86 : vector<2x8x8xi1>, vector<2x8x8xf32>
    %cst_30 = arith.constant dense<0xFF800000> : vector<2x8xf32>
    %88 = vector.multi_reduction <maximumf>, %87, %cst_30 [2] : vector<2x8x8xf32> to vector<2x8xf32>
    %89 = vector.shape_cast %88 : vector<2x8xf32> to vector<2x8x1xf32>
    %90 = vector.broadcast %89 : vector<2x8x1xf32> to vector<2x8x8xf32>
    %91 = arith.subf %87, %90 : vector<2x8x8xf32>
    %92 = math.exp %91 : vector<2x8x8xf32>
    %cst_31 = arith.constant dense<0.000000e+00> : vector<2x8xf32>
    %93 = vector.multi_reduction <add>, %92, %cst_31 [2] : vector<2x8x8xf32> to vector<2x8xf32>
    %94 = vector.shape_cast %93 : vector<2x8xf32> to vector<2x8x1xf32>
    %95 = vector.broadcast %94 : vector<2x8x1xf32> to vector<2x8x8xf32>
    %96 = arith.divf %92, %95 : vector<2x8x8xf32>
    %97 = arith.truncf %96 : vector<2x8x8xf32> to vector<2x8x8xbf16>
    "tpu.trace_start"() <{level = 10 : i32, message = "bts,bsd->btd"}> : () -> ()
    %cst_32 = arith.constant dense<0.000000e+00> : vector<2x8x8xf32>
    %98 = tpu.matmul %97, %82, %cst_32 {dimension_numbers = #tpu.dot_dimension_numbers<[2], [1], [1], [2], [0, 0, 0, 1, 1, 2], [0], [0]>} : vector<2x8x8xbf16>, vector<2x8x8xbf16>, vector<2x8x8xf32> -> vector<2x8x8xf32>
    "tpu.trace_stop"() : () -> ()
    %99 = vector.extract_strided_slice %29 {offsets = [0, 0, 24], sizes = [2, 8, 8], strides = [1, 1, 1]} : vector<2x8x32xbf16> to vector<2x8x8xbf16>
    %100 = vector.extract_strided_slice %33 {offsets = [0, 0, 24], sizes = [2, 8, 8], strides = [1, 1, 1]} : vector<2x8x32xbf16> to vector<2x8x8xbf16>
    %101 = vector.extract_strided_slice %37 {offsets = [0, 0, 24], sizes = [2, 8, 8], strides = [1, 1, 1]} : vector<2x8x32xbf16> to vector<2x8x8xbf16>
    "tpu.trace_start"() <{level = 10 : i32, message = "btd,bsd->bts"}> : () -> ()
    %cst_33 = arith.constant dense<0.000000e+00> : vector<2x8x8xf32>
    %102 = tpu.matmul %99, %100, %cst_33 {dimension_numbers = #tpu.dot_dimension_numbers<[2], [2], [1], [1], [0, 0, 0, 1, 1, 1], [0], [0]>} : vector<2x8x8xbf16>, vector<2x8x8xbf16>, vector<2x8x8xf32> -> vector<2x8x8xf32>
    %cst_34 = arith.constant -1.000000e+30 : f32
    "tpu.trace_stop"() : () -> ()
    %103 = vector.shape_cast %41 : vector<1x8x8xi1> to vector<1x8x8xi1>
    %104 = vector.broadcast %103 : vector<1x8x8xi1> to vector<2x8x8xi1>
    %105 = vector.broadcast %cst_34 : f32 to vector<2x8x8xf32>
    %106 = arith.select %104, %102, %105 : vector<2x8x8xi1>, vector<2x8x8xf32>
    %cst_35 = arith.constant dense<0xFF800000> : vector<2x8xf32>
    %107 = vector.multi_reduction <maximumf>, %106, %cst_35 [2] : vector<2x8x8xf32> to vector<2x8xf32>
    %108 = vector.shape_cast %107 : vector<2x8xf32> to vector<2x8x1xf32>
    %109 = vector.broadcast %108 : vector<2x8x1xf32> to vector<2x8x8xf32>
    %110 = arith.subf %106, %109 : vector<2x8x8xf32>
    %111 = math.exp %110 : vector<2x8x8xf32>
    %cst_36 = arith.constant dense<0.000000e+00> : vector<2x8xf32>
    %112 = vector.multi_reduction <add>, %111, %cst_36 [2] : vector<2x8x8xf32> to vector<2x8xf32>
    %113 = vector.shape_cast %112 : vector<2x8xf32> to vector<2x8x1xf32>
    %114 = vector.broadcast %113 : vector<2x8x1xf32> to vector<2x8x8xf32>
    %115 = arith.divf %111, %114 : vector<2x8x8xf32>
    %116 = arith.truncf %115 : vector<2x8x8xf32> to vector<2x8x8xbf16>
    "tpu.trace_start"() <{level = 10 : i32, message = "bts,bsd->btd"}> : () -> ()
    %cst_37 = arith.constant dense<0.000000e+00> : vector<2x8x8xf32>
    %117 = tpu.matmul %116, %101, %cst_37 {dimension_numbers = #tpu.dot_dimension_numbers<[2], [1], [1], [2], [0, 0, 0, 1, 1, 2], [0], [0]>} : vector<2x8x8xbf16>, vector<2x8x8xbf16>, vector<2x8x8xf32> -> vector<2x8x8xf32>
    "tpu.trace_stop"() : () -> ()
    %118 = tpu.concatenate %60, %79, %98, %117 in 2 : vector<2x8x8xf32>, vector<2x8x8xf32>, vector<2x8x8xf32>, vector<2x8x8xf32> -> vector<2x8x32xf32>
    %119 = vector.shape_cast %118 : vector<2x8x32xf32> to vector<16x32xf32>
    %120 = arith.truncf %119 : vector<16x32xf32> to vector<16x32xbf16>
    %c0_38 = arith.constant 0 : index
    %c0_39 = arith.constant 0 : index
    %121 = vector.load %arg7[%c0_38, %c0_39] : memref<32x32xbf16, #tpu.memory_space<vmem>>, vector<32x32xbf16>
    %cst_40 = arith.constant dense<0.000000e+00> : vector<16x32xf32>
    %122 = tpu.matmul %120, %121, %cst_40 {dimension_numbers = #tpu.dot_dimension_numbers<[1], [0], [0], [1], [0, 0, 1, 1], [], []>} : vector<16x32xbf16>, vector<32x32xbf16>, vector<16x32xf32> -> vector<16x32xf32>
    %c0_41 = arith.constant 0 : index
    %c0_42 = arith.constant 0 : index
    %123 = vector.load %arg8[%c0_41, %c0_42] : memref<1x32xf32, #tpu.memory_space<vmem>>, vector<1x32xf32>
    %124 = vector.broadcast %123 : vector<1x32xf32> to vector<16x32xf32>
    %125 = arith.addf %122, %124 : vector<16x32xf32>
    %126 = arith.addf %0, %125 : vector<16x32xf32>
    %c0_43 = arith.constant 0 : index
    %c0_44 = arith.constant 0 : index
    %127 = vector.load %arg9[%c0_43, %c0_44] : memref<1x32xf32, #tpu.memory_space<vmem>>, vector<1x32xf32>
    %c0_45 = arith.constant 0 : index
    %c0_46 = arith.constant 0 : index
    %128 = vector.load %arg10[%c0_45, %c0_46] : memref<1x32xf32, #tpu.memory_space<vmem>>, vector<1x32xf32>
    %cst_47 = arith.constant dense<0.000000e+00> : vector<16xf32>
    %129 = vector.multi_reduction <add>, %126, %cst_47 [1] : vector<16x32xf32> to vector<16xf32>
    %130 = vector.shape_cast %129 : vector<16xf32> to vector<16x1xf32>
    %cst_48 = arith.constant 3.200000e+01 : f32
    %131 = vector.broadcast %cst_48 : f32 to vector<16x1xf32>
    %132 = arith.divf %130, %131 : vector<16x1xf32>
    %133 = vector.broadcast %132 : vector<16x1xf32> to vector<16x32xf32>
    %134 = arith.subf %126, %133 : vector<16x32xf32>
    %135 = arith.mulf %134, %134 : vector<16x32xf32>
    %cst_49 = arith.constant dense<0.000000e+00> : vector<16xf32>
    %136 = vector.multi_reduction <add>, %135, %cst_49 [1] : vector<16x32xf32> to vector<16xf32>
    %137 = vector.shape_cast %136 : vector<16xf32> to vector<16x1xf32>
    %cst_50 = arith.constant 3.200000e+01 : f32
    %138 = vector.broadcast %cst_50 : f32 to vector<16x1xf32>
    %139 = arith.divf %137, %138 : vector<16x1xf32>
    %140 = vector.broadcast %132 : vector<16x1xf32> to vector<16x32xf32>
    %141 = arith.subf %126, %140 : vector<16x32xf32>
    %cst_51 = arith.constant 9.99999974E-6 : f32
    %142 = vector.broadcast %cst_51 : f32 to vector<16x1xf32>
    %143 = arith.addf %139, %142 : vector<16x1xf32>
    %144 = math.rsqrt %143 : vector<16x1xf32>
    %145 = vector.broadcast %144 : vector<16x1xf32> to vector<16x32xf32>
    %146 = arith.mulf %141, %145 : vector<16x32xf32>
    %147 = vector.broadcast %127 : vector<1x32xf32> to vector<16x32xf32>
    %148 = arith.mulf %146, %147 : vector<16x32xf32>
    %149 = vector.broadcast %128 : vector<1x32xf32> to vector<16x32xf32>
    %150 = arith.addf %148, %149 : vector<16x32xf32>
    %151 = arith.truncf %150 : vector<16x32xf32> to vector<16x32xbf16>
    %c0_52 = arith.constant 0 : index
    %c0_53 = arith.constant 0 : index
    %152 = vector.load %arg11[%c0_52, %c0_53] : memref<32x128xbf16, #tpu.memory_space<vmem>>, vector<32x128xbf16>
    %cst_54 = arith.constant dense<0.000000e+00> : vector<16x128xf32>
    %153 = tpu.matmul %151, %152, %cst_54 {dimension_numbers = #tpu.dot_dimension_numbers<[1], [0], [0], [1], [0, 0, 1, 1], [], []>} : vector<16x32xbf16>, vector<32x128xbf16>, vector<16x128xf32> -> vector<16x128xf32>
    %c0_55 = arith.constant 0 : index
    %c0_56 = arith.constant 0 : index
    %154 = vector.load %arg12[%c0_55, %c0_56] : memref<1x128xf32, #tpu.memory_space<vmem>>, vector<1x128xf32>
    %155 = vector.broadcast %154 : vector<1x128xf32> to vector<16x128xf32>
    %156 = arith.addf %153, %155 : vector<16x128xf32>
    %cst_57 = arith.constant 0.000000e+00 : f32
    %157 = vector.broadcast %cst_57 : f32 to vector<16x128xf32>
    %158 = arith.maximumf %156, %157 : vector<16x128xf32>
    %159 = arith.truncf %158 : vector<16x128xf32> to vector<16x128xbf16>
    %c0_58 = arith.constant 0 : index
    %c0_59 = arith.constant 0 : index
    %160 = vector.load %arg13[%c0_58, %c0_59] : memref<128x32xbf16, #tpu.memory_space<vmem>>, vector<128x32xbf16>
    %cst_60 = arith.constant dense<0.000000e+00> : vector<16x32xf32>
    %161 = tpu.matmul %159, %160, %cst_60 {dimension_numbers = #tpu.dot_dimension_numbers<[1], [0], [0], [1], [0, 0, 1, 1], [], []>} : vector<16x128xbf16>, vector<128x32xbf16>, vector<16x32xf32> -> vector<16x32xf32>
    %c0_61 = arith.constant 0 : index
    %c0_62 = arith.constant 0 : index
    %162 = vector.load %arg14[%c0_61, %c0_62] : memref<1x32xf32, #tpu.memory_space<vmem>>, vector<1x32xf32>
    %163 = vector.broadcast %162 : vector<1x32xf32> to vector<16x32xf32>
    %164 = arith.addf %161, %163 : vector<16x32xf32>
    %165 = arith.addf %126, %164 : vector<16x32xf32>
    %c0_63 = arith.constant 0 : index
    %c0_64 = arith.constant 0 : index
    %166 = vector.load %arg15[%c0_63, %c0_64] : memref<16x32xf32, #tpu.memory_space<vmem>>, vector<16x32xf32>
    tpu.vector_store %arg15[%c0_63, %c0_64], %165 {strides = array<i32>} : memref<16x32xf32, #tpu.memory_space<vmem>>, vector<16x32xf32>,
    return
  }
  func.func @transform_0(%arg0: i32) -> (i32, i32) {
    %c0_i32 = arith.constant 0 : i32
    %c0_i32_0 = arith.constant 0 : i32
    return %arg0, %c0_i32 : i32, i32
  }
  func.func @transform_1(%arg0: i32) -> (i32, i32) {
    %c0_i32 = arith.constant 0 : i32
    %c0_i32_0 = arith.constant 0 : i32
    %c0_i32_1 = arith.constant 0 : i32
    return %c0_i32, %c0_i32_0 : i32, i32
  }
  func.func @transform_2(%arg0: i32) -> (i32, i32) {
    %c0_i32 = arith.constant 0 : i32
    %c0_i32_0 = arith.constant 0 : i32
    %c0_i32_1 = arith.constant 0 : i32
    return %c0_i32, %c0_i32_0 : i32, i32
  }
  func.func @transform_3(%arg0: i32) -> (i32, i32) {
    %c0_i32 = arith.constant 0 : i32
    %c0_i32_0 = arith.constant 0 : i32
    %c0_i32_1 = arith.constant 0 : i32
    return %c0_i32, %c0_i32_0 : i32, i32
  }
  func.func @transform_4(%arg0: i32) -> (i32, i32) {
    %c0_i32 = arith.constant 0 : i32
    %c0_i32_0 = arith.constant 0 : i32
    %c0_i32_1 = arith.constant 0 : i32
    return %c0_i32, %c0_i32_0 : i32, i32
  }
  func.func @transform_5(%arg0: i32) -> (i32, i32) {
    %c0_i32 = arith.constant 0 : i32
    %c0_i32_0 = arith.constant 0 : i32
    %c0_i32_1 = arith.constant 0 : i32
    return %c0_i32, %c0_i32_0 : i32, i32
  }
  func.func @transform_6(%arg0: i32) -> (i32, i32) {
    %c0_i32 = arith.constant 0 : i32
    %c0_i32_0 = arith.constant 0 : i32
    %c0_i32_1 = arith.constant 0 : i32
    return %c0_i32, %c0_i32_0 : i32, i32
  }
  func.func @transform_7(%arg0: i32) -> (i32, i32) {
    %c0_i32 = arith.constant 0 : i32
    %c0_i32_0 = arith.constant 0 : i32
    %c0_i32_1 = arith.constant 0 : i32
    return %c0_i32, %c0_i32_0 : i32, i32
  }
  func.func @transform_8(%arg0: i32) -> (i32, i32) {
    %c0_i32 = arith.constant 0 : i32
    %c0_i32_0 = arith.constant 0 : i32
    %c0_i32_1 = arith.constant 0 : i32
    return %c0_i32, %c0_i32_0 : i32, i32
  }
  func.func @transform_9(%arg0: i32) -> (i32, i32) {
    %c0_i32 = arith.constant 0 : i32
    %c0_i32_0 = arith.constant 0 : i32
    %c0_i32_1 = arith.constant 0 : i32
    return %c0_i32, %c0_i32_0 : i32, i32
  }
  func.func @transform_10(%arg0: i32) -> (i32, i32) {
    %c0_i32 = arith.constant 0 : i32
    %c0_i32_0 = arith.constant 0 : i32
    %c0_i32_1 = arith.constant 0 : i32
    return %c0_i32, %c0_i32_0 : i32, i32
  }
  func.func @transform_11(%arg0: i32) -> (i32, i32) {
    %c0_i32 = arith.constant 0 : i32
    %c0_i32_0 = arith.constant 0 : i32
    %c0_i32_1 = arith.constant 0 : i32
    return %c0_i32, %c0_i32_0 : i32, i32
  }
  func.func @transform_12(%arg0: i32) -> (i32, i32) {
    %c0_i32 = arith.constant 0 : i32
    %c0_i32_0 = arith.constant 0 : i32
    %c0_i32_1 = arith.constant 0 : i32
    return %c0_i32, %c0_i32_0 : i32, i32
  }
  func.func @transform_13(%arg0: i32) -> (i32, i32) {
    %c0_i32 = arith.constant 0 : i32
    %c0_i32_0 = arith.constant 0 : i32
    %c0_i32_1 = arith.constant 0 : i32
    return %c0_i32, %c0_i32_0 : i32, i32
  }
  func.func @transform_14(%arg0: i32) -> (i32, i32) {
    %c0_i32 = arith.constant 0 : i32
    %c0_i32_0 = arith.constant 0 : i32
    return %arg0, %c0_i32 : i32, i32
  }
}

module attributes {stable_mosaic.version = 11 : i64} {
  func.func @block_kernel(%arg0: i32, %arg1: memref<16x32xf32, #tpu.memory_space<vmem>>, %arg2: memref<1x32xf32, #tpu.memory_space<vmem>>, %arg3: memref<1x32xf32, #tpu.memory_space<vmem>>, %arg4: memref<32x32xbf16, #tpu.memory_space<vmem>>, %arg5: memref<32x32xbf16, #tpu.memory_space<vmem>>, %arg6: memref<32x32xbf16, #tpu.memory_space<vmem>>, %arg7: memref<32x32xbf16, #tpu.memory_space<vmem>>, %arg8: memref<1x32xf32, #tpu.memory_space<vmem>>, %arg9: memref<1x32xf32, #tpu.memory_space<vmem>>, %arg10: memref<1x32xf32, #tpu.memory_space<vmem>>, %arg11: memref<32x128xbf16, #tpu.memory_space<vmem>>, %arg12: memref<1x128xf32, #tpu.memory_space<vmem>>, %arg13: memref<128x32xbf16, #tpu.memory_space<vmem>>, %arg14: memref<1x32xf32, #tpu.memory_space<vmem>>, %arg15: memref<16x32xf32, #tpu.memory_space<vmem>>) attributes {dimension_semantics = [#tpu.dimension_semantics<parallel>], iteration_bounds = array<i64: 1>, scalar_prefetch = 0 : i64, scratch_operands = 0 : i64, tpu.core_type = #tpu.core_type<tc>, window_params = [{transform_indices = @transform_0, window_bounds = array<i64: 16, 32>}, {pipeline_mode = #tpu.pipeline_mode<synchronous>, transform_indices = @transform_1, window_bounds = array<i64: 1, 32>}, {pipeline_mode = #tpu.pipeline_mode<synchronous>, transform_indices = @transform_2, window_bounds = array<i64: 1, 32>}, {pipeline_mode = #tpu.pipeline_mode<synchronous>, transform_indices = @transform_3, window_bounds = array<i64: 32, 32>}, {pipeline_mode = #tpu.pipeline_mode<synchronous>, transform_indices = @transform_4, window_bounds = array<i64: 32, 32>}, {pipeline_mode = #tpu.pipeline_mode<synchronous>, transform_indices = @transform_5, window_bounds = array<i64: 32, 32>}, {pipeline_mode = #tpu.pipeline_mode<synchronous>, transform_indices = @transform_6, window_bounds = array<i64: 32, 32>}, {pipeline_mode = #tpu.pipeline_mode<synchronous>, transform_indices = @transform_7, window_bounds = array<i64: 1, 32>}, {pipeline_mode = #tpu.pipeline_mode<synchronous>, transform_indices = @transform_8, window_bounds = array<i64: 1, 32>}, {pipeline_mode = #tpu.pipeline_mode<synchronous>, transform_indices = @transform_9, window_bounds = array<i64: 1, 32>}, {pipeline_mode = #tpu.pipeline_mode<synchronous>, transform_indices = @transform_10, window_bounds = array<i64: 32, 128>}, {pipeline_mode = #tpu.pipeline_mode<synchronous>, transform_indices = @transform_11, window_bounds = array<i64: 1, 128>}, {pipeline_mode = #tpu.pipeline_mode<synchronous>, transform_indices = @transform_12, window_bounds = array<i64: 128, 32>}, {pipeline_mode = #tpu.pipeline_mode<synchronous>, transform_indices = @transform_13, window_bounds = array<i64: 1, 32>}, {transform_indices = @transform_14, window_bounds = array<i64: 16, 32>}]} {
    %c0 = arith.constant 0 : index
    %c0_0 = arith.constant 0 : index
    %0 = vector.load %arg1[%c0, %c0_0] : memref<16x32xf32, #tpu.memory_space<vmem>>, vector<16x32xf32>
    %c0_1 = arith.constant 0 : index
    %c0_2 = arith.constant 0 : index
    %1 = vector.load %arg2[%c0_1, %c0_2] : memref<1x32xf32, #tpu.memory_space<vmem>>, vector<1x32xf32>
    %c0_3 = arith.constant 0 : index
    %c0_4 = arith.constant 0 : index
    %2 = vector.load %arg3[%c0_3, %c0_4] : memref<1x32xf32, #tpu.memory_space<vmem>>, vector<1x32xf32>
    %cst = arith.constant dense<0.000000e+00> : vector<16xf32>
    %3 = vector.multi_reduction <add>, %0, %cst [1] : vector<16x32xf32> to vector<16xf32>
    %4 = vector.shape_cast %3 : vector<16xf32> to vector<16x1xf32>
    %cst_5 = arith.constant 3.200000e+01 : f32
    %5 = vector.broadcast %cst_5 : f32 to vector<16x1xf32>
    %6 = arith.divf %4, %5 : vector<16x1xf32>
    %7 = vector.broadcast %6 : vector<16x1xf32> to vector<16x32xf32>
    %8 = arith.subf %0, %7 : vector<16x32xf32>
    %9 = arith.mulf %8, %8 : vector<16x32xf32>
    %cst_6 = arith.constant dense<0.000000e+00> : vector<16xf32>
    %10 = vector.multi_reduction <add>, %9, %cst_6 [1] : vector<16x32xf32> to vector<16xf32>
    %11 = vector.shape_cast %10 : vector<16xf32> to vector<16x1xf32>
    %cst_7 = arith.constant 3.200000e+01 : f32
    %12 = vector.broadcast %cst_7 : f32 to vector<16x1xf32>
    %13 = arith.divf %11, %12 : vector<16x1xf32>
    %14 = vector.broadcast %6 : vector<16x1xf32> to vector<16x32xf32>
    %15 = arith.subf %0, %14 : vector<16x32xf32>
    %cst_8 = arith.constant 9.99999974E-6 : f32
    %16 = vector.broadcast %cst_8 : f32 to vector<16x1xf32>
    %17 = arith.addf %13, %16 : vector<16x1xf32>
    %18 = math.rsqrt %17 : vector<16x1xf32>
    %19 = vector.broadcast %18 : vector<16x1xf32> to vector<16x32xf32>
    %20 = arith.mulf %15, %19 : vector<16x32xf32>
    %21 = vector.broadcast %1 : vector<1x32xf32> to vector<16x32xf32>
    %22 = arith.mulf %20, %21 : vector<16x32xf32>
    %23 = vector.broadcast %2 : vector<1x32xf32> to vector<16x32xf32>
    %24 = arith.addf %22, %23 : vector<16x32xf32>
    %25 = arith.truncf %24 : vector<16x32xf32> to vector<16x32xbf16>
    %c0_9 = arith.constant 0 : index
    %c0_10 = arith.constant 0 : index
    %26 = vector.load %arg4[%c0_9, %c0_10] : memref<32x32xbf16, #tpu.memory_space<vmem>>, vector<32x32xbf16>
    %cst_11 = arith.constant dense<0.000000e+00> : vector<16x32xf32>
    %27 = tpu.matmul %25, %26, %cst_11 {dimension_numbers = #tpu.dot_dimension_numbers<[1], [0], [0], [1], [0, 0, 1, 1], [], []>} : vector<16x32xbf16>, vector<32x32xbf16>, vector<16x32xf32> -> vector<16x32xf32>
    %28 = vector.shape_cast %27 : vector<16x32xf32> to vector<2x8x32xf32>
    %29 = arith.truncf %28 : vector<2x8x32xf32> to vector<2x8x32xbf16>
    %c0_12 = arith.constant 0 : index
    %c0_13 = arith.constant 0 : index
    %30 = vector.load %arg5[%c0_12, %c0_13] : memref<32x32xbf16, #tpu.memory_space<vmem>>, vector<32x32xbf16>
    %cst_14 = arith.constant dense<0.000000e+00> : vector<16x32xf32>
    %31 = tpu.matmul %25, %30, %cst_14 {dimension_numbers = #tpu.dot_dimension_numbers<[1], [0], [0], [1], [0, 0, 1, 1], [], []>} : vector<16x32xbf16>, vector<32x32xbf16>, vector<16x32xf32> -> vector<16x32xf32>
    %32 = vector.shape_cast %31 : vector<16x32xf32> to vector<2x8x32xf32>
    %33 = arith.truncf %32 : vector<2x8x32xf32> to vector<2x8x32xbf16>
    %c0_15 = arith.constant 0 : index
    %c0_16 = arith.constant 0 : index
    %34 = vector.load %arg6[%c0_15, %c0_16] : memref<32x32xbf16, #tpu.memory_space<vmem>>, vector<32x32xbf16>
    %cst_17 = arith.constant dense<0.000000e+00> : vector<16x32xf32>
    %35 = tpu.matmul %25, %34, %cst_17 {dimension_numbers = #tpu.dot_dimension_numbers<[1], [0], [0], [1], [0, 0, 1, 1], [], []>} : vector<16x32xbf16>, vector<32x32xbf16>, vector<16x32xf32> -> vector<16x32xf32>
    %36 = vector.shape_cast %35 : vector<16x32xf32> to vector<2x8x32xf32>
    %37 = arith.truncf %36 : vector<2x8x32xf32> to vector<2x8x32xbf16>
    %38 = tpu.iota {dimensions = array<i32: 0>} : vector<8x8xi32>
    %39 = tpu.iota {dimensions = array<i32: 1>} : vector<8x8xi32>
    %40 = arith.cmpi sge, %38, %39 : vector<8x8xi32>
    %41 = vector.shape_cast %40 : vector<8x8xi1> to vector<1x8x8xi1>
    %42 = vector.extract_strided_slice %29 {offsets = [0, 0, 0], sizes = [2, 8, 8], strides = [1, 1, 1]} : vector<2x8x32xbf16> to vector<2x8x8xbf16>
    %43 = vector.extract_strided_slice %33 {offsets = [0, 0, 0], sizes = [2, 8, 8], strides = [1, 1, 1]} : vector<2x8x32xbf16> to vector<2x8x8xbf16>
    %44 = vector.extract_strided_slice %37 {offsets = [0, 0, 0], sizes = [2, 8, 8], strides = [1, 1, 1]} : vector<2x8x32xbf16> to vector<2x8x8xbf16>
    "tpu.trace_start"() <{level = 10 : i32, message = "btd,bsd->bts"}> : () -> ()
    %cst_18 = arith.constant dense<0.000000e+00> : vector<2x8x8xf32>
    %45 = tpu.matmul %42, %43, %cst_18 {dimension_numbers = #tpu.dot_dimension_numbers<[2], [2], [1], [1], [0, 0, 0, 1, 1, 1], [0], [0]>} : vector<2x8x8xbf16>, vector<2x8x8xbf16>, vector<2x8x8xf32> -> vector<2x8x8xf32>
    %cst_19 = arith.constant -1.000000e+30 : f32
    "tpu.trace_stop"() : () -> ()
    %46 = vector.shape_cast %41 : vector<1x8x8xi1> to vector<1x8x8xi1>
    %47 = vector.broadcast %46 : vector<1x8x8xi1> to vector<2x8x8xi1>
    %48 = vector.broadcast %cst_19 : f32 to vector<2x8x8xf32>
    %49 = arith.select %47, %45, %48 : vector<2x8x8xi1>, vector<2x8x8xf32>
    %cst_20 = arith.constant dense<0xFF800000> : vector<2x8xf32>
    %50 = vector.multi_reduction <maximumf>, %49, %cst_20 [2] : vector<2x8x8xf32> to vector<2x8xf32>
    %51 = vector.shape_cast %50 : vector<2x8xf32> to vector<2x8x1xf32>
    %52 = vector.broadcast %51 : vector<2x8x1xf32> to vector<2x8x8xf32>
    %53 = arith.subf %49, %52 : vector<2x8x8xf32>
    %54 = math.exp %53 : vector<2x8x8xf32>
    %cst_21 = arith.constant dense<0.000000e+00> : vector<2x8xf32>
    %55 = vector.multi_reduction <add>, %54, %cst_21 [2] : vector<2x8x8xf32> to vector<2x8xf32>
    %56 = vector.shape_cast %55 : vector<2x8xf32> to vector<2x8x1xf32>
    %57 = vector.broadcast %56 : vector<2x8x1xf32> to vector<2x8x8xf32>
    %58 = arith.divf %54, %57 : vector<2x8x8xf32>
    %59 = arith.truncf %58 : vector<2x8x8xf32> to vector<2x8x8xbf16>
    "tpu.trace_start"() <{level = 10 : i32, message = "bts,bsd->btd"}> : () -> ()
    %cst_22 = arith.constant dense<0.000000e+00> : vector<2x8x8xf32>
    %60 = tpu.matmul %59, %44, %cst_22 {dimension_numbers = #tpu.dot_dimension_numbers<[2], [1], [1], [2], [0, 0, 0, 1, 1, 2], [0], [0]>} : vector<2x8x8xbf16>, vector<2x8x8xbf16>, vector<2x8x8xf32> -> vector<2x8x8xf32>
    "tpu.trace_stop"() : () -> ()
    %61 = vector.extract_strided_slice %29 {offsets = [0, 0, 8], sizes = [2, 8, 8], strides = [1, 1, 1]} : vector<2x8x32xbf16> to vector<2x8x8xbf16>
    %62 = vector.extract_strided_slice %33 {offsets = [0, 0, 8], sizes = [2, 8, 8], strides = [1, 1, 1]} : vector<2x8x32xbf16> to vector<2x8x8xbf16>
    %63 = vector.extract_strided_slice %37 {offsets = [0, 0, 8], sizes = [2, 8, 8], strides = [1, 1, 1]} : vector<2x8x32xbf16> to vector<2x8x8xbf16>
    "tpu.trace_start"() <{level = 10 : i32, message = "btd,bsd->bts"}> : () -> ()
    %cst_23 = arith.constant dense<0.000000e+00> : vector<2x8x8xf32>
    %64 = tpu.matmul %61, %62, %cst_23 {dimension_numbers = #tpu.dot_dimension_numbers<[2], [2], [1], [1], [0, 0, 0, 1, 1, 1], [0], [0]>} : vector<2x8x8xbf16>, vector<2x8x8xbf16>, vector<2x8x8xf32> -> vector<2x8x8xf32>
    %cst_24 = arith.constant -1.000000e+30 : f32
    "tpu.trace_stop"() : () -> ()
    %65 = vector.shape_cast %41 : vector<1x8x8xi1> to vector<1x8x8xi1>
    %66 = vector.broadcast %65 : vector<1x8x8xi1> to vector<2x8x8xi1>
    %67 = vector.broadcast %cst_24 : f32 to vector<2x8x8xf32>
    %68 = arith.select %66, %64, %67 : vector<2x8x8xi1>, vector<2x8x8xf32>
    %cst_25 = arith.constant dense<0xFF800000> : vector<2x8xf32>
    %69 = vector.multi_reduction <maximumf>, %68, %cst_25 [2] : vector<2x8x8xf32> to vector<2x8xf32>
    %70 = vector.shape_cast %69 : vector<2x8xf32> to vector<2x8x1xf32>
    %71 = vector.broadcast %70 : vector<2x8x1xf32> to vector<2x8x8xf32>
    %72 = arith.subf %68, %71 : vector<2x8x8xf32>
    %73 = math.exp %72 : vector<2x8x8xf32>
    %cst_26 = arith.constant dense<0.000000e+00> : vector<2x8xf32>
    %74 = vector.multi_reduction <add>, %73, %cst_26 [2] : vector<2x8x8xf32> to vector<2x8xf32>
    %75 = vector.shape_cast %74 : vector<2x8xf32> to vector<2x8x1xf32>
    %76 = vector.broadcast %75 : vector<2x8x1xf32> to vector<2x8x8xf32>
    %77 = arith.divf %73, %76 : vector<2x8x8xf32>
    %78 = arith.truncf %77 : vector<2x8x8xf32> to vector<2x8x8xbf16>
    "tpu.trace_start"() <{level = 10 : i32, message = "bts,bsd->btd"}> : () -> ()
    %cst_27 = arith.constant dense<0.000000e+00> : vector<2x8x8xf32>
    %79 = tpu.matmul %78, %63, %cst_27 {dimension_numbers = #tpu.dot_dimension_numbers<[2], [1], [1], [2], [0, 0, 0, 1, 1, 2], [0], [0]>} : vector<2x8x8xbf16>, vector<2x8x8xbf16>, vector<2x8x8xf32> -> vector<2x8x8xf32>
    "tpu.trace_stop"() : () -> ()
    %80 = vector.extract_strided_slice %29 {offsets = [0, 0, 16], sizes = [2, 8, 8], strides = [1, 1, 1]} : vector<2x8x32xbf16> to vector<2x8x8xbf16>
    %81 = vector.extract_strided_slice %33 {offsets = [0, 0, 16], sizes = [2, 8, 8], strides = [1, 1, 1]} : vector<2x8x32xbf16> to vector<2x8x8xbf16>
    %82 = vector.extract_strided_slice %37 {offsets = [0, 0, 16], sizes = [2, 8, 8], strides = [1, 1, 1]} : vector<2x8x32xbf16> to vector<2x8x8xbf16>
    "tpu.trace_start"() <{level = 10 : i32, message = "btd,bsd->bts"}> : () -> ()
    %cst_28 = arith.constant dense<0.000000e+00> : vector<2x8x8xf32>
    %83 = tpu.matmul %80, %81, %cst_28 {dimension_numbers = #tpu.dot_dimension_numbers<[2], [2], [1], [1], [0, 0, 0, 1, 1, 1], [0], [0]>} : vector<2x8x8xbf16>, vector<2x8x8xbf16>, vector<2x8x8xf32> -> vector<2x8x8xf32>
    %cst_29 = arith.constant -1.000000e+30 : f32
    "tpu.trace_stop"() : () -> ()
    %84 = vector.shape_cast %41 : vector<1x8x8xi1> to vector<1x8x8xi1>
    %85 = vector.broadcast %84 : vector<1x8x8xi1> to vector<2x8x8xi1>
    %86 = vector.broadcast %cst_29 : f32 to vector<2x8x8xf32>
    %87 = arith.select %85, %83, %86 : vector<2x8x8xi1>, vector<2x8x8xf32>
    %cst_30 = arith.constant dense<0xFF800000> : vector<2x8xf32>
    %88 = vector.multi_reduction <maximumf>, %87, %cst_30 [2] : vector<2x8x8xf32> to vector<2x8xf32>
    %89 = vector.shape_cast %88 : vector<2x8xf32> to vector<2x8x1xf32>
    %90 = vector.broadcast %89 : vector<2x8x1xf32> to vector<2x8x8xf32>
    %91 = arith.subf %87, %90 : vector<2x8x8xf32>
    %92 = math.exp %91 : vector<2x8x8xf32>
    %cst_31 = arith.constant dense<0.000000e+00> : vector<2x8xf32>
    %93 = vector.multi_reduction <add>, %92, %cst_31 [2] : vector<2x8x8xf32> to vector<2x8xf32>
    %94 = vector.shape_cast %93 : vector<2x8xf32> to vector<2x8x1xf32>
    %95 = vector.broadcast %94 : vector<2x8x1xf32> to vector<2x8x8xf32>
    %96 = arith.divf %92, %95 : vector<2x8x8xf32>
    %97 = arith.truncf %96 : vector<2x8x8xf32> to vector<2x8x8xbf16>
    "tpu.trace_start"() <{level = 10 : i32, message = "bts,bsd->btd"}> : () -> ()
    %cst_32 = arith.constant dense<0.000000e+00> : vector<2x8x8xf32>
    %98 = tpu.matmul %97, %82, %cst_32 {dimension_numbers = #tpu.dot_dimension_numbers<[2], [1], [1], [2], [0, 0, 0, 1, 1, 2], [0], [0]>} : vector<2x8x8xbf16>, vector<2x8x8xbf16>, vector<2x8x8xf32> -> vector<2x8x8xf32>
    "tpu.trace_stop"() : () -> ()
    %99 = vector.extract_strided_slice %29 {offsets = [0, 0, 24], sizes = [2, 8, 8], strides = [1, 1, 1]} : vector<2x8x32xbf16> to vector<2x8x8xbf16>
    %100 = vector.extract_strided_slice %33 {offsets = [0, 0, 24], sizes = [2, 8, 8], strides = [1, 1, 1]} : vector<2x8x32xbf16> to vector<2x8x8xbf16>
    %101 = vector.extract_strided_slice %37 {offsets = [0, 0, 24], sizes = [2, 8, 8], strides = [1, 1, 1]} : vector<2x8x32xbf16> to vector<2x8x8xbf16>
    "tpu.trace_start"() <{level = 10 : i32, message = "btd,bsd->bts"}> : () -> ()
    %cst_33 = arith.constant dense<0.000000e+00> : vector<2x8x8xf32>
    %102 = tpu.matmul %99, %100, %cst_33 {dimension_numbers = #tpu.dot_dimension_numbers<[2], [2], [1], [1], [0, 0, 0, 1, 1, 1], [0], [0]>} : vector<2x8x8xbf16>, vector<2x8x8xbf16>, vector<2x8x8xf32> -> vector<2x8x8xf32>
    %cst_34 = arith.constant -1.000000e+30 : f32
    "tpu.trace_stop"() : () -> ()
    %103 = vector.shape_cast %41 : vector<1x8x8xi1> to vector<1x8x8xi1>
    %104 = vector.broadcast %103 : vector<1x8x8xi1> to vector<2x8x8xi1>
    %105 = vector.broadcast %cst_34 : f32 to vector<2x8x8xf32>
    %106 = arith.select %104, %102, %105 : vector<2x8x8xi1>, vector<2x8x8xf32>
    %cst_35 = arith.constant dense<0xFF800000> : vector<2x8xf32>
    %107 = vector.multi_reduction <maximumf>, %106, %cst_35 [2] : vector<2x8x8xf32> to vector<2x8xf32>
    %108 = vector.shape_cast %107 : vector<2x8xf32> to vector<2x8x1xf32>
    %109 = vector.broadcast %108 : vector<2x8x1xf32> to vector<2x8x8xf32>
    %110 = arith.subf %106, %109 : vector<2x8x8xf32>
    %111 = math.exp %110 : vector<2x8x8xf32>
    %cst_36 = arith.constant dense<0.000000e+00> : vector<2x8xf32>
    %112 = vector.multi_reduction <add>, %111, %cst_36 [2] : vector<2x8x8xf32> to vector<2x8xf32>
    %113 = vector.shape_cast %112 : vector<2x8xf32> to vector<2x8x1xf32>
    %114 = vector.broadcast %113 : vector<2x8x1xf32> to vector<2x8x8xf32>
    %115 = arith.divf %111, %114 : vector<2x8x8xf32>
    %116 = arith.truncf %115 : vector<2x8x8xf32> to vector<2x8x8xbf16>
    "tpu.trace_start"() <{level = 10 : i32, message = "bts,bsd->btd"}> : () -> ()
    %cst_37 = arith.constant dense<0.000000e+00> : vector<2x8x8xf32>
    %117 = tpu.matmul %116, %101, %cst_37 {dimension_numbers = #tpu.dot_dimension_numbers<[2], [1], [1], [2], [0, 0, 0, 1, 1, 2], [0], [0]>} : vector<2x8x8xbf16>, vector<2x8x8xbf16>, vector<2x8x8xf32> -> vector<2x8x8xf32>
    "tpu.trace_stop"() : () -> ()
    %118 = tpu.concatenate %60, %79, %98, %117 in 2 : vector<2x8x8xf32>, vector<2x8x8xf32>, vector<2x8x8xf32>, vector<2x8x8xf32> -> vector<2x8x32xf32>
    %119 = vector.shape_cast %118 : vector<2x8x32xf32> to vector<16x32xf32>
    %120 = arith.truncf %119 : vector<16x32xf32> to vector<16x32xbf16>
    %c0_38 = arith.constant 0 : index
    %c0_39 = arith.constant 0 : index
    %121 = vector.load %arg7[%c0_38, %c0_39] : memref<32x32xbf16, #tpu.memory_space<vmem>>, vector<32x32xbf16>
    %cst_40 = arith.constant dense<0.000000e+00> : vector<16x32xf32>
    %122 = tpu.matmul %120, %121, %cst_40 {dimension_numbers = #tpu.dot_dimension_numbers<[1], [0], [0], [1], [0, 0, 1, 1], [], []>} : vector<16x32xbf16>, vector<32x32xbf16>, vector<16x32xf32> -> vector<16x32xf32>
    %c0_41 = arith.constant 0 : index
    %c0_42 = arith.constant 0 : index
    %123 = vector.load %arg8[%c0_41, %c0_42] : memref<1x32xf32, #tpu.memory_space<vmem>>, vector<1x32xf32>
    %124 = vector.broadcast %123 : vector<1x32xf32> to vector<16x32xf32>
    %125 = arith.addf %122, %124 : vector<16x32xf32>
    %126 = arith.addf %0, %125 : vector<16x32xf32>
    %c0_43 = arith.constant 0 : index
    %c0_44 = arith.constant 0 : index
    %127 = vector.load %arg9[%c0_43, %c0_44] : memref<1x32xf32, #tpu.memory_space<vmem>>, vector<1x32xf32>
    %c0_45 = arith.constant 0 : index
    %c0_46 = arith.constant 0 : index
    %128 = vector.load %arg10[%c0_45, %c0_46] : memref<1x32xf32, #tpu.memory_space<vmem>>, vector<1x32xf32>
    %cst_47 = arith.constant dense<0.000000e+00> : vector<16xf32>
    %129 = vector.multi_reduction <add>, %126, %cst_47 [1] : vector<16x32xf32> to vector<16xf32>
    %130 = vector.shape_cast %129 : vector<16xf32> to vector<16x1xf32>
    %cst_48 = arith.constant 3.200000e+01 : f32
    %131 = vector.broadcast %cst_48 : f32 to vector<16x1xf32>
    %132 = arith.divf %130, %131 : vector<16x1xf32>
    %133 = vector.broadcast %132 : vector<16x1xf32> to vector<16x32xf32>
    %134 = arith.subf %126, %133 : vector<16x32xf32>
    %135 = arith.mulf %134, %134 : vector<16x32xf32>
    %cst_49 = arith.constant dense<0.000000e+00> : vector<16xf32>
    %136 = vector.multi_reduction <add>, %135, %cst_49 [1] : vector<16x32xf32> to vector<16xf32>
    %137 = vector.shape_cast %136 : vector<16xf32> to vector<16x1xf32>
    %cst_50 = arith.constant 3.200000e+01 : f32
    %138 = vector.broadcast %cst_50 : f32 to vector<16x1xf32>
    %139 = arith.divf %137, %138 : vector<16x1xf32>
    %140 = vector.broadcast %132 : vector<16x1xf32> to vector<16x32xf32>
    %141 = arith.subf %126, %140 : vector<16x32xf32>
    %cst_51 = arith.constant 9.99999974E-6 : f32
    %142 = vector.broadcast %cst_51 : f32 to vector<16x1xf32>
    %143 = arith.addf %139, %142 : vector<16x1xf32>
    %144 = math.rsqrt %143 : vector<16x1xf32>
    %145 = vector.broadcast %144 : vector<16x1xf32> to vector<16x32xf32>
    %146 = arith.mulf %141, %145 : vector<16x32xf32>
    %147 = vector.broadcast %127 : vector<1x32xf32> to vector<16x32xf32>
    %148 = arith.mulf %146, %147 : vector<16x32xf32>
    %149 = vector.broadcast %128 : vector<1x32xf32> to vector<16x32xf32>
    %150 = arith.addf %148, %149 : vector<16x32xf32>
    %151 = arith.truncf %150 : vector<16x32xf32> to vector<16x32xbf16>
    %c0_52 = arith.constant 0 : index
    %c0_53 = arith.constant 0 : index
    %152 = vector.load %arg11[%c0_52, %c0_53] : memref<32x128xbf16, #tpu.memory_space<vmem>>, vector<32x128xbf16>
    %cst_54 = arith.constant dense<0.000000e+00> : vector<16x128xf32>
    %153 = tpu.matmul %151, %152, %cst_54 {dimension_numbers = #tpu.dot_dimension_numbers<[1], [0], [0], [1], [0, 0, 1, 1], [], []>} : vector<16x32xbf16>, vector<32x128xbf16>, vector<16x128xf32> -> vector<16x128xf32>
    %c0_55 = arith.constant 0 : index
    %c0_56 = arith.constant 0 : index
    %154 = vector.load %arg12[%c0_55, %c0_56] : memref<1x128xf32, #tpu.memory_space<vmem>>, vector<1x128xf32>
    %155 = vector.broadcast %154 : vector<1x128xf32> to vector<16x128xf32>
    %156 = arith.addf %153, %155 : vector<16x128xf32>
    %cst_57 = arith.constant 0.000000e+00 : f32
    %157 = vector.broadcast %cst_57 : f32 to vector<16x128xf32>
    %158 = arith.maximumf %156, %157 : vector<16x128xf32>
    %159 = arith.truncf %158 : vector<16x128xf32> to vector<16x128xbf16>
    %c0_58 = arith.constant 0 : index
    %c0_59 = arith.constant 0 : index
    %160 = vector.load %arg13[%c0_58, %c0_59] : memref<128x32xbf16, #tpu.memory_space<vmem>>, vector<128x32xbf16>
    %cst_60 = arith.constant dense<0.000000e+00> : vector<16x32xf32>
    %161 = tpu.matmul %159, %160, %cst_60 {dimension_numbers = #tpu.dot_dimension_numbers<[1], [0], [0], [1], [0, 0, 1, 1], [], []>} : vector<16x128xbf16>, vector<128x32xbf16>, vector<16x32xf32> -> vector<16x32xf32>
    %c0_61 = arith.constant 0 : index
    %c0_62 = arith.constant 0 : index
    %162 = vector.load %arg14[%c0_61, %c0_62] : memref<1x32xf32, #tpu.memory_space<vmem>>, vector<1x32xf32>
    %163 = vector.broadcast %162 : vector<1x32xf32> to vector<16x32xf32>
    %164 = arith.addf %161, %163 : vector<16x32xf32>
    %165 = arith.addf %126, %164 : vector<16x32xf32>
    %c0_63 = arith.constant 0 : index
    %c0_64 = arith.constant 0 : index
    %166 = vector.load %arg15[%c0_63, %c0_64] : memref<16x32xf32, #tpu.memory_space<vmem>>, vector<16x32xf32>
    tpu.vector_store %arg15[%c0_63, %c0_64], %165 {strides = array<i32>} : memref<16x32xf32, #tpu.memory_space<vmem>>, vector<16x32xf32>,
    return
  }
  func.func @transform_0(%arg0: i32) -> (i32, i32) {
    %c0_i32 = arith.constant 0 : i32
    %c0_i32_0 = arith.constant 0 : i32
    return %arg0, %c0_i32 : i32, i32
  }
  func.func @transform_1(%arg0: i32) -> (i32, i32) {
    %c0_i32 = arith.constant 0 : i32
    %c0_i32_0 = arith.constant 0 : i32
    %c0_i32_1 = arith.constant 0 : i32
    return %c0_i32, %c0_i32_0 : i32, i32
  }
  func.func @transform_2(%arg0: i32) -> (i32, i32) {
    %c0_i32 = arith.constant 0 : i32
    %c0_i32_0 = arith.constant 0 : i32
    %c0_i32_1 = arith.constant 0 : i32
    return %c0_i32, %c0_i32_0 : i32, i32
  }
  func.func @transform_3(%arg0: i32) -> (i32, i32) {
    %c0_i32 = arith.constant 0 : i32
    %c0_i32_0 = arith.constant 0 : i32
    %c0_i32_1 = arith.constant 0 : i32
    return %c0_i32, %c0_i32_0 : i32, i32
  }
  func.func @transform_4(%arg0: i32) -> (i32, i32) {
    %c0_i32 = arith.constant 0 : i32
    %c0_i32_0 = arith.constant 0 : i32
    %c0_i32_1 = arith.constant 0 : i32
    return %c0_i32, %c0_i32_0 : i32, i32
  }
  func.func @transform_5(%arg0: i32) -> (i32, i32) {
    %c0_i32 = arith.constant 0 : i32
    %c0_i32_0 = arith.constant 0 : i32
    %c0_i32_1 = arith.constant 0 : i32
    return %c0_i32, %c0_i32_0 : i32, i32
  }
  func.func @transform_6(%arg0: i32) -> (i32, i32) {
    %c0_i32 = arith.constant 0 : i32
    %c0_i32_0 = arith.constant 0 : i32
    %c0_i32_1 = arith.constant 0 : i32
    return %c0_i32, %c0_i32_0 : i32, i32
  }
  func.func @transform_7(%arg0: i32) -> (i32, i32) {
    %c0_i32 = arith.constant 0 : i32
    %c0_i32_0 = arith.constant 0 : i32
    %c0_i32_1 = arith.constant 0 : i32
    return %c0_i32, %c0_i32_0 : i32, i32
  }
  func.func @transform_8(%arg0: i32) -> (i32, i32) {
    %c0_i32 = arith.constant 0 : i32
    %c0_i32_0 = arith.constant 0 : i32
    %c0_i32_1 = arith.constant 0 : i32
    return %c0_i32, %c0_i32_0 : i32, i32
  }
  func.func @transform_9(%arg0: i32) -> (i32, i32) {
    %c0_i32 = arith.constant 0 : i32
    %c0_i32_0 = arith.constant 0 : i32
    %c0_i32_1 = arith.constant 0 : i32
    return %c0_i32, %c0_i32_0 : i32, i32
  }
  func.func @transform_10(%arg0: i32) -> (i32, i32) {
    %c0_i32 = arith.constant 0 : i32
    %c0_i32_0 = arith.constant 0 : i32
    %c0_i32_1 = arith.constant 0 : i32
    return %c0_i32, %c0_i32_0 : i32, i32
  }
  func.func @transform_11(%arg0: i32) -> (i32, i32) {
    %c0_i32 = arith.constant 0 : i32
    %c0_i32_0 = arith.constant 0 : i32
    %c0_i32_1 = arith.constant 0 : i32
    return %c0_i32, %c0_i32_0 : i32, i32
  }
  func.func @transform_12(%arg0: i32) -> (i32, i32) {
    %c0_i32 = arith.constant 0 : i32
    %c0_i32_0 = arith.constant 0 : i32
    %c0_i32_1 = arith.constant 0 : i32
    return %c0_i32, %c0_i32_0 : i32, i32
  }
  func.func @transform_13(%arg0: i32) -> (i32, i32) {
    %c0_i32 = arith.constant 0 : i32
    %c0_i32_0 = arith.constant 0 : i32
    %c0_i32_1 = arith.constant 0 : i32
    return %c0_i32, %c0_i32_0 : i32, i32
  }
  func.func @transform_14(%arg0: i32) -> (i32, i32) {
    %c0_i32 = arith.constant 0 : i32
    %c0_i32_0 = arith.constant 0 : i32
    return %arg0, %c0_i32 : i32, i32
  }
}

</mosaic_0001>

<llo_original>
// kernel: tpu_custom_call.1
$region0: #{tpu_custom_call.1}
  #allocation0 [shape = 'u32[]', space=smem, size = 0x4, offset = 0x4, fixed_abs, tag = 'smem constant byte address 0x4 - core index']
  #allocation1 [shape = 'u32[144,128]{1,0:T(1,128)}', space=vmem, size = 0x12000, scoped, tag = 'internal scratch']
  %s0 = inlined_call_operand.vmem [shape: f32[16,32], index: 0, kind: input, shape index: {}]
  %s1 = inlined_call_operand.vmem [shape: f32[1,32], index: 1, kind: input, shape index: {}]
  %s2 = inlined_call_operand.vmem [shape: f32[1,32], index: 2, kind: input, shape index: {}]
  %s3 = inlined_call_operand.vmem [shape: bf16[32,32], index: 3, kind: input, shape index: {}]
  %s4 = inlined_call_operand.vmem [shape: bf16[32,32], index: 4, kind: input, shape index: {}]
  %s5 = inlined_call_operand.vmem [shape: bf16[32,32], index: 5, kind: input, shape index: {}]
  %s6 = inlined_call_operand.vmem [shape: bf16[32,32], index: 6, kind: input, shape index: {}]
  %s7 = inlined_call_operand.hbm [shape: f32[1,32], index: 7, kind: input, shape index: {}]
  %s8 = inlined_call_operand.hbm [shape: f32[1,32], index: 8, kind: input, shape index: {}]
  %s9 = inlined_call_operand.hbm [shape: f32[1,32], index: 9, kind: input, shape index: {}]
  %s10 = inlined_call_operand.vmem [shape: bf16[32,128], index: 10, kind: input, shape index: {}]
  %s11 = inlined_call_operand.vmem [shape: f32[1,128], index: 11, kind: input, shape index: {}]
  %s12 = inlined_call_operand.vmem [shape: bf16[128,32], index: 12, kind: input, shape index: {}]
  %s13 = inlined_call_operand.vmem [shape: f32[1,32], index: 13, kind: input, shape index: {}]
  %s14 = inlined_call_operand.hbm [shape: f32[16,32], index: 14, kind: output, shape index: {}]
  %s15 = sld [smem:[#allocation0]]
  $region78: #{tpu_custom_call.1} parent=0
    _
  %s17 = ssub.s32 1, %s15
  %s18 = scalar_select 0, %s17, %s15
  $region1: #{tpu_custom_call.1} parent=0
    #allocation2 [shape = 'u8[512]{0}', space=vmem, size = 0x400, scoped, tag = 'input window, operand 7, single buffered']
    #allocation3 [shape = 's32[1]{0}', space=sflag, size = 0x4, scoped, tag = 'scoped memory for tpu_custom_call.1']
    #allocation4 [shape = 's32[1]{0}', space=sflag, size = 0x4, scoped, tag = 'scoped memory for tpu_custom_call.1']
    #allocation5 [shape = 'u8[512]{0}', space=vmem, size = 0x400, scoped, tag = 'input window, operand 8, single buffered']
    #allocation6 [shape = 's32[1]{0}', space=sflag, size = 0x4, scoped, tag = 'scoped memory for tpu_custom_call.1']
    #allocation7 [shape = 'u8[512]{0}', space=vmem, size = 0x400, scoped, tag = 'input window, operand 9, single buffered']
    #allocation8 [shape = 'u8[8192]{0}', space=vmem, size = 0x2000, scoped, tag = 'output window, operand 0, single buffered']
    %19 = vsyncpa [#allocation3], 0
    %20 = vsyncpa [#allocation6], 0
    %21 = vsyncpa [#allocation4], 0
    // Predicated region
    $region2: #{tpu_custom_call.1} parent=1 // pred_check
      _
    $region3: #{tpu_custom_call.1} parent=1 // pred_check_branch
      %23 = sbr.rel (0) target = $region5
    $region4: #{tpu_custom_call.1} parent=1 // pred_region
      _
    $region5: #{tpu_custom_call.1} parent=1 // pred_fallthru
      _
    // Predicated region
    $region6: #{tpu_custom_call.1} parent=1 // pred_check
      _
    $region7: #{tpu_custom_call.1} parent=1 // pred_check_branch
      %25 = sbr.rel (0) target = $region9
    $region8: #{tpu_custom_call.1} parent=1 // pred_region
      _
    $region9: #{tpu_custom_call.1} parent=1 // pred_fallthru
      _
    // Predicated region
    $region10: #{tpu_custom_call.1} parent=1 // pred_check
      _
    $region11: #{tpu_custom_call.1} parent=1 // pred_check_branch
      %27 = sbr.rel (0) target = $region13
    $region12: #{tpu_custom_call.1} parent=1 // pred_region
      _
    $region13: #{tpu_custom_call.1} parent=1 // pred_fallthru
      _
    // Predicated region
    $region14: #{tpu_custom_call.1} parent=1 // pred_check
      _
    $region15: #{tpu_custom_call.1} parent=1 // pred_check_branch
      %29 = sbr.rel (0) target = $region17
    $region16: #{tpu_custom_call.1} parent=1 // pred_region
      _
    $region17: #{tpu_custom_call.1} parent=1 // pred_fallthru
      _
    // Predicated region
    $region18: #{tpu_custom_call.1} parent=1 // pred_check
      _
    $region19: #{tpu_custom_call.1} parent=1 // pred_check_branch
      %31 = sbr.rel (0) target = $region21
    $region20: #{tpu_custom_call.1} parent=1 // pred_region
      _
    $region21: #{tpu_custom_call.1} parent=1 // pred_fallthru
      _
    // Predicated region
    $region22: #{tpu_custom_call.1} parent=1 // pred_check
      _
    $region23: #{tpu_custom_call.1} parent=1 // pred_check_branch
      %33 = sbr.rel (0) target = $region25
    $region24: #{tpu_custom_call.1} parent=1 // pred_region
      _
    $region25: #{tpu_custom_call.1} parent=1 // pred_fallthru
      _
    // Predicated region
    $region26: #{tpu_custom_call.1} parent=1 // pred_check
      _
    $region27: #{tpu_custom_call.1} parent=1 // pred_check_branch
      %35 = sbr.rel (0) target = $region29
    $region28: #{tpu_custom_call.1} parent=1 // pred_region
      _
    $region29: #{tpu_custom_call.1} parent=1 // pred_fallthru
      _
    // Predicated region
    $region30: #{tpu_custom_call.1} parent=1 // pred_check
      _
    $region31: #{tpu_custom_call.1} parent=1 // pred_check_branch
      %37 = sbr.rel (0) target = $region33
    $region32: #{tpu_custom_call.1} parent=1 // pred_region
      %s39 = ssub.s32 16, 16
      %40 = vsyncadd [#allocation3], %s39
      %s42 = sshll.u32 [#allocation2], 4
      %s43 = int_to_ptr.vmem [resolvable:$true] %s42
      %45 = dma.hbm_to_vmem [thread:$0]  %s7, 16, %s43, [#allocation3]
    $region33: #{tpu_custom_call.1} parent=1 // pred_fallthru
      _
    // Predicated region
    $region34: #{tpu_custom_call.1} parent=1 // pred_check
      _
    $region35: #{tpu_custom_call.1} parent=1 // pred_check_branch
      %47 = sbr.rel (0) target = $region37
    $region36: #{tpu_custom_call.1} parent=1 // pred_region
      %s49 = ssub.s32 16, 16
      %50 = vsyncadd [#allocation6], %s49
      %s52 = sshll.u32 [#allocation5], 4
      %s53 = int_to_ptr.vmem [resolvable:$true] %s52
      %55 = dma.hbm_to_vmem [thread:$0]  %s8, 16, %s53, [#allocation6]
    $region37: #{tpu_custom_call.1} parent=1 // pred_fallthru
      _
    // Predicated region
    $region38: #{tpu_custom_call.1} parent=1 // pred_check
      _
    $region39: #{tpu_custom_call.1} parent=1 // pred_check_branch
      %57 = sbr.rel (0) target = $region41
    $region40: #{tpu_custom_call.1} parent=1 // pred_region
      %s59 = ssub.s32 16, 16
      %60 = vsyncadd [#allocation6], %s59
      %s62 = sshll.u32 [#allocation7], 4
      %s63 = int_to_ptr.vmem [resolvable:$true] %s62
      %65 = dma.hbm_to_vmem [thread:$0]  %s9, 16, %s63, [#allocation6]
    $region41: #{tpu_custom_call.1} parent=1 // pred_fallthru
      _
    // Predicated region
    $region42: #{tpu_custom_call.1} parent=1 // pred_check
      _
    $region43: #{tpu_custom_call.1} parent=1 // pred_check_branch
      %67 = sbr.rel (0) target = $region45
    $region44: #{tpu_custom_call.1} parent=1 // pred_region
      _
    $region45: #{tpu_custom_call.1} parent=1 // pred_fallthru
      _
    // Predicated region
    $region46: #{tpu_custom_call.1} parent=1 // pred_check
      _
    $region47: #{tpu_custom_call.1} parent=1 // pred_check_branch
      %69 = sbr.rel (0) target = $region49
    $region48: #{tpu_custom_call.1} parent=1 // pred_region
      _
    $region49: #{tpu_custom_call.1} parent=1 // pred_fallthru
      _
    // Predicated region
    $region50: #{tpu_custom_call.1} parent=1 // pred_check
      _
    $region51: #{tpu_custom_call.1} parent=1 // pred_check_branch
      %71 = sbr.rel (0) target = $region53
    $region52: #{tpu_custom_call.1} parent=1 // pred_region
      _
    $region53: #{tpu_custom_call.1} parent=1 // pred_fallthru
      _
    // Predicated region
    $region54: #{tpu_custom_call.1} parent=1 // pred_check
      _
    $region55: #{tpu_custom_call.1} parent=1 // pred_check_branch
      %73 = sbr.rel (0) target = $region57
    $region56: #{tpu_custom_call.1} parent=1 // pred_region
      _
    $region57: #{tpu_custom_call.1} parent=1 // pred_fallthru
      _
    // Predicated region
    $region58: #{tpu_custom_call.1} parent=1 // pred_check
      _
    $region59: #{tpu_custom_call.1} parent=1 // pred_check_branch
      %75 = sbr.rel (0) target = $region61
    $region60: #{tpu_custom_call.1} parent=1 // pred_region
      %76 = dma.done [#allocation3], 16
    $region61: #{tpu_custom_call.1} parent=1 // pred_fallthru
      _
    // Predicated region
    $region62: #{tpu_custom_call.1} parent=1 // pred_check
      _
    $region63: #{tpu_custom_call.1} parent=1 // pred_check_branch
      %78 = sbr.rel (0) target = $region65
    $region64: #{tpu_custom_call.1} parent=1 // pred_region
      %79 = dma.done [#allocation6], 16
    $region65: #{tpu_custom_call.1} parent=1 // pred_fallthru
      _
    // Predicated region
    $region66: #{tpu_custom_call.1} parent=1 // pred_check
      _
    $region67: #{tpu_custom_call.1} parent=1 // pred_check_branch
      %81 = sbr.rel (0) target = $region69
    $region68: #{tpu_custom_call.1} parent=1 // pred_region
      %82 = dma.done [#allocation6], 16
    $region69: #{tpu_custom_call.1} parent=1 // pred_fallthru
      _
    %v84 = vld [vmem:[%s0] sm:$0xff]
    %v85 = vld [vmem:[%s0 + $0x8] sm:$0xff]
    %v86 = vld [vmem:[%s1] sm:$0x1]
    %v87 = vld [vmem:[%s2] sm:$0x1]
    %vm88 = vcmask 261120
    %v89 = vsel %vm88, %v84, 0.0
    %90 = vadd.xlane.f32.xlu0 %v89
    %v91 = vpop.xlane.xlu0 %90
    %v92 = vsel %vm88, %v85, 0.0
    %93 = vadd.xlane.f32.xlu0 %v92
    %v94 = vpop.xlane.xlu0 %93
    %v95 = vrcp.pop 32.0
    %v96 = vmul.f32 %v91, %v95
    %v97 = vmul.f32 %v94, %v95
    %v98 = vsub.f32 %v84, %v96
    %v99 = vsub.f32 %v85, %v97
    %v100 = vmul.f32 %v98, %v98
    %v101 = vmul.f32 %v99, %v99
    %v102 = vsel %vm88, %v100, 0.0
    %103 = vadd.xlane.f32.xlu0 %v102
    %v104 = vpop.xlane.xlu0 %103
    %v105 = vsel %vm88, %v101, 0.0
    %106 = vadd.xlane.f32.xlu0 %v105
    %v107 = vpop.xlane.xlu0 %106
    %v108 = vmul.f32 %v104, %v95
    %v109 = vmul.f32 %v107, %v95
    %v110 = vadd.f32 %v108, 1e-05
    %v111 = vadd.f32 %v109, 1e-05
    %v112 = vrsqrt.pop %v110
    %v113 = vrsqrt.pop %v111
    %v114 = vmul.f32 %v98, %v112
    %v115 = vmul.f32 %v99, %v113
    %v117 = vlaneseq
    %v118 = vshrl.u32 %v117, 7
    %v119 = vsub.s32 0, %v118
    %v120 = vrot.slane %v86, %v119
    %v122 = vmul.f32 %v114, %v120
    %v123 = vmul.f32 %v115, %v120
    %v125 = vlaneseq
    %v126 = vshrl.u32 %v125, 7
    %v127 = vsub.s32 0, %v126
    %v128 = vrot.slane %v87, %v127
    %v130 = vadd.f32 %v122, %v128
    %v131 = vadd.f32 %v123, %v128
    %v132 = vpack.c.bf16 %v131, %v130
    %v133 = vld [vmem:[%s3] sm:$0xf]
    %v134 = vld [vmem:[%s3 + $0x4] sm:$0xf]
    %v135 = vld [vmem:[%s3 + $0x8] sm:$0xf]
    %v136 = vld [vmem:[%s3 + $0xc] sm:$0xf]
    %v141 = vunpack.c.l.b16 %v133
    %v142 = vunpack.c.l.b16 %v134
    %v143 = vunpack.c.l.b16 %v135
    %v144 = vunpack.c.l.b16 %v136
    %v145 = vpack.c.b16 %v142, %v141
    %v146 = vpack.c.b16 %v144, %v143
    %v150 = vsel %vm88, %v132, 0
    %152 = vmatprep.subr.bf16.mxu0 0
    %153 = vmatpush1.bf16.msra.mxu0 %v145
    %154 = vmatprep.subr.bf16.mxu0 0
    %155 = vmatpush1.bf16.msra.mxu0 %v146
    %156 = vmatprep.subr.bf16.mxu0 0
    %157 = vmatpush1.bf16.msra.mxu0 0
    %158 = vmatprep.subr.bf16.mxu0 0
    %159 = vmatpush1.bf16.msra.mxu0 0
    %160 = vmatprep.subr.bf16.mxu0 0
    %161 = vmatpush1.bf16.msra.mxu0 0
    %162 = vmatprep.subr.bf16.mxu0 0
    %163 = vmatpush1.bf16.msra.mxu0 0
    %164 = vmatprep.subr.bf16.mxu0 0
    %165 = vmatpush1.bf16.msra.mxu0 0
    %166 = vmatprep.subr.bf16.mxu0 0
    %167 = vmatpush1.bf16.msra.mxu0 0
    %168 = vmatprep.subr.bf16.mxu0 0
    %169 = vmatpush1.bf16.msra.mxu0 0
    %170 = vmatprep.subr.bf16.mxu0 0
    %171 = vmatpush1.bf16.msra.mxu0 0
    %172 = vmatprep.subr.bf16.mxu0 0
    %173 = vmatpush1.bf16.msra.mxu0 0
    %174 = vmatprep.subr.bf16.mxu0 0
    %175 = vmatpush1.bf16.msra.mxu0 0
    %176 = vmatprep.subr.bf16.mxu0 0
    %177 = vmatpush1.bf16.msra.mxu0 0
    %178 = vmatprep.subr.bf16.mxu0 0
    %179 = vmatpush1.bf16.msra.mxu0 0
    %180 = vmatprep.subr.bf16.mxu0 0
    %181 = vmatpush1.bf16.msra.mxu0 0
    %182 = vmatprep.subr.bf16.mxu0 0
    %183 = vmatpush1.bf16.msra.mxu0 0
    %184 = vmatprep.mubr.bf16.mxu0 0
    %185 = vmatmul.mubr.bf16.gmra.mrb[0].mxu0 %v150
    %v186 = vpop.f32.mrb[0].mxu0
    %v187 = vadd.f32 0.0, %v186
    %v188 = vpop.f32.mrb[0].mxu0
    %v189 = vpop.f32.mrb[0].mxu0
    %v190 = vadd.f32 0.0, %v189
    %v191 = vpop.f32.mrb[0].mxu0
    %192 = vdwg.mxu0
    %v193 = vpack.c.bf16 %v187, %v187
    %v194 = vpack.c.bf16 %v190, %v190
    %v195 = vld [vmem:[%s4] sm:$0xf]
    %v196 = vld [vmem:[%s4 + $0x4] sm:$0xf]
    %v197 = vld [vmem:[%s4 + $0x8] sm:$0xf]
    %v198 = vld [vmem:[%s4 + $0xc] sm:$0xf]
    %v203 = vunpack.c.l.b16 %v195
    %v204 = vunpack.c.l.b16 %v196
    %v205 = vunpack.c.l.b16 %v197
    %v206 = vunpack.c.l.b16 %v198
    %v207 = vpack.c.b16 %v204, %v203
    %v208 = vpack.c.b16 %v206, %v205
    %211 = vmatprep.subr.bf16.mxu0 0
    %212 = vmatpush1.bf16.msra.mxu0 %v207
    %213 = vmatprep.subr.bf16.mxu0 0
    %214 = vmatpush1.bf16.msra.mxu0 %v208
    %215 = vmatprep.subr.bf16.mxu0 0
    %216 = vmatpush1.bf16.msra.mxu0 0
    %217 = vmatprep.subr.bf16.mxu0 0
    %218 = vmatpush1.bf16.msra.mxu0 0
    %219 = vmatprep.subr.bf16.mxu0 0
    %220 = vmatpush1.bf16.msra.mxu0 0
    %221 = vmatprep.subr.bf16.mxu0 0
    %222 = vmatpush1.bf16.msra.mxu0 0
    %223 = vmatprep.subr.bf16.mxu0 0
    %224 = vmatpush1.bf16.msra.mxu0 0
    %225 = vmatprep.subr.bf16.mxu0 0
    %226 = vmatpush1.bf16.msra.mxu0 0
    %227 = vmatprep.subr.bf16.mxu0 0
    %228 = vmatpush1.bf16.msra.mxu0 0
    %229 = vmatprep.subr.bf16.mxu0 0
    %230 = vmatpush1.bf16.msra.mxu0 0
    %231 = vmatprep.subr.bf16.mxu0 0
    %232 = vmatpush1.bf16.msra.mxu0 0
    %233 = vmatprep.subr.bf16.mxu0 0
    %234 = vmatpush1.bf16.msra.mxu0 0
    %235 = vmatprep.subr.bf16.mxu0 0
    %236 = vmatpush1.bf16.msra.mxu0 0
    %237 = vmatprep.subr.bf16.mxu0 0
    %238 = vmatpush1.bf16.msra.mxu0 0
    %239 = vmatprep.subr.bf16.mxu0 0
    %240 = vmatpush1.bf16.msra.mxu0 0
    %241 = vmatprep.subr.bf16.mxu0 0
    %242 = vmatpush1.bf16.msra.mxu0 0
    %243 = vmatprep.mubr.bf16.mxu0 0
    %244 = vmatmul.mubr.bf16.gmra.mrb[0].mxu0 %v150
    %v245 = vpop.f32.mrb[0].mxu0
    %v246 = vadd.f32 0.0, %v245
    %v247 = vpop.f32.mrb[0].mxu0
    %v248 = vpop.f32.mrb[0].mxu0
    %v249 = vadd.f32 0.0, %v248
    %v250 = vpop.f32.mrb[0].mxu0
    %251 = vdwg.mxu0
    %v252 = vpack.c.bf16 %v246, %v246
    %v253 = vpack.c.bf16 %v249, %v249
    %v254 = vld [vmem:[%s5] sm:$0xf]
    %v255 = vld [vmem:[%s5 + $0x4] sm:$0xf]
    %v256 = vld [vmem:[%s5 + $0x8] sm:$0xf]
    %v257 = vld [vmem:[%s5 + $0xc] sm:$0xf]
    %v262 = vunpack.c.l.b16 %v254
    %v263 = vunpack.c.l.b16 %v255
    %v264 = vunpack.c.l.b16 %v256
    %v265 = vunpack.c.l.b16 %v257
    %v266 = vpack.c.b16 %v263, %v262
    %v267 = vpack.c.b16 %v265, %v264
    %270 = vmatprep.subr.bf16.mxu0 0
    %271 = vmatpush1.bf16.msra.mxu0 %v266
    %272 = vmatprep.subr.bf16.mxu0 0
    %273 = vmatpush1.bf16.msra.mxu0 %v267
    %274 = vmatprep.subr.bf16.mxu0 0
    %275 = vmatpush1.bf16.msra.mxu0 0
    %276 = vmatprep.subr.bf16.mxu0 0
    %277 = vmatpush1.bf16.msra.mxu0 0
    %278 = vmatprep.subr.bf16.mxu0 0
    %279 = vmatpush1.bf16.msra.mxu0 0
    %280 = vmatprep.subr.bf16.mxu0 0
    %281 = vmatpush1.bf16.msra.mxu0 0
    %282 = vmatprep.subr.bf16.mxu0 0
    %283 = vmatpush1.bf16.msra.mxu0 0
    %284 = vmatprep.subr.bf16.mxu0 0
    %285 = vmatpush1.bf16.msra.mxu0 0
    %286 = vmatprep.subr.bf16.mxu0 0
    %287 = vmatpush1.bf16.msra.mxu0 0
    %288 = vmatprep.subr.bf16.mxu0 0
    %289 = vmatpush1.bf16.msra.mxu0 0
    %290 = vmatprep.subr.bf16.mxu0 0
    %291 = vmatpush1.bf16.msra.mxu0 0
    %292 = vmatprep.subr.bf16.mxu0 0
    %293 = vmatpush1.bf16.msra.mxu0 0
    %294 = vmatprep.subr.bf16.mxu0 0
    %295 = vmatpush1.bf16.msra.mxu0 0
    %296 = vmatprep.subr.bf16.mxu0 0
    %297 = vmatpush1.bf16.msra.mxu0 0
    %298 = vmatprep.subr.bf16.mxu0 0
    %299 = vmatpush1.bf16.msra.mxu0 0
    %300 = vmatprep.subr.bf16.mxu0 0
    %301 = vmatpush1.bf16.msra.mxu0 0
    %302 = vmatprep.mubr.bf16.mxu0 0
    %303 = vmatmul.mubr.bf16.gmra.mrb[0].mxu0 %v150
    %v304 = vpop.f32.mrb[0].mxu0
    %v305 = vadd.f32 0.0, %v304
    %v306 = vpop.f32.mrb[0].mxu0
    %v307 = vpop.f32.mrb[0].mxu0
    %v308 = vadd.f32 0.0, %v307
    %v309 = vpop.f32.mrb[0].mxu0
    %310 = vdwg.mxu0
    %v311 = vpack.c.bf16 %v305, %v305
    %v312 = vpack.c.bf16 %v308, %v308
    %v313 = vlaneseq
    %v314 = vshrl.u32 %v313, 7
    %v315 = vlaneseq
    %v316 = vand.u32 %v315, 127
    %vm317 = vcmp.ge.s32.totalorder %v314, %v316
    %vm318 = vcmask 64512
    %v320 = vsel %vm318, %v193, 0
    %v323 = vsel %vm318, %v252, 0
    %325 = vmatprep.subr.bf16.mxu0 0
    %326 = vmatpush1.bf16.xpose.msra.mxu0 %v323
    %327 = vmatprep.subr.bf16.mxu0 0
    %328 = vmatpush1.bf16.xpose.msra.mxu0 0
    %329 = vmatprep.subr.bf16.mxu0 0
    %330 = vmatpush1.bf16.xpose.msra.mxu0 0
    %331 = vmatprep.subr.bf16.mxu0 0
    %332 = vmatpush1.bf16.xpose.msra.mxu0 0
    %333 = vmatprep.subr.bf16.mxu0 0
    %334 = vmatpush1.bf16.xpose.msra.mxu0 0
    %335 = vmatprep.subr.bf16.mxu0 0
    %336 = vmatpush1.bf16.xpose.msra.mxu0 0
    %337 = vmatprep.subr.bf16.mxu0 0
    %338 = vmatpush1.bf16.xpose.msra.mxu0 0
    %339 = vmatprep.subr.bf16.mxu0 0
    %340 = vmatpush1.bf16.xpose.msra.mxu0 0
    %341 = vmatprep.subr.bf16.mxu0 0
    %342 = vmatpush1.bf16.xpose.msra.mxu0 0
    %343 = vmatprep.subr.bf16.mxu0 0
    %344 = vmatpush1.bf16.xpose.msra.mxu0 0
    %345 = vmatprep.subr.bf16.mxu0 0
    %346 = vmatpush1.bf16.xpose.msra.mxu0 0
    %347 = vmatprep.subr.bf16.mxu0 0
    %348 = vmatpush1.bf16.xpose.msra.mxu0 0
    %349 = vmatprep.subr.bf16.mxu0 0
    %350 = vmatpush1.bf16.xpose.msra.mxu0 0
    %351 = vmatprep.subr.bf16.mxu0 0
    %352 = vmatpush1.bf16.xpose.msra.mxu0 0
    %353 = vmatprep.subr.bf16.mxu0 0
    %354 = vmatpush1.bf16.xpose.msra.mxu0 0
    %355 = vmatprep.subr.bf16.mxu0 0
    %356 = vmatpush1.bf16.xpose.msra.mxu0 0
    %357 = vmatprep.mubr.bf16.mxu0 0
    %358 = vmatmul.mubr.bf16.gmra.mrb[0].mxu0 %v320
    %v359 = vpop.f32.mrb[0].mxu0
    %v360 = vadd.f32 0.0, %v359
    %v361 = vpop.f32.mrb[0].mxu0
    %v362 = vpop.f32.mrb[0].mxu0
    %v363 = vpop.f32.mrb[0].mxu0
    %364 = vdwg.mxu0
    %v366 = vsel %vm318, %v194, 0
    %v369 = vsel %vm318, %v253, 0
    %371 = vmatprep.subr.bf16.mxu0 0
    %372 = vmatpush1.bf16.xpose.msra.mxu0 %v369
    %373 = vmatprep.subr.bf16.mxu0 0
    %374 = vmatpush1.bf16.xpose.msra.mxu0 0
    %375 = vmatprep.subr.bf16.mxu0 0
    %376 = vmatpush1.bf16.xpose.msra.mxu0 0
    %377 = vmatprep.subr.bf16.mxu0 0
    %378 = vmatpush1.bf16.xpose.msra.mxu0 0
    %379 = vmatprep.subr.bf16.mxu0 0
    %380 = vmatpush1.bf16.xpose.msra.mxu0 0
    %381 = vmatprep.subr.bf16.mxu0 0
    %382 = vmatpush1.bf16.xpose.msra.mxu0 0
    %383 = vmatprep.subr.bf16.mxu0 0
    %384 = vmatpush1.bf16.xpose.msra.mxu0 0
    %385 = vmatprep.subr.bf16.mxu0 0
    %386 = vmatpush1.bf16.xpose.msra.mxu0 0
    %387 = vmatprep.subr.bf16.mxu0 0
    %388 = vmatpush1.bf16.xpose.msra.mxu0 0
    %389 = vmatprep.subr.bf16.mxu0 0
    %390 = vmatpush1.bf16.xpose.msra.mxu0 0
    %391 = vmatprep.subr.bf16.mxu0 0
    %392 = vmatpush1.bf16.xpose.msra.mxu0 0
    %393 = vmatprep.subr.bf16.mxu0 0
    %394 = vmatpush1.bf16.xpose.msra.mxu0 0
    %395 = vmatprep.subr.bf16.mxu0 0
    %396 = vmatpush1.bf16.xpose.msra.mxu0 0
    %397 = vmatprep.subr.bf16.mxu0 0
    %398 = vmatpush1.bf16.xpose.msra.mxu0 0
    %399 = vmatprep.subr.bf16.mxu0 0
    %400 = vmatpush1.bf16.xpose.msra.mxu0 0
    %401 = vmatprep.subr.bf16.mxu0 0
    %402 = vmatpush1.bf16.xpose.msra.mxu0 0
    %403 = vmatprep.mubr.bf16.mxu0 0
    %404 = vmatmul.mubr.bf16.gmra.mrb[0].mxu0 %v366
    %v405 = vpop.f32.mrb[0].mxu0
    %v406 = vadd.f32 0.0, %v405
    %v407 = vpop.f32.mrb[0].mxu0
    %v408 = vpop.f32.mrb[0].mxu0
    %v409 = vpop.f32.mrb[0].mxu0
    %410 = vdwg.mxu0
    %v411 = vsel %vm317, 1, 0
    %vm412 = vcmp.eq.s32.totalorder %v411, 1
    %v413 = vsel %vm412, %v360, -1e+30
    %v414 = vsel %vm412, %v406, -1e+30
    %v415 = vsel %vm318, %v413, -inf
    %416 = vmax.xlane.f32.xlu0 %v415
    %v417 = vpop.xlane.xlu0 %416
    %v418 = vsel %vm318, %v414, -inf
    %419 = vmax.xlane.f32.xlu0 %v418
    %v420 = vpop.xlane.xlu0 %419
    %v421 = vsub.f32 %v413, %v417
    %v422 = vsub.f32 %v414, %v420
    %v423 = vmul.f32 %v421, 1.442695
    %v424 = vpow.pop %v423
    %v425 = vmul.f32 %v422, 1.442695
    %v426 = vpow.pop %v425
    %v427 = vsel %vm318, %v424, 0.0
    %428 = vadd.xlane.f32.xlu0 %v427
    %v429 = vpop.xlane.xlu0 %428
    %v430 = vsel %vm318, %v426, 0.0
    %431 = vadd.xlane.f32.xlu0 %v430
    %v432 = vpop.xlane.xlu0 %431
    %v433 = vrcp.pop %v429
    %v434 = vmul.f32 %v424, %v433
    %v435 = vrcp.pop %v432
    %v436 = vmul.f32 %v426, %v435
    %v437 = vpack.c.bf16 %v434, %v434
    %v438 = vpack.c.bf16 %v436, %v436
    %v440 = vsel %vm318, %v437, 0
    %vm442 = vcmask 1043456
    %v444 = vsel %vm442, %v311, 0
    %446 = vmatprep.subr.bf16.mxu0 0
    %447 = vmatpush1.bf16.msra.mxu0 %v444
    %448 = vmatprep.subr.bf16.mxu0 0
    %449 = vmatpush1.bf16.msra.mxu0 0
    %450 = vmatprep.subr.bf16.mxu0 0
    %451 = vmatpush1.bf16.msra.mxu0 0
    %452 = vmatprep.subr.bf16.mxu0 0
    %453 = vmatpush1.bf16.msra.mxu0 0
    %454 = vmatprep.subr.bf16.mxu0 0
    %455 = vmatpush1.bf16.msra.mxu0 0
    %456 = vmatprep.subr.bf16.mxu0 0
    %457 = vmatpush1.bf16.msra.mxu0 0
    %458 = vmatprep.subr.bf16.mxu0 0
    %459 = vmatpush1.bf16.msra.mxu0 0
    %460 = vmatprep.subr.bf16.mxu0 0
    %461 = vmatpush1.bf16.msra.mxu0 0
    %462 = vmatprep.subr.bf16.mxu0 0
    %463 = vmatpush1.bf16.msra.mxu0 0
    %464 = vmatprep.subr.bf16.mxu0 0
    %465 = vmatpush1.bf16.msra.mxu0 0
    %466 = vmatprep.subr.bf16.mxu0 0
    %467 = vmatpush1.bf16.msra.mxu0 0
    %468 = vmatprep.subr.bf16.mxu0 0
    %469 = vmatpush1.bf16.msra.mxu0 0
    %470 = vmatprep.subr.bf16.mxu0 0
    %471 = vmatpush1.bf16.msra.mxu0 0
    %472 = vmatprep.subr.bf16.mxu0 0
    %473 = vmatpush1.bf16.msra.mxu0 0
    %474 = vmatprep.subr.bf16.mxu0 0
    %475 = vmatpush1.bf16.msra.mxu0 0
    %476 = vmatprep.subr.bf16.mxu0 0
    %477 = vmatpush1.bf16.msra.mxu0 0
    %478 = vmatprep.mubr.bf16.mxu0 0
    %479 = vmatmul.mubr.bf16.gmra.mrb[0].mxu0 %v440
    %v480 = vpop.f32.mrb[0].mxu0
    %v481 = vadd.f32 0.0, %v480
    %v482 = vpop.f32.mrb[0].mxu0
    %v483 = vpop.f32.mrb[0].mxu0
    %v484 = vpop.f32.mrb[0].mxu0
    %485 = vdwg.mxu0
    %v487 = vsel %vm318, %v438, 0
    %v490 = vsel %vm442, %v312, 0
    %492 = vmatprep.subr.bf16.mxu0 0
    %493 = vmatpush1.bf16.msra.mxu0 %v490
    %494 = vmatprep.subr.bf16.mxu0 0
    %495 = vmatpush1.bf16.msra.mxu0 0
    %496 = vmatprep.subr.bf16.mxu0 0
    %497 = vmatpush1.bf16.msra.mxu0 0
    %498 = vmatprep.subr.bf16.mxu0 0
    %499 = vmatpush1.bf16.msra.mxu0 0
    %500 = vmatprep.subr.bf16.mxu0 0
    %501 = vmatpush1.bf16.msra.mxu0 0
    %502 = vmatprep.subr.bf16.mxu0 0
    %503 = vmatpush1.bf16.msra.mxu0 0
    %504 = vmatprep.subr.bf16.mxu0 0
    %505 = vmatpush1.bf16.msra.mxu0 0
    %506 = vmatprep.subr.bf16.mxu0 0
    %507 = vmatpush1.bf16.msra.mxu0 0
    %508 = vmatprep.subr.bf16.mxu0 0
    %509 = vmatpush1.bf16.msra.mxu0 0
    %510 = vmatprep.subr.bf16.mxu0 0
    %511 = vmatpush1.bf16.msra.mxu0 0
    %512 = vmatprep.subr.bf16.mxu0 0
    %513 = vmatpush1.bf16.msra.mxu0 0
    %514 = vmatprep.subr.bf16.mxu0 0
    %515 = vmatpush1.bf16.msra.mxu0 0
    %516 = vmatprep.subr.bf16.mxu0 0
    %517 = vmatpush1.bf16.msra.mxu0 0
    %518 = vmatprep.subr.bf16.mxu0 0
    %519 = vmatpush1.bf16.msra.mxu0 0
    %520 = vmatprep.subr.bf16.mxu0 0
    %521 = vmatpush1.bf16.msra.mxu0 0
    %522 = vmatprep.subr.bf16.mxu0 0
    %523 = vmatpush1.bf16.msra.mxu0 0
    %524 = vmatprep.mubr.bf16.mxu0 0
    %525 = vmatmul.mubr.bf16.gmra.mrb[0].mxu0 %v487
    %v526 = vpop.f32.mrb[0].mxu0
    %v527 = vadd.f32 0.0, %v526
    %v528 = vpop.f32.mrb[0].mxu0
    %v529 = vpop.f32.mrb[0].mxu0
    %v530 = vpop.f32.mrb[0].mxu0
    %531 = vdwg.mxu0
    %533 = vrot.lane.b32.xlu0 %v193, 120
    %v534 = vpop.permute.xlu0 %533
    %536 = vrot.lane.b32.xlu0 %v252, 120
    %v537 = vpop.permute.xlu0 %536
    %v539 = vsel %vm318, %v534, 0
    %v542 = vsel %vm318, %v537, 0
    %544 = vmatprep.subr.bf16.mxu0 0
    %545 = vmatpush1.bf16.xpose.msra.mxu0 %v542
    %546 = vmatprep.subr.bf16.mxu0 0
    %547 = vmatpush1.bf16.xpose.msra.mxu0 0
    %548 = vmatprep.subr.bf16.mxu0 0
    %549 = vmatpush1.bf16.xpose.msra.mxu0 0
    %550 = vmatprep.subr.bf16.mxu0 0
    %551 = vmatpush1.bf16.xpose.msra.mxu0 0
    %552 = vmatprep.subr.bf16.mxu0 0
    %553 = vmatpush1.bf16.xpose.msra.mxu0 0
    %554 = vmatprep.subr.bf16.mxu0 0
    %555 = vmatpush1.bf16.xpose.msra.mxu0 0
    %556 = vmatprep.subr.bf16.mxu0 0
    %557 = vmatpush1.bf16.xpose.msra.mxu0 0
    %558 = vmatprep.subr.bf16.mxu0 0
    %559 = vmatpush1.bf16.xpose.msra.mxu0 0
    %560 = vmatprep.subr.bf16.mxu0 0
    %561 = vmatpush1.bf16.xpose.msra.mxu0 0
    %562 = vmatprep.subr.bf16.mxu0 0
    %563 = vmatpush1.bf16.xpose.msra.mxu0 0
    %564 = vmatprep.subr.bf16.mxu0 0
    %565 = vmatpush1.bf16.xpose.msra.mxu0 0
    %566 = vmatprep.subr.bf16.mxu0 0
    %567 = vmatpush1.bf16.xpose.msra.mxu0 0
    %568 = vmatprep.subr.bf16.mxu0 0
    %569 = vmatpush1.bf16.xpose.msra.mxu0 0
    %570 = vmatprep.subr.bf16.mxu0 0
    %571 = vmatpush1.bf16.xpose.msra.mxu0 0
    %572 = vmatprep.subr.bf16.mxu0 0
    %573 = vmatpush1.bf16.xpose.msra.mxu0 0
    %574 = vmatprep.subr.bf16.mxu0 0
    %575 = vmatpush1.bf16.xpose.msra.mxu0 0
    %576 = vmatprep.mubr.bf16.mxu0 0
    %577 = vmatmul.mubr.bf16.gmra.mrb[0].mxu0 %v539
    %v578 = vpop.f32.mrb[0].mxu0
    %v579 = vadd.f32 0.0, %v578
    %v580 = vpop.f32.mrb[0].mxu0
    %v581 = vpop.f32.mrb[0].mxu0
    %v582 = vpop.f32.mrb[0].mxu0
    %583 = vdwg.mxu0
    %585 = vrot.lane.b32.xlu0 %v194, 120
    %v586 = vpop.permute.xlu0 %585
    %588 = vrot.lane.b32.xlu0 %v253, 120
    %v589 = vpop.permute.xlu0 %588
    %v591 = vsel %vm318, %v586, 0
    %v594 = vsel %vm318, %v589, 0
    %596 = vmatprep.subr.bf16.mxu0 0
    %597 = vmatpush1.bf16.xpose.msra.mxu0 %v594
    %598 = vmatprep.subr.bf16.mxu0 0
    %599 = vmatpush1.bf16.xpose.msra.mxu0 0
    %600 = vmatprep.subr.bf16.mxu0 0
    %601 = vmatpush1.bf16.xpose.msra.mxu0 0
    %602 = vmatprep.subr.bf16.mxu0 0
    %603 = vmatpush1.bf16.xpose.msra.mxu0 0
    %604 = vmatprep.subr.bf16.mxu0 0
    %605 = vmatpush1.bf16.xpose.msra.mxu0 0
    %606 = vmatprep.subr.bf16.mxu0 0
    %607 = vmatpush1.bf16.xpose.msra.mxu0 0
    %608 = vmatprep.subr.bf16.mxu0 0
    %609 = vmatpush1.bf16.xpose.msra.mxu0 0
    %610 = vmatprep.subr.bf16.mxu0 0
    %611 = vmatpush1.bf16.xpose.msra.mxu0 0
    %612 = vmatprep.subr.bf16.mxu0 0
    %613 = vmatpush1.bf16.xpose.msra.mxu0 0
    %614 = vmatprep.subr.bf16.mxu0 0
    %615 = vmatpush1.bf16.xpose.msra.mxu0 0
    %616 = vmatprep.subr.bf16.mxu0 0
    %617 = vmatpush1.bf16.xpose.msra.mxu0 0
    %618 = vmatprep.subr.bf16.mxu0 0
    %619 = vmatpush1.bf16.xpose.msra.mxu0 0
    %620 = vmatprep.subr.bf16.mxu0 0
    %621 = vmatpush1.bf16.xpose.msra.mxu0 0
    %622 = vmatprep.subr.bf16.mxu0 0
    %623 = vmatpush1.bf16.xpose.msra.mxu0 0
    %624 = vmatprep.subr.bf16.mxu0 0
    %625 = vmatpush1.bf16.xpose.msra.mxu0 0
    %626 = vmatprep.subr.bf16.mxu0 0
    %627 = vmatpush1.bf16.xpose.msra.mxu0 0
    %628 = vmatprep.mubr.bf16.mxu0 0
    %629 = vmatmul.mubr.bf16.gmra.mrb[0].mxu0 %v591
    %v630 = vpop.f32.mrb[0].mxu0
    %v631 = vadd.f32 0.0, %v630
    %v632 = vpop.f32.mrb[0].mxu0
    %v633 = vpop.f32.mrb[0].mxu0
    %v634 = vpop.f32.mrb[0].mxu0
    %635 = vdwg.mxu0
    %v636 = vsel %vm412, %v579, -1e+30
    %v637 = vsel %vm412, %v631, -1e+30
    %v638 = vsel %vm318, %v636, -inf
    %639 = vmax.xlane.f32.xlu0 %v638
    %v640 = vpop.xlane.xlu0 %639
    %v641 = vsel %vm318, %v637, -inf
    %642 = vmax.xlane.f32.xlu0 %v641
    %v643 = vpop.xlane.xlu0 %642
    %v644 = vsub.f32 %v636, %v640
    %v645 = vsub.f32 %v637, %v643
    %v646 = vmul.f32 %v644, 1.442695
    %v647 = vpow.pop %v646
    %v648 = vmul.f32 %v645, 1.442695
    %v649 = vpow.pop %v648
    %v650 = vsel %vm318, %v647, 0.0
    %651 = vadd.xlane.f32.xlu0 %v650
    %v652 = vpop.xlane.xlu0 %651
    %v653 = vsel %vm318, %v649, 0.0
    %654 = vadd.xlane.f32.xlu0 %v653
    %v655 = vpop.xlane.xlu0 %654
    %v656 = vrcp.pop %v652
    %v657 = vmul.f32 %v647, %v656
    %v658 = vrcp.pop %v655
    %v659 = vmul.f32 %v649, %v658
    %v660 = vpack.c.bf16 %v657, %v657
    %v661 = vpack.c.bf16 %v659, %v659
    %663 = vrot.lane.b32.xlu0 %v311, 120
    %v664 = vpop.permute.xlu0 %663
    %v666 = vsel %vm318, %v660, 0
    %v669 = vsel %vm442, %v664, 0
    %671 = vmatprep.subr.bf16.mxu0 0
    %672 = vmatpush1.bf16.msra.mxu0 %v669
    %673 = vmatprep.subr.bf16.mxu0 0
    %674 = vmatpush1.bf16.msra.mxu0 0
    %675 = vmatprep.subr.bf16.mxu0 0
    %676 = vmatpush1.bf16.msra.mxu0 0
    %677 = vmatprep.subr.bf16.mxu0 0
    %678 = vmatpush1.bf16.msra.mxu0 0
    %679 = vmatprep.subr.bf16.mxu0 0
    %680 = vmatpush1.bf16.msra.mxu0 0
    %681 = vmatprep.subr.bf16.mxu0 0
    %682 = vmatpush1.bf16.msra.mxu0 0
    %683 = vmatprep.subr.bf16.mxu0 0
    %684 = vmatpush1.bf16.msra.mxu0 0
    %685 = vmatprep.subr.bf16.mxu0 0
    %686 = vmatpush1.bf16.msra.mxu0 0
    %687 = vmatprep.subr.bf16.mxu0 0
    %688 = vmatpush1.bf16.msra.mxu0 0
    %689 = vmatprep.subr.bf16.mxu0 0
    %690 = vmatpush1.bf16.msra.mxu0 0
    %691 = vmatprep.subr.bf16.mxu0 0
    %692 = vmatpush1.bf16.msra.mxu0 0
    %693 = vmatprep.subr.bf16.mxu0 0
    %694 = vmatpush1.bf16.msra.mxu0 0
    %695 = vmatprep.subr.bf16.mxu0 0
    %696 = vmatpush1.bf16.msra.mxu0 0
    %697 = vmatprep.subr.bf16.mxu0 0
    %698 = vmatpush1.bf16.msra.mxu0 0
    %699 = vmatprep.subr.bf16.mxu0 0
    %700 = vmatpush1.bf16.msra.mxu0 0
    %701 = vmatprep.subr.bf16.mxu0 0
    %702 = vmatpush1.bf16.msra.mxu0 0
    %703 = vmatprep.mubr.bf16.mxu0 0
    %704 = vmatmul.mubr.bf16.gmra.mrb[0].mxu0 %v666
    %v705 = vpop.f32.mrb[0].mxu0
    %v706 = vadd.f32 0.0, %v705
    %v707 = vpop.f32.mrb[0].mxu0
    %v708 = vpop.f32.mrb[0].mxu0
    %v709 = vpop.f32.mrb[0].mxu0
    %710 = vdwg.mxu0
    %712 = vrot.lane.b32.xlu0 %v312, 120
    %v713 = vpop.permute.xlu0 %712
    %v715 = vsel %vm318, %v661, 0
    %v718 = vsel %vm442, %v713, 0
    %720 = vmatprep.subr.bf16.mxu0 0
    %721 = vmatpush1.bf16.msra.mxu0 %v718
    %722 = vmatprep.subr.bf16.mxu0 0
    %723 = vmatpush1.bf16.msra.mxu0 0
    %724 = vmatprep.subr.bf16.mxu0 0
    %725 = vmatpush1.bf16.msra.mxu0 0
    %726 = vmatprep.subr.bf16.mxu0 0
    %727 = vmatpush1.bf16.msra.mxu0 0
    %728 = vmatprep.subr.bf16.mxu0 0
    %729 = vmatpush1.bf16.msra.mxu0 0
    %730 = vmatprep.subr.bf16.mxu0 0
    %731 = vmatpush1.bf16.msra.mxu0 0
    %732 = vmatprep.subr.bf16.mxu0 0
    %733 = vmatpush1.bf16.msra.mxu0 0
    %734 = vmatprep.subr.bf16.mxu0 0
    %735 = vmatpush1.bf16.msra.mxu0 0
    %736 = vmatprep.subr.bf16.mxu0 0
    %737 = vmatpush1.bf16.msra.mxu0 0
    %738 = vmatprep.subr.bf16.mxu0 0
    %739 = vmatpush1.bf16.msra.mxu0 0
    %740 = vmatprep.subr.bf16.mxu0 0
    %741 = vmatpush1.bf16.msra.mxu0 0
    %742 = vmatprep.subr.bf16.mxu0 0
    %743 = vmatpush1.bf16.msra.mxu0 0
    %744 = vmatprep.subr.bf16.mxu0 0
    %745 = vmatpush1.bf16.msra.mxu0 0
    %746 = vmatprep.subr.bf16.mxu0 0
    %747 = vmatpush1.bf16.msra.mxu0 0
    %748 = vmatprep.subr.bf16.mxu0 0
    %749 = vmatpush1.bf16.msra.mxu0 0
    %750 = vmatprep.subr.bf16.mxu0 0
    %751 = vmatpush1.bf16.msra.mxu0 0
    %752 = vmatprep.mubr.bf16.mxu0 0
    %753 = vmatmul.mubr.bf16.gmra.mrb[0].mxu0 %v715
    %v754 = vpop.f32.mrb[0].mxu0
    %v755 = vadd.f32 0.0, %v754
    %v756 = vpop.f32.mrb[0].mxu0
    %v757 = vpop.f32.mrb[0].mxu0
    %v758 = vpop.f32.mrb[0].mxu0
    %759 = vdwg.mxu0
    %760 = vrot.lane.b32.xlu0 %v193, 112
    %v761 = vpop.permute.xlu0 %760
    %762 = vrot.lane.b32.xlu0 %v252, 112
    %v763 = vpop.permute.xlu0 %762
    %v765 = vsel %vm318, %v761, 0
    %v768 = vsel %vm318, %v763, 0
    %770 = vmatprep.subr.bf16.mxu0 0
    %771 = vmatpush1.bf16.xpose.msra.mxu0 %v768
    %772 = vmatprep.subr.bf16.mxu0 0
    %773 = vmatpush1.bf16.xpose.msra.mxu0 0
    %774 = vmatprep.subr.bf16.mxu0 0
    %775 = vmatpush1.bf16.xpose.msra.mxu0 0
    %776 = vmatprep.subr.bf16.mxu0 0
    %777 = vmatpush1.bf16.xpose.msra.mxu0 0
    %778 = vmatprep.subr.bf16.mxu0 0
    %779 = vmatpush1.bf16.xpose.msra.mxu0 0
    %780 = vmatprep.subr.bf16.mxu0 0
    %781 = vmatpush1.bf16.xpose.msra.mxu0 0
    %782 = vmatprep.subr.bf16.mxu0 0
    %783 = vmatpush1.bf16.xpose.msra.mxu0 0
    %784 = vmatprep.subr.bf16.mxu0 0
    %785 = vmatpush1.bf16.xpose.msra.mxu0 0
    %786 = vmatprep.subr.bf16.mxu0 0
    %787 = vmatpush1.bf16.xpose.msra.mxu0 0
    %788 = vmatprep.subr.bf16.mxu0 0
    %789 = vmatpush1.bf16.xpose.msra.mxu0 0
    %790 = vmatprep.subr.bf16.mxu0 0
    %791 = vmatpush1.bf16.xpose.msra.mxu0 0
    %792 = vmatprep.subr.bf16.mxu0 0
    %793 = vmatpush1.bf16.xpose.msra.mxu0 0
    %794 = vmatprep.subr.bf16.mxu0 0
    %795 = vmatpush1.bf16.xpose.msra.mxu0 0
    %796 = vmatprep.subr.bf16.mxu0 0
    %797 = vmatpush1.bf16.xpose.msra.mxu0 0
    %798 = vmatprep.subr.bf16.mxu0 0
    %799 = vmatpush1.bf16.xpose.msra.mxu0 0
    %800 = vmatprep.subr.bf16.mxu0 0
    %801 = vmatpush1.bf16.xpose.msra.mxu0 0
    %802 = vmatprep.mubr.bf16.mxu0 0
    %803 = vmatmul.mubr.bf16.gmra.mrb[0].mxu0 %v765
    %v804 = vpop.f32.mrb[0].mxu0
    %v805 = vadd.f32 0.0, %v804
    %v806 = vpop.f32.mrb[0].mxu0
    %v807 = vpop.f32.mrb[0].mxu0
    %v808 = vpop.f32.mrb[0].mxu0
    %809 = vdwg.mxu0
    %810 = vrot.lane.b32.xlu0 %v194, 112
    %v811 = vpop.permute.xlu0 %810
    %812 = vrot.lane.b32.xlu0 %v253, 112
    %v813 = vpop.permute.xlu0 %812
    %v815 = vsel %vm318, %v811, 0
    %v818 = vsel %vm318, %v813, 0
    %820 = vmatprep.subr.bf16.mxu0 0
    %821 = vmatpush1.bf16.xpose.msra.mxu0 %v818
    %822 = vmatprep.subr.bf16.mxu0 0
    %823 = vmatpush1.bf16.xpose.msra.mxu0 0
    %824 = vmatprep.subr.bf16.mxu0 0
    %825 = vmatpush1.bf16.xpose.msra.mxu0 0
    %826 = vmatprep.subr.bf16.mxu0 0
    %827 = vmatpush1.bf16.xpose.msra.mxu0 0
    %828 = vmatprep.subr.bf16.mxu0 0
    %829 = vmatpush1.bf16.xpose.msra.mxu0 0
    %830 = vmatprep.subr.bf16.mxu0 0
    %831 = vmatpush1.bf16.xpose.msra.mxu0 0
    %832 = vmatprep.subr.bf16.mxu0 0
    %833 = vmatpush1.bf16.xpose.msra.mxu0 0
    %834 = vmatprep.subr.bf16.mxu0 0
    %835 = vmatpush1.bf16.xpose.msra.mxu0 0
    %836 = vmatprep.subr.bf16.mxu0 0
    %837 = vmatpush1.bf16.xpose.msra.mxu0 0
    %838 = vmatprep.subr.bf16.mxu0 0
    %839 = vmatpush1.bf16.xpose.msra.mxu0 0
    %840 = vmatprep.subr.bf16.mxu0 0
    %841 = vmatpush1.bf16.xpose.msra.mxu0 0
    %842 = vmatprep.subr.bf16.mxu0 0
    %843 = vmatpush1.bf16.xpose.msra.mxu0 0
    %844 = vmatprep.subr.bf16.mxu0 0
    %845 = vmatpush1.bf16.xpose.msra.mxu0 0
    %846 = vmatprep.subr.bf16.mxu0 0
    %847 = vmatpush1.bf16.xpose.msra.mxu0 0
    %848 = vmatprep.subr.bf16.mxu0 0
    %849 = vmatpush1.bf16.xpose.msra.mxu0 0
    %850 = vmatprep.subr.bf16.mxu0 0
    %851 = vmatpush1.bf16.xpose.msra.mxu0 0
    %852 = vmatprep.mubr.bf16.mxu0 0
    %853 = vmatmul.mubr.bf16.gmra.mrb[0].mxu0 %v815
    %v854 = vpop.f32.mrb[0].mxu0
    %v855 = vadd.f32 0.0, %v854
    %v856 = vpop.f32.mrb[0].mxu0
    %v857 = vpop.f32.mrb[0].mxu0
    %v858 = vpop.f32.mrb[0].mxu0
    %859 = vdwg.mxu0
    %v860 = vsel %vm412, %v805, -1e+30
    %v861 = vsel %vm412, %v855, -1e+30
    %v862 = vsel %vm318, %v860, -inf
    %863 = vmax.xlane.f32.xlu0 %v862
    %v864 = vpop.xlane.xlu0 %863
    %v865 = vsel %vm318, %v861, -inf
    %866 = vmax.xlane.f32.xlu0 %v865
    %v867 = vpop.xlane.xlu0 %866
    %v868 = vsub.f32 %v860, %v864
    %v869 = vsub.f32 %v861, %v867
    %v870 = vmul.f32 %v868, 1.442695
    %v871 = vpow.pop %v870
    %v872 = vmul.f32 %v869, 1.442695
    %v873 = vpow.pop %v872
    %v874 = vsel %vm318, %v871, 0.0
    %875 = vadd.xlane.f32.xlu0 %v874
    %v876 = vpop.xlane.xlu0 %875
    %v877 = vsel %vm318, %v873, 0.0
    %878 = vadd.xlane.f32.xlu0 %v877
    %v879 = vpop.xlane.xlu0 %878
    %v880 = vrcp.pop %v876
    %v881 = vmul.f32 %v871, %v880
    %v882 = vrcp.pop %v879
    %v883 = vmul.f32 %v873, %v882
    %v884 = vpack.c.bf16 %v881, %v881
    %v885 = vpack.c.bf16 %v883, %v883
    %886 = vrot.lane.b32.xlu0 %v311, 112
    %v887 = vpop.permute.xlu0 %886
    %v889 = vsel %vm318, %v884, 0
    %v892 = vsel %vm442, %v887, 0
    %894 = vmatprep.subr.bf16.mxu0 0
    %895 = vmatpush1.bf16.msra.mxu0 %v892
    %896 = vmatprep.subr.bf16.mxu0 0
    %897 = vmatpush1.bf16.msra.mxu0 0
    %898 = vmatprep.subr.bf16.mxu0 0
    %899 = vmatpush1.bf16.msra.mxu0 0
    %900 = vmatprep.subr.bf16.mxu0 0
    %901 = vmatpush1.bf16.msra.mxu0 0
    %902 = vmatprep.subr.bf16.mxu0 0
    %903 = vmatpush1.bf16.msra.mxu0 0
    %904 = vmatprep.subr.bf16.mxu0 0
    %905 = vmatpush1.bf16.msra.mxu0 0
    %906 = vmatprep.subr.bf16.mxu0 0
    %907 = vmatpush1.bf16.msra.mxu0 0
    %908 = vmatprep.subr.bf16.mxu0 0
    %909 = vmatpush1.bf16.msra.mxu0 0
    %910 = vmatprep.subr.bf16.mxu0 0
    %911 = vmatpush1.bf16.msra.mxu0 0
    %912 = vmatprep.subr.bf16.mxu0 0
    %913 = vmatpush1.bf16.msra.mxu0 0
    %914 = vmatprep.subr.bf16.mxu0 0
    %915 = vmatpush1.bf16.msra.mxu0 0
    %916 = vmatprep.subr.bf16.mxu0 0
    %917 = vmatpush1.bf16.msra.mxu0 0
    %918 = vmatprep.subr.bf16.mxu0 0
    %919 = vmatpush1.bf16.msra.mxu0 0
    %920 = vmatprep.subr.bf16.mxu0 0
    %921 = vmatpush1.bf16.msra.mxu0 0
    %922 = vmatprep.subr.bf16.mxu0 0
    %923 = vmatpush1.bf16.msra.mxu0 0
    %924 = vmatprep.subr.bf16.mxu0 0
    %925 = vmatpush1.bf16.msra.mxu0 0
    %926 = vmatprep.mubr.bf16.mxu0 0
    %927 = vmatmul.mubr.bf16.gmra.mrb[0].mxu0 %v889
    %v928 = vpop.f32.mrb[0].mxu0
    %v929 = vadd.f32 0.0, %v928
    %v930 = vpop.f32.mrb[0].mxu0
    %v931 = vpop.f32.mrb[0].mxu0
    %v932 = vpop.f32.mrb[0].mxu0
    %933 = vdwg.mxu0
    %934 = vrot.lane.b32.xlu0 %v312, 112
    %v935 = vpop.permute.xlu0 %934
    %v937 = vsel %vm318, %v885, 0
    %v940 = vsel %vm442, %v935, 0
    %942 = vmatprep.subr.bf16.mxu0 0
    %943 = vmatpush1.bf16.msra.mxu0 %v940
    %944 = vmatprep.subr.bf16.mxu0 0
    %945 = vmatpush1.bf16.msra.mxu0 0
    %946 = vmatprep.subr.bf16.mxu0 0
    %947 = vmatpush1.bf16.msra.mxu0 0
    %948 = vmatprep.subr.bf16.mxu0 0
    %949 = vmatpush1.bf16.msra.mxu0 0
    %950 = vmatprep.subr.bf16.mxu0 0
    %951 = vmatpush1.bf16.msra.mxu0 0
    %952 = vmatprep.subr.bf16.mxu0 0
    %953 = vmatpush1.bf16.msra.mxu0 0
    %954 = vmatprep.subr.bf16.mxu0 0
    %955 = vmatpush1.bf16.msra.mxu0 0
    %956 = vmatprep.subr.bf16.mxu0 0
    %957 = vmatpush1.bf16.msra.mxu0 0
    %958 = vmatprep.subr.bf16.mxu0 0
    %959 = vmatpush1.bf16.msra.mxu0 0
    %960 = vmatprep.subr.bf16.mxu0 0
    %961 = vmatpush1.bf16.msra.mxu0 0
    %962 = vmatprep.subr.bf16.mxu0 0
    %963 = vmatpush1.bf16.msra.mxu0 0
    %964 = vmatprep.subr.bf16.mxu0 0
    %965 = vmatpush1.bf16.msra.mxu0 0
    %966 = vmatprep.subr.bf16.mxu0 0
    %967 = vmatpush1.bf16.msra.mxu0 0
    %968 = vmatprep.subr.bf16.mxu0 0
    %969 = vmatpush1.bf16.msra.mxu0 0
    %970 = vmatprep.subr.bf16.mxu0 0
    %971 = vmatpush1.bf16.msra.mxu0 0
    %972 = vmatprep.subr.bf16.mxu0 0
    %973 = vmatpush1.bf16.msra.mxu0 0
    %974 = vmatprep.mubr.bf16.mxu0 0
    %975 = vmatmul.mubr.bf16.gmra.mrb[0].mxu0 %v937
    %v976 = vpop.f32.mrb[0].mxu0
    %v977 = vadd.f32 0.0, %v976
    %v978 = vpop.f32.mrb[0].mxu0
    %v979 = vpop.f32.mrb[0].mxu0
    %v980 = vpop.f32.mrb[0].mxu0
    %981 = vdwg.mxu0
    %982 = vrot.lane.b32.xlu0 %v193, 104
    %v983 = vpop.permute.xlu0 %982
    %984 = vrot.lane.b32.xlu0 %v252, 104
    %v985 = vpop.permute.xlu0 %984
    %v987 = vsel %vm318, %v983, 0
    %v990 = vsel %vm318, %v985, 0
    %992 = vmatprep.subr.bf16.mxu0 0
    %993 = vmatpush1.bf16.xpose.msra.mxu0 %v990
    %994 = vmatprep.subr.bf16.mxu0 0
    %995 = vmatpush1.bf16.xpose.msra.mxu0 0
    %996 = vmatprep.subr.bf16.mxu0 0
    %997 = vmatpush1.bf16.xpose.msra.mxu0 0
    %998 = vmatprep.subr.bf16.mxu0 0
    %999 = vmatpush1.bf16.xpose.msra.mxu0 0
    %1000 = vmatprep.subr.bf16.mxu0 0
    %1001 = vmatpush1.bf16.xpose.msra.mxu0 0
    %1002 = vmatprep.subr.bf16.mxu0 0
    %1003 = vmatpush1.bf16.xpose.msra.mxu0 0
    %1004 = vmatprep.subr.bf16.mxu0 0
    %1005 = vmatpush1.bf16.xpose.msra.mxu0 0
    %1006 = vmatprep.subr.bf16.mxu0 0
    %1007 = vmatpush1.bf16.xpose.msra.mxu0 0
    %1008 = vmatprep.subr.bf16.mxu0 0
    %1009 = vmatpush1.bf16.xpose.msra.mxu0 0
    %1010 = vmatprep.subr.bf16.mxu0 0
    %1011 = vmatpush1.bf16.xpose.msra.mxu0 0
    %1012 = vmatprep.subr.bf16.mxu0 0
    %1013 = vmatpush1.bf16.xpose.msra.mxu0 0
    %1014 = vmatprep.subr.bf16.mxu0 0
    %1015 = vmatpush1.bf16.xpose.msra.mxu0 0
    %1016 = vmatprep.subr.bf16.mxu0 0
    %1017 = vmatpush1.bf16.xpose.msra.mxu0 0
    %1018 = vmatprep.subr.bf16.mxu0 0
    %1019 = vmatpush1.bf16.xpose.msra.mxu0 0
    %1020 = vmatprep.subr.bf16.mxu0 0
    %1021 = vmatpush1.bf16.xpose.msra.mxu0 0
    %1022 = vmatprep.subr.bf16.mxu0 0
    %1023 = vmatpush1.bf16.xpose.msra.mxu0 0
    %1024 = vmatprep.mubr.bf16.mxu0 0
    %1025 = vmatmul.mubr.bf16.gmra.mrb[0].mxu0 %v987
    %v1026 = vpop.f32.mrb[0].mxu0
    %v1027 = vadd.f32 0.0, %v1026
    %v1028 = vpop.f32.mrb[0].mxu0
    %v1029 = vpop.f32.mrb[0].mxu0
    %v1030 = vpop.f32.mrb[0].mxu0
    %1031 = vdwg.mxu0
    %1032 = vrot.lane.b32.xlu0 %v194, 104
    %v1033 = vpop.permute.xlu0 %1032
    %1034 = vrot.lane.b32.xlu0 %v253, 104
    %v1035 = vpop.permute.xlu0 %1034
    %v1037 = vsel %vm318, %v1033, 0
    %v1040 = vsel %vm318, %v1035, 0
    %1042 = vmatprep.subr.bf16.mxu0 0
    %1043 = vmatpush1.bf16.xpose.msra.mxu0 %v1040
    %1044 = vmatprep.subr.bf16.mxu0 0
    %1045 = vmatpush1.bf16.xpose.msra.mxu0 0
    %1046 = vmatprep.subr.bf16.mxu0 0
    %1047 = vmatpush1.bf16.xpose.msra.mxu0 0
    %1048 = vmatprep.subr.bf16.mxu0 0
    %1049 = vmatpush1.bf16.xpose.msra.mxu0 0
    %1050 = vmatprep.subr.bf16.mxu0 0
    %1051 = vmatpush1.bf16.xpose.msra.mxu0 0
    %1052 = vmatprep.subr.bf16.mxu0 0
    %1053 = vmatpush1.bf16.xpose.msra.mxu0 0
    %1054 = vmatprep.subr.bf16.mxu0 0
    %1055 = vmatpush1.bf16.xpose.msra.mxu0 0
    %1056 = vmatprep.subr.bf16.mxu0 0
    %1057 = vmatpush1.bf16.xpose.msra.mxu0 0
    %1058 = vmatprep.subr.bf16.mxu0 0
    %1059 = vmatpush1.bf16.xpose.msra.mxu0 0
    %1060 = vmatprep.subr.bf16.mxu0 0
    %1061 = vmatpush1.bf16.xpose.msra.mxu0 0
    %1062 = vmatprep.subr.bf16.mxu0 0
    %1063 = vmatpush1.bf16.xpose.msra.mxu0 0
    %1064 = vmatprep.subr.bf16.mxu0 0
    %1065 = vmatpush1.bf16.xpose.msra.mxu0 0
    %1066 = vmatprep.subr.bf16.mxu0 0
    %1067 = vmatpush1.bf16.xpose.msra.mxu0 0
    %1068 = vmatprep.subr.bf16.mxu0 0
    %1069 = vmatpush1.bf16.xpose.msra.mxu0 0
    %1070 = vmatprep.subr.bf16.mxu0 0
    %1071 = vmatpush1.bf16.xpose.msra.mxu0 0
    %1072 = vmatprep.subr.bf16.mxu0 0
    %1073 = vmatpush1.bf16.xpose.msra.mxu0 0
    %1074 = vmatprep.mubr.bf16.mxu0 0
    %1075 = vmatmul.mubr.bf16.gmra.mrb[0].mxu0 %v1037
    %v1076 = vpop.f32.mrb[0].mxu0
    %v1077 = vadd.f32 0.0, %v1076
    %v1078 = vpop.f32.mrb[0].mxu0
    %v1079 = vpop.f32.mrb[0].mxu0
    %v1080 = vpop.f32.mrb[0].mxu0
    %1081 = vdwg.mxu0
    %v1082 = vsel %vm412, %v1027, -1e+30
    %v1083 = vsel %vm412, %v1077, -1e+30
    %v1084 = vsel %vm318, %v1082, -inf
    %1085 = vmax.xlane.f32.xlu0 %v1084
    %v1086 = vpop.xlane.xlu0 %1085
    %v1087 = vsel %vm318, %v1083, -inf
    %1088 = vmax.xlane.f32.xlu0 %v1087
    %v1089 = vpop.xlane.xlu0 %1088
    %v1090 = vsub.f32 %v1082, %v1086
    %v1091 = vsub.f32 %v1083, %v1089
    %v1092 = vmul.f32 %v1090, 1.442695
    %v1093 = vpow.pop %v1092
    %v1094 = vmul.f32 %v1091, 1.442695
    %v1095 = vpow.pop %v1094
    %v1096 = vsel %vm318, %v1093, 0.0
    %1097 = vadd.xlane.f32.xlu0 %v1096
    %v1098 = vpop.xlane.xlu0 %1097
    %v1099 = vsel %vm318, %v1095, 0.0
    %1100 = vadd.xlane.f32.xlu0 %v1099
    %v1101 = vpop.xlane.xlu0 %1100
    %v1102 = vrcp.pop %v1098
    %v1103 = vmul.f32 %v1093, %v1102
    %v1104 = vrcp.pop %v1101
    %v1105 = vmul.f32 %v1095, %v1104
    %v1106 = vpack.c.bf16 %v1103, %v1103
    %v1107 = vpack.c.bf16 %v1105, %v1105
    %1108 = vrot.lane.b32.xlu0 %v311, 104
    %v1109 = vpop.permute.xlu0 %1108
    %v1111 = vsel %vm318, %v1106, 0
    %v1114 = vsel %vm442, %v1109, 0
    %1116 = vmatprep.subr.bf16.mxu0 0
    %1117 = vmatpush1.bf16.msra.mxu0 %v1114
    %1118 = vmatprep.subr.bf16.mxu0 0
    %1119 = vmatpush1.bf16.msra.mxu0 0
    %1120 = vmatprep.subr.bf16.mxu0 0
    %1121 = vmatpush1.bf16.msra.mxu0 0
    %1122 = vmatprep.subr.bf16.mxu0 0
    %1123 = vmatpush1.bf16.msra.mxu0 0
    %1124 = vmatprep.subr.bf16.mxu0 0
    %1125 = vmatpush1.bf16.msra.mxu0 0
    %1126 = vmatprep.subr.bf16.mxu0 0
    %1127 = vmatpush1.bf16.msra.mxu0 0
    %1128 = vmatprep.subr.bf16.mxu0 0
    %1129 = vmatpush1.bf16.msra.mxu0 0
    %1130 = vmatprep.subr.bf16.mxu0 0
    %1131 = vmatpush1.bf16.msra.mxu0 0
    %1132 = vmatprep.subr.bf16.mxu0 0
    %1133 = vmatpush1.bf16.msra.mxu0 0
    %1134 = vmatprep.subr.bf16.mxu0 0
    %1135 = vmatpush1.bf16.msra.mxu0 0
    %1136 = vmatprep.subr.bf16.mxu0 0
    %1137 = vmatpush1.bf16.msra.mxu0 0
    %1138 = vmatprep.subr.bf16.mxu0 0
    %1139 = vmatpush1.bf16.msra.mxu0 0
    %1140 = vmatprep.subr.bf16.mxu0 0
    %1141 = vmatpush1.bf16.msra.mxu0 0
    %1142 = vmatprep.subr.bf16.mxu0 0
    %1143 = vmatpush1.bf16.msra.mxu0 0
    %1144 = vmatprep.subr.bf16.mxu0 0
    %1145 = vmatpush1.bf16.msra.mxu0 0
    %1146 = vmatprep.subr.bf16.mxu0 0
    %1147 = vmatpush1.bf16.msra.mxu0 0
    %1148 = vmatprep.mubr.bf16.mxu0 0
    %1149 = vmatmul.mubr.bf16.gmra.mrb[0].mxu0 %v1111
    %v1150 = vpop.f32.mrb[0].mxu0
    %v1151 = vadd.f32 0.0, %v1150
    %v1152 = vpop.f32.mrb[0].mxu0
    %v1153 = vpop.f32.mrb[0].mxu0
    %v1154 = vpop.f32.mrb[0].mxu0
    %1155 = vdwg.mxu0
    %1156 = vrot.lane.b32.xlu0 %v312, 104
    %v1157 = vpop.permute.xlu0 %1156
    %v1159 = vsel %vm318, %v1107, 0
    %v1162 = vsel %vm442, %v1157, 0
    %1164 = vmatprep.subr.bf16.mxu0 0
    %1165 = vmatpush1.bf16.msra.mxu0 %v1162
    %1166 = vmatprep.subr.bf16.mxu0 0
    %1167 = vmatpush1.bf16.msra.mxu0 0
    %1168 = vmatprep.subr.bf16.mxu0 0
    %1169 = vmatpush1.bf16.msra.mxu0 0
    %1170 = vmatprep.subr.bf16.mxu0 0
    %1171 = vmatpush1.bf16.msra.mxu0 0
    %1172 = vmatprep.subr.bf16.mxu0 0
    %1173 = vmatpush1.bf16.msra.mxu0 0
    %1174 = vmatprep.subr.bf16.mxu0 0
    %1175 = vmatpush1.bf16.msra.mxu0 0
    %1176 = vmatprep.subr.bf16.mxu0 0
    %1177 = vmatpush1.bf16.msra.mxu0 0
    %1178 = vmatprep.subr.bf16.mxu0 0
    %1179 = vmatpush1.bf16.msra.mxu0 0
    %1180 = vmatprep.subr.bf16.mxu0 0
    %1181 = vmatpush1.bf16.msra.mxu0 0
    %1182 = vmatprep.subr.bf16.mxu0 0
    %1183 = vmatpush1.bf16.msra.mxu0 0
    %1184 = vmatprep.subr.bf16.mxu0 0
    %1185 = vmatpush1.bf16.msra.mxu0 0
    %1186 = vmatprep.subr.bf16.mxu0 0
    %1187 = vmatpush1.bf16.msra.mxu0 0
    %1188 = vmatprep.subr.bf16.mxu0 0
    %1189 = vmatpush1.bf16.msra.mxu0 0
    %1190 = vmatprep.subr.bf16.mxu0 0
    %1191 = vmatpush1.bf16.msra.mxu0 0
    %1192 = vmatprep.subr.bf16.mxu0 0
    %1193 = vmatpush1.bf16.msra.mxu0 0
    %1194 = vmatprep.subr.bf16.mxu0 0
    %1195 = vmatpush1.bf16.msra.mxu0 0
    %1196 = vmatprep.mubr.bf16.mxu0 0
    %1197 = vmatmul.mubr.bf16.gmra.mrb[0].mxu0 %v1159
    %v1198 = vpop.f32.mrb[0].mxu0
    %v1199 = vadd.f32 0.0, %v1198
    %v1200 = vpop.f32.mrb[0].mxu0
    %v1201 = vpop.f32.mrb[0].mxu0
    %v1202 = vpop.f32.mrb[0].mxu0
    %1203 = vdwg.mxu0
    %1206 = vrot.lane.b32.xlu0 %v706, 8
    %v1207 = vpop.permute.xlu0 %1206
    %1208 = vrot.lane.b32.xlu0 %v755, 8
    %v1209 = vpop.permute.xlu0 %1208
    %1214 = vrot.lane.b32.xlu0 %v929, 16
    %v1215 = vpop.permute.xlu0 %1214
    %1216 = vrot.lane.b32.xlu0 %v977, 16
    %v1217 = vpop.permute.xlu0 %1216
    %1222 = vrot.lane.b32.xlu0 %v1151, 24
    %v1223 = vpop.permute.xlu0 %1222
    %1224 = vrot.lane.b32.xlu0 %v1199, 24
    %v1225 = vpop.permute.xlu0 %1224
    %v1228 = vsel %vm318, %v481, %v1207
    %v1229 = vsel %vm318, %v527, %v1209
    %vm1230 = vcmask 130048
    %v1231 = vsel %vm1230, %v1228, %v1215
    %v1232 = vsel %vm1230, %v1229, %v1217
    %vm1233 = vcmask 195584
    %v1234 = vsel %vm1233, %v1231, %v1223
    %v1235 = vsel %vm1233, %v1232, %v1225
    %v1236 = vpack.c.bf16 %v1235, %v1234
    %v1237 = vld [vmem:[%s6] sm:$0xf]
    %v1238 = vld [vmem:[%s6 + $0x4] sm:$0xf]
    %v1239 = vld [vmem:[%s6 + $0x8] sm:$0xf]
    %v1240 = vld [vmem:[%s6 + $0xc] sm:$0xf]
    %v1241 = vld [vmem:[#allocation2] sm:$0x1]
    %v1243 = vlaneseq
    %v1244 = vshrl.u32 %v1243, 7
    %v1245 = vsub.s32 0, %v1244
    %v1246 = vrot.slane %v1241, %v1245
    %v1252 = vunpack.c.l.b16 %v1237
    %v1253 = vunpack.c.l.b16 %v1238
    %v1254 = vunpack.c.l.b16 %v1239
    %v1255 = vunpack.c.l.b16 %v1240
    %v1256 = vpack.c.b16 %v1253, %v1252
    %v1257 = vpack.c.b16 %v1255, %v1254
    %v1261 = vsel %vm88, %v1236, 0
    %1263 = vmatprep.subr.bf16.mxu0 0
    %1264 = vmatpush1.bf16.msra.mxu0 %v1256
    %1265 = vmatprep.subr.bf16.mxu0 0
    %1266 = vmatpush1.bf16.msra.mxu0 %v1257
    %1267 = vmatprep.subr.bf16.mxu0 0
    %1268 = vmatpush1.bf16.msra.mxu0 0
    %1269 = vmatprep.subr.bf16.mxu0 0
    %1270 = vmatpush1.bf16.msra.mxu0 0
    %1271 = vmatprep.subr.bf16.mxu0 0
    %1272 = vmatpush1.bf16.msra.mxu0 0
    %1273 = vmatprep.subr.bf16.mxu0 0
    %1274 = vmatpush1.bf16.msra.mxu0 0
    %1275 = vmatprep.subr.bf16.mxu0 0
    %1276 = vmatpush1.bf16.msra.mxu0 0
    %1277 = vmatprep.subr.bf16.mxu0 0
    %1278 = vmatpush1.bf16.msra.mxu0 0
    %1279 = vmatprep.subr.bf16.mxu0 0
    %1280 = vmatpush1.bf16.msra.mxu0 0
    %1281 = vmatprep.subr.bf16.mxu0 0
    %1282 = vmatpush1.bf16.msra.mxu0 0
    %1283 = vmatprep.subr.bf16.mxu0 0
    %1284 = vmatpush1.bf16.msra.mxu0 0
    %1285 = vmatprep.subr.bf16.mxu0 0
    %1286 = vmatpush1.bf16.msra.mxu0 0
    %1287 = vmatprep.subr.bf16.mxu0 0
    %1288 = vmatpush1.bf16.msra.mxu0 0
    %1289 = vmatprep.subr.bf16.mxu0 0
    %1290 = vmatpush1.bf16.msra.mxu0 0
    %1291 = vmatprep.subr.bf16.mxu0 0
    %1292 = vmatpush1.bf16.msra.mxu0 0
    %1293 = vmatprep.subr.bf16.mxu0 0
    %1294 = vmatpush1.bf16.msra.mxu0 0
    %1295 = vmatprep.mubr.bf16.mxu0 0
    %1296 = vmatmul.mubr.bf16.gmra.mrb[0].mxu0 %v1261
    %v1297 = vpop.f32.mrb[0].mxu0
    %v1298 = vadd.f32 %v1246, %v1297
    %v1299 = vpop.f32.mrb[0].mxu0
    %v1300 = vpop.f32.mrb[0].mxu0
    %v1301 = vadd.f32 %v1246, %v1300
    %v1302 = vpop.f32.mrb[0].mxu0
    %1303 = vdwg.mxu0
    %v1304 = vadd.f32 %v84, %v1298
    %v1305 = vadd.f32 %v85, %v1301
    %v1306 = vld [vmem:[#allocation5] sm:$0x1]
    %v1307 = vld [vmem:[#allocation7] sm:$0x1]
    %v1308 = vsel %vm88, %v1304, 0.0
    %1309 = vadd.xlane.f32.xlu0 %v1308
    %v1310 = vpop.xlane.xlu0 %1309
    %v1311 = vsel %vm88, %v1305, 0.0
    %1312 = vadd.xlane.f32.xlu0 %v1311
    %v1313 = vpop.xlane.xlu0 %1312
    %v1314 = vmul.f32 %v1310, %v95
    %v1315 = vmul.f32 %v1313, %v95
    %v1316 = vsub.f32 %v1304, %v1314
    %v1317 = vsub.f32 %v1305, %v1315
    %v1318 = vmul.f32 %v1316, %v1316
    %v1319 = vmul.f32 %v1317, %v1317
    %v1320 = vsel %vm88, %v1318, 0.0
    %1321 = vadd.xlane.f32.xlu0 %v1320
    %v1322 = vpop.xlane.xlu0 %1321
    %v1323 = vsel %vm88, %v1319, 0.0
    %1324 = vadd.xlane.f32.xlu0 %v1323
    %v1325 = vpop.xlane.xlu0 %1324
    %v1326 = vmul.f32 %v1322, %v95
    %v1327 = vmul.f32 %v1325, %v95
    %v1328 = vadd.f32 %v1326, 1e-05
    %v1329 = vadd.f32 %v1327, 1e-05
    %v1330 = vrsqrt.pop %v1328
    %v1331 = vrsqrt.pop %v1329
    %v1332 = vmul.f32 %v1316, %v1330
    %v1333 = vmul.f32 %v1317, %v1331
    %v1335 = vlaneseq
    %v1336 = vshrl.u32 %v1335, 7
    %v1337 = vsub.s32 0, %v1336
    %v1338 = vrot.slane %v1306, %v1337
    %v1340 = vmul.f32 %v1332, %v1338
    %v1341 = vmul.f32 %v1333, %v1338
    %v1343 = vlaneseq
    %v1344 = vshrl.u32 %v1343, 7
    %v1345 = vsub.s32 0, %v1344
    %v1346 = vrot.slane %v1307, %v1345
    %v1348 = vadd.f32 %v1340, %v1346
    %v1349 = vadd.f32 %v1341, %v1346
    %v1350 = vpack.c.bf16 %v1349, %v1348
    %v1351 = vld [vmem:[%s10] sm:$0xf]
    %v1352 = vld [vmem:[%s10 + $0x4] sm:$0xf]
    %v1353 = vld [vmem:[%s10 + $0x8] sm:$0xf]
    %v1354 = vld [vmem:[%s10 + $0xc] sm:$0xf]
    %v1355 = vld [vmem:[%s11] sm:$0x1]
    %v1357 = vlaneseq
    %v1358 = vshrl.u32 %v1357, 7
    %v1359 = vsub.s32 0, %v1358
    %v1360 = vrot.slane %v1355, %v1359
    %v1366 = vunpack.c.l.b16 %v1351
    %v1367 = vunpack.c.l.b16 %v1352
    %v1368 = vunpack.c.l.b16 %v1353
    %v1369 = vunpack.c.l.b16 %v1354
    %v1370 = vpack.c.b16 %v1367, %v1366
    %v1371 = vpack.c.b16 %v1369, %v1368
    %v1375 = vsel %vm88, %v1350, 0
    %1377 = vmatprep.subr.bf16.mxu0 0
    %1378 = vmatpush1.bf16.msra.mxu0 %v1370
    %1379 = vmatprep.subr.bf16.mxu0 0
    %1380 = vmatpush1.bf16.msra.mxu0 %v1371
    %1381 = vmatprep.subr.bf16.mxu0 0
    %1382 = vmatpush1.bf16.msra.mxu0 0
    %1383 = vmatprep.subr.bf16.mxu0 0
    %1384 = vmatpush1.bf16.msra.mxu0 0
    %1385 = vmatprep.subr.bf16.mxu0 0
    %1386 = vmatpush1.bf16.msra.mxu0 0
    %1387 = vmatprep.subr.bf16.mxu0 0
    %1388 = vmatpush1.bf16.msra.mxu0 0
    %1389 = vmatprep.subr.bf16.mxu0 0
    %1390 = vmatpush1.bf16.msra.mxu0 0
    %1391 = vmatprep.subr.bf16.mxu0 0
    %1392 = vmatpush1.bf16.msra.mxu0 0
    %1393 = vmatprep.subr.bf16.mxu0 0
    %1394 = vmatpush1.bf16.msra.mxu0 0
    %1395 = vmatprep.subr.bf16.mxu0 0
    %1396 = vmatpush1.bf16.msra.mxu0 0
    %1397 = vmatprep.subr.bf16.mxu0 0
    %1398 = vmatpush1.bf16.msra.mxu0 0
    %1399 = vmatprep.subr.bf16.mxu0 0
    %1400 = vmatpush1.bf16.msra.mxu0 0
    %1401 = vmatprep.subr.bf16.mxu0 0
    %1402 = vmatpush1.bf16.msra.mxu0 0
    %1403 = vmatprep.subr.bf16.mxu0 0
    %1404 = vmatpush1.bf16.msra.mxu0 0
    %1405 = vmatprep.subr.bf16.mxu0 0
    %1406 = vmatpush1.bf16.msra.mxu0 0
    %1407 = vmatprep.subr.bf16.mxu0 0
    %1408 = vmatpush1.bf16.msra.mxu0 0
    %1409 = vmatprep.mubr.bf16.mxu0 0
    %1410 = vmatmul.mubr.bf16.gmra.mrb[0].mxu0 %v1375
    %v1411 = vpop.f32.mrb[0].mxu0
    %v1412 = vadd.f32 %v1360, %v1411
    %v1413 = vpop.f32.mrb[0].mxu0
    %v1414 = vpop.f32.mrb[0].mxu0
    %v1415 = vadd.f32 %v1360, %v1414
    %v1416 = vpop.f32.mrb[0].mxu0
    %1417 = vdwg.mxu0
    %v1418 = vmax.f32 %v1412, 0.0
    %v1419 = vmax.f32 %v1415, 0.0
    %v1420 = vpack.c.bf16 %v1419, %v1418
    %v1421 = vld [vmem:[%s12] sm:$0xf]
    %v1422 = vld [vmem:[%s12 + $0x4] sm:$0xf]
    %v1423 = vld [vmem:[%s12 + $0x8] sm:$0xf]
    %v1424 = vld [vmem:[%s12 + $0xc] sm:$0xf]
    %v1425 = vld [vmem:[%s12 + $0x10] sm:$0xf]
    %v1426 = vld [vmem:[%s12 + $0x14] sm:$0xf]
    %v1427 = vld [vmem:[%s12 + $0x18] sm:$0xf]
    %v1428 = vld [vmem:[%s12 + $0x1c] sm:$0xf]
    %v1429 = vld [vmem:[%s12 + $0x20] sm:$0xf]
    %v1430 = vld [vmem:[%s12 + $0x24] sm:$0xf]
    %v1431 = vld [vmem:[%s12 + $0x28] sm:$0xf]
    %v1432 = vld [vmem:[%s12 + $0x2c] sm:$0xf]
    %v1433 = vld [vmem:[%s12 + $0x30] sm:$0xf]
    %v1434 = vld [vmem:[%s12 + $0x34] sm:$0xf]
    %v1435 = vld [vmem:[%s12 + $0x38] sm:$0xf]
    %v1436 = vld [vmem:[%s12 + $0x3c] sm:$0xf]
    %v1437 = vld [vmem:[%s13] sm:$0x1]
    %v1439 = vlaneseq
    %v1440 = vshrl.u32 %v1439, 7
    %v1441 = vsub.s32 0, %v1440
    %v1442 = vrot.slane %v1437, %v1441
    %v1460 = vunpack.c.l.b16 %v1421
    %v1461 = vunpack.c.l.b16 %v1422
    %v1462 = vunpack.c.l.b16 %v1423
    %v1463 = vunpack.c.l.b16 %v1424
    %v1464 = vunpack.c.l.b16 %v1425
    %v1465 = vunpack.c.l.b16 %v1426
    %v1466 = vunpack.c.l.b16 %v1427
    %v1467 = vunpack.c.l.b16 %v1428
    %v1468 = vunpack.c.l.b16 %v1429
    %v1469 = vunpack.c.l.b16 %v1430
    %v1470 = vunpack.c.l.b16 %v1431
    %v1471 = vunpack.c.l.b16 %v1432
    %v1472 = vunpack.c.l.b16 %v1433
    %v1473 = vunpack.c.l.b16 %v1434
    %v1474 = vunpack.c.l.b16 %v1435
    %v1475 = vunpack.c.l.b16 %v1436
    %v1476 = vpack.c.b16 %v1461, %v1460
    %v1477 = vpack.c.b16 %v1463, %v1462
    %v1478 = vpack.c.b16 %v1465, %v1464
    %v1479 = vpack.c.b16 %v1467, %v1466
    %v1480 = vpack.c.b16 %v1469, %v1468
    %v1481 = vpack.c.b16 %v1471, %v1470
    %v1482 = vpack.c.b16 %v1473, %v1472
    %v1483 = vpack.c.b16 %v1475, %v1474
    %1492 = vmatprep.subr.bf16.mxu0 0
    %1493 = vmatpush1.bf16.msra.mxu0 %v1476
    %1494 = vmatprep.subr.bf16.mxu0 0
    %1495 = vmatpush1.bf16.msra.mxu0 %v1477
    %1496 = vmatprep.subr.bf16.mxu0 0
    %1497 = vmatpush1.bf16.msra.mxu0 %v1478
    %1498 = vmatprep.subr.bf16.mxu0 0
    %1499 = vmatpush1.bf16.msra.mxu0 %v1479
    %1500 = vmatprep.subr.bf16.mxu0 0
    %1501 = vmatpush1.bf16.msra.mxu0 %v1480
    %1502 = vmatprep.subr.bf16.mxu0 0
    %1503 = vmatpush1.bf16.msra.mxu0 %v1481
    %1504 = vmatprep.subr.bf16.mxu0 0
    %1505 = vmatpush1.bf16.msra.mxu0 %v1482
    %1506 = vmatprep.subr.bf16.mxu0 0
    %1507 = vmatpush1.bf16.msra.mxu0 %v1483
    %1508 = vmatprep.subr.bf16.mxu0 0
    %1509 = vmatpush1.bf16.msra.mxu0 0
    %1510 = vmatprep.subr.bf16.mxu0 0
    %1511 = vmatpush1.bf16.msra.mxu0 0
    %1512 = vmatprep.subr.bf16.mxu0 0
    %1513 = vmatpush1.bf16.msra.mxu0 0
    %1514 = vmatprep.subr.bf16.mxu0 0
    %1515 = vmatpush1.bf16.msra.mxu0 0
    %1516 = vmatprep.subr.bf16.mxu0 0
    %1517 = vmatpush1.bf16.msra.mxu0 0
    %1518 = vmatprep.subr.bf16.mxu0 0
    %1519 = vmatpush1.bf16.msra.mxu0 0
    %1520 = vmatprep.subr.bf16.mxu0 0
    %1521 = vmatpush1.bf16.msra.mxu0 0
    %1522 = vmatprep.subr.bf16.mxu0 0
    %1523 = vmatpush1.bf16.msra.mxu0 0
    %1524 = vmatprep.mubr.bf16.mxu0 0
    %1525 = vmatmul.mubr.bf16.gmra.mrb[0].mxu0 %v1420
    %v1526 = vpop.f32.mrb[0].mxu0
    %v1527 = vadd.f32 %v1442, %v1526
    %v1528 = vpop.f32.mrb[0].mxu0
    %v1529 = vpop.f32.mrb[0].mxu0
    %v1530 = vadd.f32 %v1442, %v1529
    %v1531 = vpop.f32.mrb[0].mxu0
    %1532 = vdwg.mxu0
    %v1533 = vadd.f32 %v1304, %v1527
    %v1534 = vadd.f32 %v1305, %v1530
    %1535 = vst.msk [vmem:[#allocation8] sm:$0xff] %vm88, %v1533
    %1536 = vst.msk [vmem:[#allocation8 + $0x8] sm:$0xff] %vm88, %v1534
    // Predicated region
    $region70: #{tpu_custom_call.1} parent=1 // pred_check
      _
    $region71: #{tpu_custom_call.1} parent=1 // pred_check_branch
      %1538 = sbr.rel (0) target = $region73
    $region72: #{tpu_custom_call.1} parent=1 // pred_region
      %s1540 = ssub.s32 256, 256
      %1541 = vsyncadd [#allocation4], %s1540
      %s1542 = sshll.u32 [#allocation8], 4
      %s1543 = int_to_ptr.vmem [resolvable:$true] %s1542
      %1548 = dma.vmem_to_hbm [thread:$0]  %s1543, 256, %s14, [#allocation4], 128, 128, 8
    $region73: #{tpu_custom_call.1} parent=1 // pred_fallthru
      _
    // Predicated region
    $region74: #{tpu_custom_call.1} parent=1 // pred_check
      _
    $region75: #{tpu_custom_call.1} parent=1 // pred_check_branch
      %1550 = sbr.rel (0) target = $region77
    $region76: #{tpu_custom_call.1} parent=1 // pred_region
      %1551 = dma.done [#allocation4], 256
    $region77: #{tpu_custom_call.1} parent=1 // pred_fallthru
      _
    %1552 = vsyncpa [#allocation3], 1
    %1553 = vsyncpa [#allocation6], 1
    %1554 = vsyncpa [#allocation4], 1

// kernel: tpu_custom_call.1
$region0: #{tpu_custom_call.1}
  #allocation0 [shape = 'u32[]', space=smem, size = 0x4, offset = 0x4, fixed_abs, tag = 'smem constant byte address 0x4 - core index']
  #allocation1 [shape = 'u32[144,128]{1,0:T(1,128)}', space=vmem, size = 0x12000, scoped, tag = 'internal scratch']
  %s0 = inlined_call_operand.vmem [shape: f32[16,32], index: 0, kind: input, shape index: {}]
  %s1 = inlined_call_operand.vmem [shape: f32[1,32], index: 1, kind: input, shape index: {}]
  %s2 = inlined_call_operand.vmem [shape: f32[1,32], index: 2, kind: input, shape index: {}]
  %s3 = inlined_call_operand.vmem [shape: bf16[32,32], index: 3, kind: input, shape index: {}]
  %s4 = inlined_call_operand.vmem [shape: bf16[32,32], index: 4, kind: input, shape index: {}]
  %s5 = inlined_call_operand.vmem [shape: bf16[32,32], index: 5, kind: input, shape index: {}]
  %s6 = inlined_call_operand.vmem [shape: bf16[32,32], index: 6, kind: input, shape index: {}]
  %s7 = inlined_call_operand.hbm [shape: f32[1,32], index: 7, kind: input, shape index: {}]
  %s8 = inlined_call_operand.hbm [shape: f32[1,32], index: 8, kind: input, shape index: {}]
  %s9 = inlined_call_operand.hbm [shape: f32[1,32], index: 9, kind: input, shape index: {}]
  %s10 = inlined_call_operand.vmem [shape: bf16[32,128], index: 10, kind: input, shape index: {}]
  %s11 = inlined_call_operand.vmem [shape: f32[1,128], index: 11, kind: input, shape index: {}]
  %s12 = inlined_call_operand.vmem [shape: bf16[128,32], index: 12, kind: input, shape index: {}]
  %s13 = inlined_call_operand.vmem [shape: f32[1,32], index: 13, kind: input, shape index: {}]
  %s14 = inlined_call_operand.hbm [shape: f32[16,32], index: 14, kind: output, shape index: {}]
  %s15 = sld [smem:[#allocation0]]
  $region78: #{tpu_custom_call.1} parent=0
    _
  %s17 = ssub.s32 1, %s15
  %s18 = scalar_select 0, %s17, %s15
  $region1: #{tpu_custom_call.1} parent=0
    #allocation2 [shape = 'u8[512]{0}', space=vmem, size = 0x400, scoped, tag = 'input window, operand 7, single buffered']
    #allocation3 [shape = 's32[1]{0}', space=sflag, size = 0x4, scoped, tag = 'scoped memory for tpu_custom_call.1']
    #allocation4 [shape = 's32[1]{0}', space=sflag, size = 0x4, scoped, tag = 'scoped memory for tpu_custom_call.1']
    #allocation5 [shape = 'u8[512]{0}', space=vmem, size = 0x400, scoped, tag = 'input window, operand 8, single buffered']
    #allocation6 [shape = 's32[1]{0}', space=sflag, size = 0x4, scoped, tag = 'scoped memory for tpu_custom_call.1']
    #allocation7 [shape = 'u8[512]{0}', space=vmem, size = 0x400, scoped, tag = 'input window, operand 9, single buffered']
    #allocation8 [shape = 'u8[8192]{0}', space=vmem, size = 0x2000, scoped, tag = 'output window, operand 0, single buffered']
    %19 = vsyncpa [#allocation3], 0
    %20 = vsyncpa [#allocation6], 0
    %21 = vsyncpa [#allocation4], 0
    // Predicated region
    $region2: #{tpu_custom_call.1} parent=1 // pred_check
      _
    $region3: #{tpu_custom_call.1} parent=1 // pred_check_branch
      %23 = sbr.rel (0) target = $region5
    $region4: #{tpu_custom_call.1} parent=1 // pred_region
      _
    $region5: #{tpu_custom_call.1} parent=1 // pred_fallthru
      _
    // Predicated region
    $region6: #{tpu_custom_call.1} parent=1 // pred_check
      _
    $region7: #{tpu_custom_call.1} parent=1 // pred_check_branch
      %25 = sbr.rel (0) target = $region9
    $region8: #{tpu_custom_call.1} parent=1 // pred_region
      _
    $region9: #{tpu_custom_call.1} parent=1 // pred_fallthru
      _
    // Predicated region
    $region10: #{tpu_custom_call.1} parent=1 // pred_check
      _
    $region11: #{tpu_custom_call.1} parent=1 // pred_check_branch
      %27 = sbr.rel (0) target = $region13
    $region12: #{tpu_custom_call.1} parent=1 // pred_region
      _
    $region13: #{tpu_custom_call.1} parent=1 // pred_fallthru
      _
    // Predicated region
    $region14: #{tpu_custom_call.1} parent=1 // pred_check
      _
    $region15: #{tpu_custom_call.1} parent=1 // pred_check_branch
      %29 = sbr.rel (0) target = $region17
    $region16: #{tpu_custom_call.1} parent=1 // pred_region
      _
    $region17: #{tpu_custom_call.1} parent=1 // pred_fallthru
      _
    // Predicated region
    $region18: #{tpu_custom_call.1} parent=1 // pred_check
      _
    $region19: #{tpu_custom_call.1} parent=1 // pred_check_branch
      %31 = sbr.rel (0) target = $region21
    $region20: #{tpu_custom_call.1} parent=1 // pred_region
      _
    $region21: #{tpu_custom_call.1} parent=1 // pred_fallthru
      _
    // Predicated region
    $region22: #{tpu_custom_call.1} parent=1 // pred_check
      _
    $region23: #{tpu_custom_call.1} parent=1 // pred_check_branch
      %33 = sbr.rel (0) target = $region25
    $region24: #{tpu_custom_call.1} parent=1 // pred_region
      _
    $region25: #{tpu_custom_call.1} parent=1 // pred_fallthru
      _
    // Predicated region
    $region26: #{tpu_custom_call.1} parent=1 // pred_check
      _
    $region27: #{tpu_custom_call.1} parent=1 // pred_check_branch
      %35 = sbr.rel (0) target = $region29
    $region28: #{tpu_custom_call.1} parent=1 // pred_region
      _
    $region29: #{tpu_custom_call.1} parent=1 // pred_fallthru
      _
    // Predicated region
    $region30: #{tpu_custom_call.1} parent=1 // pred_check
      _
    $region31: #{tpu_custom_call.1} parent=1 // pred_check_branch
      %37 = sbr.rel (0) target = $region33
    $region32: #{tpu_custom_call.1} parent=1 // pred_region
      %s39 = ssub.s32 16, 16
      %40 = vsyncadd [#allocation3], %s39
      %s42 = sshll.u32 [#allocation2], 4
      %s43 = int_to_ptr.vmem [resolvable:$true] %s42
      %45 = dma.hbm_to_vmem [thread:$0]  %s7, 16, %s43, [#allocation3]
    $region33: #{tpu_custom_call.1} parent=1 // pred_fallthru
      _
    // Predicated region
    $region34: #{tpu_custom_call.1} parent=1 // pred_check
      _
    $region35: #{tpu_custom_call.1} parent=1 // pred_check_branch
      %47 = sbr.rel (0) target = $region37
    $region36: #{tpu_custom_call.1} parent=1 // pred_region
      %s49 = ssub.s32 16, 16
      %50 = vsyncadd [#allocation6], %s49
      %s52 = sshll.u32 [#allocation5], 4
      %s53 = int_to_ptr.vmem [resolvable:$true] %s52
      %55 = dma.hbm_to_vmem [thread:$0]  %s8, 16, %s53, [#allocation6]
    $region37: #{tpu_custom_call.1} parent=1 // pred_fallthru
      _
    // Predicated region
    $region38: #{tpu_custom_call.1} parent=1 // pred_check
      _
    $region39: #{tpu_custom_call.1} parent=1 // pred_check_branch
      %57 = sbr.rel (0) target = $region41
    $region40: #{tpu_custom_call.1} parent=1 // pred_region
      %s59 = ssub.s32 16, 16
      %60 = vsyncadd [#allocation6], %s59
      %s62 = sshll.u32 [#allocation7], 4
      %s63 = int_to_ptr.vmem [resolvable:$true] %s62
      %65 = dma.hbm_to_vmem [thread:$0]  %s9, 16, %s63, [#allocation6]
    $region41: #{tpu_custom_call.1} parent=1 // pred_fallthru
      _
    // Predicated region
    $region42: #{tpu_custom_call.1} parent=1 // pred_check
      _
    $region43: #{tpu_custom_call.1} parent=1 // pred_check_branch
      %67 = sbr.rel (0) target = $region45
    $region44: #{tpu_custom_call.1} parent=1 // pred_region
      _
    $region45: #{tpu_custom_call.1} parent=1 // pred_fallthru
      _
    // Predicated region
    $region46: #{tpu_custom_call.1} parent=1 // pred_check
      _
    $region47: #{tpu_custom_call.1} parent=1 // pred_check_branch
      %69 = sbr.rel (0) target = $region49
    $region48: #{tpu_custom_call.1} parent=1 // pred_region
      _
    $region49: #{tpu_custom_call.1} parent=1 // pred_fallthru
      _
    // Predicated region
    $region50: #{tpu_custom_call.1} parent=1 // pred_check
      _
    $region51: #{tpu_custom_call.1} parent=1 // pred_check_branch
      %71 = sbr.rel (0) target = $region53
    $region52: #{tpu_custom_call.1} parent=1 // pred_region
      _
    $region53: #{tpu_custom_call.1} parent=1 // pred_fallthru
      _
    // Predicated region
    $region54: #{tpu_custom_call.1} parent=1 // pred_check
      _
    $region55: #{tpu_custom_call.1} parent=1 // pred_check_branch
      %73 = sbr.rel (0) target = $region57
    $region56: #{tpu_custom_call.1} parent=1 // pred_region
      _
    $region57: #{tpu_custom_call.1} parent=1 // pred_fallthru
      _
    // Predicated region
    $region58: #{tpu_custom_call.1} parent=1 // pred_check
      _
    $region59: #{tpu_custom_call.1} parent=1 // pred_check_branch
      %75 = sbr.rel (0) target = $region61
    $region60: #{tpu_custom_call.1} parent=1 // pred_region
      %76 = dma.done [#allocation3], 16
    $region61: #{tpu_custom_call.1} parent=1 // pred_fallthru
      _
    // Predicated region
    $region62: #{tpu_custom_call.1} parent=1 // pred_check
      _
    $region63: #{tpu_custom_call.1} parent=1 // pred_check_branch
      %78 = sbr.rel (0) target = $region65
    $region64: #{tpu_custom_call.1} parent=1 // pred_region
      %79 = dma.done [#allocation6], 16
    $region65: #{tpu_custom_call.1} parent=1 // pred_fallthru
      _
    // Predicated region
    $region66: #{tpu_custom_call.1} parent=1 // pred_check
      _
    $region67: #{tpu_custom_call.1} parent=1 // pred_check_branch
      %81 = sbr.rel (0) target = $region69
    $region68: #{tpu_custom_call.1} parent=1 // pred_region
      %82 = dma.done [#allocation6], 16
    $region69: #{tpu_custom_call.1} parent=1 // pred_fallthru
      _
    %v84 = vld [vmem:[%s0] sm:$0xff]
    %v85 = vld [vmem:[%s0 + $0x8] sm:$0xff]
    %v86 = vld [vmem:[%s1] sm:$0x1]
    %v87 = vld [vmem:[%s2] sm:$0x1]
    %vm88 = vcmask 261120
    %v89 = vsel %vm88, %v84, 0.0
    %90 = vadd.xlane.f32.xlu0 %v89
    %v91 = vpop.xlane.xlu0 %90
    %v92 = vsel %vm88, %v85, 0.0
    %93 = vadd.xlane.f32.xlu0 %v92
    %v94 = vpop.xlane.xlu0 %93
    %v95 = vrcp.pop 32.0
    %v96 = vmul.f32 %v91, %v95
    %v97 = vmul.f32 %v94, %v95
    %v98 = vsub.f32 %v84, %v96
    %v99 = vsub.f32 %v85, %v97
    %v100 = vmul.f32 %v98, %v98
    %v101 = vmul.f32 %v99, %v99
    %v102 = vsel %vm88, %v100, 0.0
    %103 = vadd.xlane.f32.xlu0 %v102
    %v104 = vpop.xlane.xlu0 %103
    %v105 = vsel %vm88, %v101, 0.0
    %106 = vadd.xlane.f32.xlu0 %v105
    %v107 = vpop.xlane.xlu0 %106
    %v108 = vmul.f32 %v104, %v95
    %v109 = vmul.f32 %v107, %v95
    %v110 = vadd.f32 %v108, 1e-05
    %v111 = vadd.f32 %v109, 1e-05
    %v112 = vrsqrt.pop %v110
    %v113 = vrsqrt.pop %v111
    %v114 = vmul.f32 %v98, %v112
    %v115 = vmul.f32 %v99, %v113
    %v117 = vlaneseq
    %v118 = vshrl.u32 %v117, 7
    %v119 = vsub.s32 0, %v118
    %v120 = vrot.slane %v86, %v119
    %v122 = vmul.f32 %v114, %v120
    %v123 = vmul.f32 %v115, %v120
    %v125 = vlaneseq
    %v126 = vshrl.u32 %v125, 7
    %v127 = vsub.s32 0, %v126
    %v128 = vrot.slane %v87, %v127
    %v130 = vadd.f32 %v122, %v128
    %v131 = vadd.f32 %v123, %v128
    %v132 = vpack.c.bf16 %v131, %v130
    %v133 = vld [vmem:[%s3] sm:$0xf]
    %v134 = vld [vmem:[%s3 + $0x4] sm:$0xf]
    %v135 = vld [vmem:[%s3 + $0x8] sm:$0xf]
    %v136 = vld [vmem:[%s3 + $0xc] sm:$0xf]
    %v141 = vunpack.c.l.b16 %v133
    %v142 = vunpack.c.l.b16 %v134
    %v143 = vunpack.c.l.b16 %v135
    %v144 = vunpack.c.l.b16 %v136
    %v145 = vpack.c.b16 %v142, %v141
    %v146 = vpack.c.b16 %v144, %v143
    %v150 = vsel %vm88, %v132, 0
    %152 = vmatprep.subr.bf16.mxu0 0
    %153 = vmatpush1.bf16.msra.mxu0 %v145
    %154 = vmatprep.subr.bf16.mxu0 0
    %155 = vmatpush1.bf16.msra.mxu0 %v146
    %156 = vmatprep.subr.bf16.mxu0 0
    %157 = vmatpush1.bf16.msra.mxu0 0
    %158 = vmatprep.subr.bf16.mxu0 0
    %159 = vmatpush1.bf16.msra.mxu0 0
    %160 = vmatprep.subr.bf16.mxu0 0
    %161 = vmatpush1.bf16.msra.mxu0 0
    %162 = vmatprep.subr.bf16.mxu0 0
    %163 = vmatpush1.bf16.msra.mxu0 0
    %164 = vmatprep.subr.bf16.mxu0 0
    %165 = vmatpush1.bf16.msra.mxu0 0
    %166 = vmatprep.subr.bf16.mxu0 0
    %167 = vmatpush1.bf16.msra.mxu0 0
    %168 = vmatprep.subr.bf16.mxu0 0
    %169 = vmatpush1.bf16.msra.mxu0 0
    %170 = vmatprep.subr.bf16.mxu0 0
    %171 = vmatpush1.bf16.msra.mxu0 0
    %172 = vmatprep.subr.bf16.mxu0 0
    %173 = vmatpush1.bf16.msra.mxu0 0
    %174 = vmatprep.subr.bf16.mxu0 0
    %175 = vmatpush1.bf16.msra.mxu0 0
    %176 = vmatprep.subr.bf16.mxu0 0
    %177 = vmatpush1.bf16.msra.mxu0 0
    %178 = vmatprep.subr.bf16.mxu0 0
    %179 = vmatpush1.bf16.msra.mxu0 0
    %180 = vmatprep.subr.bf16.mxu0 0
    %181 = vmatpush1.bf16.msra.mxu0 0
    %182 = vmatprep.subr.bf16.mxu0 0
    %183 = vmatpush1.bf16.msra.mxu0 0
    %184 = vmatprep.mubr.bf16.mxu0 0
    %185 = vmatmul.mubr.bf16.gmra.mrb[0].mxu0 %v150
    %v186 = vpop.f32.mrb[0].mxu0
    %v187 = vadd.f32 0.0, %v186
    %v188 = vpop.f32.mrb[0].mxu0
    %v189 = vpop.f32.mrb[0].mxu0
    %v190 = vadd.f32 0.0, %v189
    %v191 = vpop.f32.mrb[0].mxu0
    %192 = vdwg.mxu0
    %v193 = vpack.c.bf16 %v187, %v187
    %v194 = vpack.c.bf16 %v190, %v190
    %v195 = vld [vmem:[%s4] sm:$0xf]
    %v196 = vld [vmem:[%s4 + $0x4] sm:$0xf]
    %v197 = vld [vmem:[%s4 + $0x8] sm:$0xf]
    %v198 = vld [vmem:[%s4 + $0xc] sm:$0xf]
    %v203 = vunpack.c.l.b16 %v195
    %v204 = vunpack.c.l.b16 %v196
    %v205 = vunpack.c.l.b16 %v197
    %v206 = vunpack.c.l.b16 %v198
    %v207 = vpack.c.b16 %v204, %v203
    %v208 = vpack.c.b16 %v206, %v205
    %211 = vmatprep.subr.bf16.mxu0 0
    %212 = vmatpush1.bf16.msra.mxu0 %v207
    %213 = vmatprep.subr.bf16.mxu0 0
    %214 = vmatpush1.bf16.msra.mxu0 %v208
    %215 = vmatprep.subr.bf16.mxu0 0
    %216 = vmatpush1.bf16.msra.mxu0 0
    %217 = vmatprep.subr.bf16.mxu0 0
    %218 = vmatpush1.bf16.msra.mxu0 0
    %219 = vmatprep.subr.bf16.mxu0 0
    %220 = vmatpush1.bf16.msra.mxu0 0
    %221 = vmatprep.subr.bf16.mxu0 0
    %222 = vmatpush1.bf16.msra.mxu0 0
    %223 = vmatprep.subr.bf16.mxu0 0
    %224 = vmatpush1.bf16.msra.mxu0 0
    %225 = vmatprep.subr.bf16.mxu0 0
    %226 = vmatpush1.bf16.msra.mxu0 0
    %227 = vmatprep.subr.bf16.mxu0 0
    %228 = vmatpush1.bf16.msra.mxu0 0
    %229 = vmatprep.subr.bf16.mxu0 0
    %230 = vmatpush1.bf16.msra.mxu0 0
    %231 = vmatprep.subr.bf16.mxu0 0
    %232 = vmatpush1.bf16.msra.mxu0 0
    %233 = vmatprep.subr.bf16.mxu0 0
    %234 = vmatpush1.bf16.msra.mxu0 0
    %235 = vmatprep.subr.bf16.mxu0 0
    %236 = vmatpush1.bf16.msra.mxu0 0
    %237 = vmatprep.subr.bf16.mxu0 0
    %238 = vmatpush1.bf16.msra.mxu0 0
    %239 = vmatprep.subr.bf16.mxu0 0
    %240 = vmatpush1.bf16.msra.mxu0 0
    %241 = vmatprep.subr.bf16.mxu0 0
    %242 = vmatpush1.bf16.msra.mxu0 0
    %243 = vmatprep.mubr.bf16.mxu0 0
    %244 = vmatmul.mubr.bf16.gmra.mrb[0].mxu0 %v150
    %v245 = vpop.f32.mrb[0].mxu0
    %v246 = vadd.f32 0.0, %v245
    %v247 = vpop.f32.mrb[0].mxu0
    %v248 = vpop.f32.mrb[0].mxu0
    %v249 = vadd.f32 0.0, %v248
    %v250 = vpop.f32.mrb[0].mxu0
    %251 = vdwg.mxu0
    %v252 = vpack.c.bf16 %v246, %v246
    %v253 = vpack.c.bf16 %v249, %v249
    %v254 = vld [vmem:[%s5] sm:$0xf]
    %v255 = vld [vmem:[%s5 + $0x4] sm:$0xf]
    %v256 = vld [vmem:[%s5 + $0x8] sm:$0xf]
    %v257 = vld [vmem:[%s5 + $0xc] sm:$0xf]
    %v262 = vunpack.c.l.b16 %v254
    %v263 = vunpack.c.l.b16 %v255
    %v264 = vunpack.c.l.b16 %v256
    %v265 = vunpack.c.l.b16 %v257
    %v266 = vpack.c.b16 %v263, %v262
    %v267 = vpack.c.b16 %v265, %v264
    %270 = vmatprep.subr.bf16.mxu0 0
    %271 = vmatpush1.bf16.msra.mxu0 %v266
    %272 = vmatprep.subr.bf16.mxu0 0
    %273 = vmatpush1.bf16.msra.mxu0 %v267
    %274 = vmatprep.subr.bf16.mxu0 0
    %275 = vmatpush1.bf16.msra.mxu0 0
    %276 = vmatprep.subr.bf16.mxu0 0
    %277 = vmatpush1.bf16.msra.mxu0 0
    %278 = vmatprep.subr.bf16.mxu0 0
    %279 = vmatpush1.bf16.msra.mxu0 0
    %280 = vmatprep.subr.bf16.mxu0 0
    %281 = vmatpush1.bf16.msra.mxu0 0
    %282 = vmatprep.subr.bf16.mxu0 0
    %283 = vmatpush1.bf16.msra.mxu0 0
    %284 = vmatprep.subr.bf16.mxu0 0
    %285 = vmatpush1.bf16.msra.mxu0 0
    %286 = vmatprep.subr.bf16.mxu0 0
    %287 = vmatpush1.bf16.msra.mxu0 0
    %288 = vmatprep.subr.bf16.mxu0 0
    %289 = vmatpush1.bf16.msra.mxu0 0
    %290 = vmatprep.subr.bf16.mxu0 0
    %291 = vmatpush1.bf16.msra.mxu0 0
    %292 = vmatprep.subr.bf16.mxu0 0
    %293 = vmatpush1.bf16.msra.mxu0 0
    %294 = vmatprep.subr.bf16.mxu0 0
    %295 = vmatpush1.bf16.msra.mxu0 0
    %296 = vmatprep.subr.bf16.mxu0 0
    %297 = vmatpush1.bf16.msra.mxu0 0
    %298 = vmatprep.subr.bf16.mxu0 0
    %299 = vmatpush1.bf16.msra.mxu0 0
    %300 = vmatprep.subr.bf16.mxu0 0
    %301 = vmatpush1.bf16.msra.mxu0 0
    %302 = vmatprep.mubr.bf16.mxu0 0
    %303 = vmatmul.mubr.bf16.gmra.mrb[0].mxu0 %v150
    %v304 = vpop.f32.mrb[0].mxu0
    %v305 = vadd.f32 0.0, %v304
    %v306 = vpop.f32.mrb[0].mxu0
    %v307 = vpop.f32.mrb[0].mxu0
    %v308 = vadd.f32 0.0, %v307
    %v309 = vpop.f32.mrb[0].mxu0
    %310 = vdwg.mxu0
    %v311 = vpack.c.bf16 %v305, %v305
    %v312 = vpack.c.bf16 %v308, %v308
    %v313 = vlaneseq
    %v314 = vshrl.u32 %v313, 7
    %v315 = vlaneseq
    %v316 = vand.u32 %v315, 127
    %vm317 = vcmp.ge.s32.totalorder %v314, %v316
    %vm318 = vcmask 64512
    %v320 = vsel %vm318, %v193, 0
    %v323 = vsel %vm318, %v252, 0
    %325 = vmatprep.subr.bf16.mxu0 0
    %326 = vmatpush1.bf16.xpose.msra.mxu0 %v323
    %327 = vmatprep.subr.bf16.mxu0 0
    %328 = vmatpush1.bf16.xpose.msra.mxu0 0
    %329 = vmatprep.subr.bf16.mxu0 0
    %330 = vmatpush1.bf16.xpose.msra.mxu0 0
    %331 = vmatprep.subr.bf16.mxu0 0
    %332 = vmatpush1.bf16.xpose.msra.mxu0 0
    %333 = vmatprep.subr.bf16.mxu0 0
    %334 = vmatpush1.bf16.xpose.msra.mxu0 0
    %335 = vmatprep.subr.bf16.mxu0 0
    %336 = vmatpush1.bf16.xpose.msra.mxu0 0
    %337 = vmatprep.subr.bf16.mxu0 0
    %338 = vmatpush1.bf16.xpose.msra.mxu0 0
    %339 = vmatprep.subr.bf16.mxu0 0
    %340 = vmatpush1.bf16.xpose.msra.mxu0 0
    %341 = vmatprep.subr.bf16.mxu0 0
    %342 = vmatpush1.bf16.xpose.msra.mxu0 0
    %343 = vmatprep.subr.bf16.mxu0 0
    %344 = vmatpush1.bf16.xpose.msra.mxu0 0
    %345 = vmatprep.subr.bf16.mxu0 0
    %346 = vmatpush1.bf16.xpose.msra.mxu0 0
    %347 = vmatprep.subr.bf16.mxu0 0
    %348 = vmatpush1.bf16.xpose.msra.mxu0 0
    %349 = vmatprep.subr.bf16.mxu0 0
    %350 = vmatpush1.bf16.xpose.msra.mxu0 0
    %351 = vmatprep.subr.bf16.mxu0 0
    %352 = vmatpush1.bf16.xpose.msra.mxu0 0
    %353 = vmatprep.subr.bf16.mxu0 0
    %354 = vmatpush1.bf16.xpose.msra.mxu0 0
    %355 = vmatprep.subr.bf16.mxu0 0
    %356 = vmatpush1.bf16.xpose.msra.mxu0 0
    %357 = vmatprep.mubr.bf16.mxu0 0
    %358 = vmatmul.mubr.bf16.gmra.mrb[0].mxu0 %v320
    %v359 = vpop.f32.mrb[0].mxu0
    %v360 = vadd.f32 0.0, %v359
    %v361 = vpop.f32.mrb[0].mxu0
    %v362 = vpop.f32.mrb[0].mxu0
    %v363 = vpop.f32.mrb[0].mxu0
    %364 = vdwg.mxu0
    %v366 = vsel %vm318, %v194, 0
    %v369 = vsel %vm318, %v253, 0
    %371 = vmatprep.subr.bf16.mxu0 0
    %372 = vmatpush1.bf16.xpose.msra.mxu0 %v369
    %373 = vmatprep.subr.bf16.mxu0 0
    %374 = vmatpush1.bf16.xpose.msra.mxu0 0
    %375 = vmatprep.subr.bf16.mxu0 0
    %376 = vmatpush1.bf16.xpose.msra.mxu0 0
    %377 = vmatprep.subr.bf16.mxu0 0
    %378 = vmatpush1.bf16.xpose.msra.mxu0 0
    %379 = vmatprep.subr.bf16.mxu0 0
    %380 = vmatpush1.bf16.xpose.msra.mxu0 0
    %381 = vmatprep.subr.bf16.mxu0 0
    %382 = vmatpush1.bf16.xpose.msra.mxu0 0
    %383 = vmatprep.subr.bf16.mxu0 0
    %384 = vmatpush1.bf16.xpose.msra.mxu0 0
    %385 = vmatprep.subr.bf16.mxu0 0
    %386 = vmatpush1.bf16.xpose.msra.mxu0 0
    %387 = vmatprep.subr.bf16.mxu0 0
    %388 = vmatpush1.bf16.xpose.msra.mxu0 0
    %389 = vmatprep.subr.bf16.mxu0 0
    %390 = vmatpush1.bf16.xpose.msra.mxu0 0
    %391 = vmatprep.subr.bf16.mxu0 0
    %392 = vmatpush1.bf16.xpose.msra.mxu0 0
    %393 = vmatprep.subr.bf16.mxu0 0
    %394 = vmatpush1.bf16.xpose.msra.mxu0 0
    %395 = vmatprep.subr.bf16.mxu0 0
    %396 = vmatpush1.bf16.xpose.msra.mxu0 0
    %397 = vmatprep.subr.bf16.mxu0 0
    %398 = vmatpush1.bf16.xpose.msra.mxu0 0
    %399 = vmatprep.subr.bf16.mxu0 0
    %400 = vmatpush1.bf16.xpose.msra.mxu0 0
    %401 = vmatprep.subr.bf16.mxu0 0
    %402 = vmatpush1.bf16.xpose.msra.mxu0 0
    %403 = vmatprep.mubr.bf16.mxu0 0
    %404 = vmatmul.mubr.bf16.gmra.mrb[0].mxu0 %v366
    %v405 = vpop.f32.mrb[0].mxu0
    %v406 = vadd.f32 0.0, %v405
    %v407 = vpop.f32.mrb[0].mxu0
    %v408 = vpop.f32.mrb[0].mxu0
    %v409 = vpop.f32.mrb[0].mxu0
    %410 = vdwg.mxu0
    %v411 = vsel %vm317, 1, 0
    %vm412 = vcmp.eq.s32.totalorder %v411, 1
    %v413 = vsel %vm412, %v360, -1e+30
    %v414 = vsel %vm412, %v406, -1e+30
    %v415 = vsel %vm318, %v413, -inf
    %416 = vmax.xlane.f32.xlu0 %v415
    %v417 = vpop.xlane.xlu0 %416
    %v418 = vsel %vm318, %v414, -inf
    %419 = vmax.xlane.f32.xlu0 %v418
    %v420 = vpop.xlane.xlu0 %419
    %v421 = vsub.f32 %v413, %v417
    %v422 = vsub.f32 %v414, %v420
    %v423 = vmul.f32 %v421, 1.442695
    %v424 = vpow.pop %v423
    %v425 = vmul.f32 %v422, 1.442695
    %v426 = vpow.pop %v425
    %v427 = vsel %vm318, %v424, 0.0
    %428 = vadd.xlane.f32.xlu0 %v427
    %v429 = vpop.xlane.xlu0 %428
    %v430 = vsel %vm318, %v426, 0.0
    %431 = vadd.xlane.f32.xlu0 %v430
    %v432 = vpop.xlane.xlu0 %431
    %v433 = vrcp.pop %v429
    %v434 = vmul.f32 %v424, %v433
    %v435 = vrcp.pop %v432
    %v436 = vmul.f32 %v426, %v435
    %v437 = vpack.c.bf16 %v434, %v434
    %v438 = vpack.c.bf16 %v436, %v436
    %v440 = vsel %vm318, %v437, 0
    %vm442 = vcmask 1043456
    %v444 = vsel %vm442, %v311, 0
    %446 = vmatprep.subr.bf16.mxu0 0
    %447 = vmatpush1.bf16.msra.mxu0 %v444
    %448 = vmatprep.subr.bf16.mxu0 0
    %449 = vmatpush1.bf16.msra.mxu0 0
    %450 = vmatprep.subr.bf16.mxu0 0
    %451 = vmatpush1.bf16.msra.mxu0 0
    %452 = vmatprep.subr.bf16.mxu0 0
    %453 = vmatpush1.bf16.msra.mxu0 0
    %454 = vmatprep.subr.bf16.mxu0 0
    %455 = vmatpush1.bf16.msra.mxu0 0
    %456 = vmatprep.subr.bf16.mxu0 0
    %457 = vmatpush1.bf16.msra.mxu0 0
    %458 = vmatprep.subr.bf16.mxu0 0
    %459 = vmatpush1.bf16.msra.mxu0 0
    %460 = vmatprep.subr.bf16.mxu0 0
    %461 = vmatpush1.bf16.msra.mxu0 0
    %462 = vmatprep.subr.bf16.mxu0 0
    %463 = vmatpush1.bf16.msra.mxu0 0
    %464 = vmatprep.subr.bf16.mxu0 0
    %465 = vmatpush1.bf16.msra.mxu0 0
    %466 = vmatprep.subr.bf16.mxu0 0
    %467 = vmatpush1.bf16.msra.mxu0 0
    %468 = vmatprep.subr.bf16.mxu0 0
    %469 = vmatpush1.bf16.msra.mxu0 0
    %470 = vmatprep.subr.bf16.mxu0 0
    %471 = vmatpush1.bf16.msra.mxu0 0
    %472 = vmatprep.subr.bf16.mxu0 0
    %473 = vmatpush1.bf16.msra.mxu0 0
    %474 = vmatprep.subr.bf16.mxu0 0
    %475 = vmatpush1.bf16.msra.mxu0 0
    %476 = vmatprep.subr.bf16.mxu0 0
    %477 = vmatpush1.bf16.msra.mxu0 0
    %478 = vmatprep.mubr.bf16.mxu0 0
    %479 = vmatmul.mubr.bf16.gmra.mrb[0].mxu0 %v440
    %v480 = vpop.f32.mrb[0].mxu0
    %v481 = vadd.f32 0.0, %v480
    %v482 = vpop.f32.mrb[0].mxu0
    %v483 = vpop.f32.mrb[0].mxu0
    %v484 = vpop.f32.mrb[0].mxu0
    %485 = vdwg.mxu0
    %v487 = vsel %vm318, %v438, 0
    %v490 = vsel %vm442, %v312, 0
    %492 = vmatprep.subr.bf16.mxu0 0
    %493 = vmatpush1.bf16.msra.mxu0 %v490
    %494 = vmatprep.subr.bf16.mxu0 0
    %495 = vmatpush1.bf16.msra.mxu0 0
    %496 = vmatprep.subr.bf16.mxu0 0
    %497 = vmatpush1.bf16.msra.mxu0 0
    %498 = vmatprep.subr.bf16.mxu0 0
    %499 = vmatpush1.bf16.msra.mxu0 0
    %500 = vmatprep.subr.bf16.mxu0 0
    %501 = vmatpush1.bf16.msra.mxu0 0
    %502 = vmatprep.subr.bf16.mxu0 0
    %503 = vmatpush1.bf16.msra.mxu0 0
    %504 = vmatprep.subr.bf16.mxu0 0
    %505 = vmatpush1.bf16.msra.mxu0 0
    %506 = vmatprep.subr.bf16.mxu0 0
    %507 = vmatpush1.bf16.msra.mxu0 0
    %508 = vmatprep.subr.bf16.mxu0 0
    %509 = vmatpush1.bf16.msra.mxu0 0
    %510 = vmatprep.subr.bf16.mxu0 0
    %511 = vmatpush1.bf16.msra.mxu0 0
    %512 = vmatprep.subr.bf16.mxu0 0
    %513 = vmatpush1.bf16.msra.mxu0 0
    %514 = vmatprep.subr.bf16.mxu0 0
    %515 = vmatpush1.bf16.msra.mxu0 0
    %516 = vmatprep.subr.bf16.mxu0 0
    %517 = vmatpush1.bf16.msra.mxu0 0
    %518 = vmatprep.subr.bf16.mxu0 0
    %519 = vmatpush1.bf16.msra.mxu0 0
    %520 = vmatprep.subr.bf16.mxu0 0
    %521 = vmatpush1.bf16.msra.mxu0 0
    %522 = vmatprep.subr.bf16.mxu0 0
    %523 = vmatpush1.bf16.msra.mxu0 0
    %524 = vmatprep.mubr.bf16.mxu0 0
    %525 = vmatmul.mubr.bf16.gmra.mrb[0].mxu0 %v487
    %v526 = vpop.f32.mrb[0].mxu0
    %v527 = vadd.f32 0.0, %v526
    %v528 = vpop.f32.mrb[0].mxu0
    %v529 = vpop.f32.mrb[0].mxu0
    %v530 = vpop.f32.mrb[0].mxu0
    %531 = vdwg.mxu0
    %533 = vrot.lane.b32.xlu0 %v193, 120
    %v534 = vpop.permute.xlu0 %533
    %536 = vrot.lane.b32.xlu0 %v252, 120
    %v537 = vpop.permute.xlu0 %536
    %v539 = vsel %vm318, %v534, 0
    %v542 = vsel %vm318, %v537, 0
    %544 = vmatprep.subr.bf16.mxu0 0
    %545 = vmatpush1.bf16.xpose.msra.mxu0 %v542
    %546 = vmatprep.subr.bf16.mxu0 0
    %547 = vmatpush1.bf16.xpose.msra.mxu0 0
    %548 = vmatprep.subr.bf16.mxu0 0
    %549 = vmatpush1.bf16.xpose.msra.mxu0 0
    %550 = vmatprep.subr.bf16.mxu0 0
    %551 = vmatpush1.bf16.xpose.msra.mxu0 0
    %552 = vmatprep.subr.bf16.mxu0 0
    %553 = vmatpush1.bf16.xpose.msra.mxu0 0
    %554 = vmatprep.subr.bf16.mxu0 0
    %555 = vmatpush1.bf16.xpose.msra.mxu0 0
    %556 = vmatprep.subr.bf16.mxu0 0
    %557 = vmatpush1.bf16.xpose.msra.mxu0 0
    %558 = vmatprep.subr.bf16.mxu0 0
    %559 = vmatpush1.bf16.xpose.msra.mxu0 0
    %560 = vmatprep.subr.bf16.mxu0 0
    %561 = vmatpush1.bf16.xpose.msra.mxu0 0
    %562 = vmatprep.subr.bf16.mxu0 0
    %563 = vmatpush1.bf16.xpose.msra.mxu0 0
    %564 = vmatprep.subr.bf16.mxu0 0
    %565 = vmatpush1.bf16.xpose.msra.mxu0 0
    %566 = vmatprep.subr.bf16.mxu0 0
    %567 = vmatpush1.bf16.xpose.msra.mxu0 0
    %568 = vmatprep.subr.bf16.mxu0 0
    %569 = vmatpush1.bf16.xpose.msra.mxu0 0
    %570 = vmatprep.subr.bf16.mxu0 0
    %571 = vmatpush1.bf16.xpose.msra.mxu0 0
    %572 = vmatprep.subr.bf16.mxu0 0
    %573 = vmatpush1.bf16.xpose.msra.mxu0 0
    %574 = vmatprep.subr.bf16.mxu0 0
    %575 = vmatpush1.bf16.xpose.msra.mxu0 0
    %576 = vmatprep.mubr.bf16.mxu0 0
    %577 = vmatmul.mubr.bf16.gmra.mrb[0].mxu0 %v539
    %v578 = vpop.f32.mrb[0].mxu0
    %v579 = vadd.f32 0.0, %v578
    %v580 = vpop.f32.mrb[0].mxu0
    %v581 = vpop.f32.mrb[0].mxu0
    %v582 = vpop.f32.mrb[0].mxu0
    %583 = vdwg.mxu0
    %585 = vrot.lane.b32.xlu0 %v194, 120
    %v586 = vpop.permute.xlu0 %585
    %588 = vrot.lane.b32.xlu0 %v253, 120
    %v589 = vpop.permute.xlu0 %588
    %v591 = vsel %vm318, %v586, 0
    %v594 = vsel %vm318, %v589, 0
    %596 = vmatprep.subr.bf16.mxu0 0
    %597 = vmatpush1.bf16.xpose.msra.mxu0 %v594
    %598 = vmatprep.subr.bf16.mxu0 0
    %599 = vmatpush1.bf16.xpose.msra.mxu0 0
    %600 = vmatprep.subr.bf16.mxu0 0
    %601 = vmatpush1.bf16.xpose.msra.mxu0 0
    %602 = vmatprep.subr.bf16.mxu0 0
    %603 = vmatpush1.bf16.xpose.msra.mxu0 0
    %604 = vmatprep.subr.bf16.mxu0 0
    %605 = vmatpush1.bf16.xpose.msra.mxu0 0
    %606 = vmatprep.subr.bf16.mxu0 0
    %607 = vmatpush1.bf16.xpose.msra.mxu0 0
    %608 = vmatprep.subr.bf16.mxu0 0
    %609 = vmatpush1.bf16.xpose.msra.mxu0 0
    %610 = vmatprep.subr.bf16.mxu0 0
    %611 = vmatpush1.bf16.xpose.msra.mxu0 0
    %612 = vmatprep.subr.bf16.mxu0 0
    %613 = vmatpush1.bf16.xpose.msra.mxu0 0
    %614 = vmatprep.subr.bf16.mxu0 0
    %615 = vmatpush1.bf16.xpose.msra.mxu0 0
    %616 = vmatprep.subr.bf16.mxu0 0
    %617 = vmatpush1.bf16.xpose.msra.mxu0 0
    %618 = vmatprep.subr.bf16.mxu0 0
    %619 = vmatpush1.bf16.xpose.msra.mxu0 0
    %620 = vmatprep.subr.bf16.mxu0 0
    %621 = vmatpush1.bf16.xpose.msra.mxu0 0
    %622 = vmatprep.subr.bf16.mxu0 0
    %623 = vmatpush1.bf16.xpose.msra.mxu0 0
    %624 = vmatprep.subr.bf16.mxu0 0
    %625 = vmatpush1.bf16.xpose.msra.mxu0 0
    %626 = vmatprep.subr.bf16.mxu0 0
    %627 = vmatpush1.bf16.xpose.msra.mxu0 0
    %628 = vmatprep.mubr.bf16.mxu0 0
    %629 = vmatmul.mubr.bf16.gmra.mrb[0].mxu0 %v591
    %v630 = vpop.f32.mrb[0].mxu0
    %v631 = vadd.f32 0.0, %v630
    %v632 = vpop.f32.mrb[0].mxu0
    %v633 = vpop.f32.mrb[0].mxu0
    %v634 = vpop.f32.mrb[0].mxu0
    %635 = vdwg.mxu0
    %v636 = vsel %vm412, %v579, -1e+30
    %v637 = vsel %vm412, %v631, -1e+30
    %v638 = vsel %vm318, %v636, -inf
    %639 = vmax.xlane.f32.xlu0 %v638
    %v640 = vpop.xlane.xlu0 %639
    %v641 = vsel %vm318, %v637, -inf
    %642 = vmax.xlane.f32.xlu0 %v641
    %v643 = vpop.xlane.xlu0 %642
    %v644 = vsub.f32 %v636, %v640
    %v645 = vsub.f32 %v637, %v643
    %v646 = vmul.f32 %v644, 1.442695
    %v647 = vpow.pop %v646
    %v648 = vmul.f32 %v645, 1.442695
    %v649 = vpow.pop %v648
    %v650 = vsel %vm318, %v647, 0.0
    %651 = vadd.xlane.f32.xlu0 %v650
    %v652 = vpop.xlane.xlu0 %651
    %v653 = vsel %vm318, %v649, 0.0
    %654 = vadd.xlane.f32.xlu0 %v653
    %v655 = vpop.xlane.xlu0 %654
    %v656 = vrcp.pop %v652
    %v657 = vmul.f32 %v647, %v656
    %v658 = vrcp.pop %v655
    %v659 = vmul.f32 %v649, %v658
    %v660 = vpack.c.bf16 %v657, %v657
    %v661 = vpack.c.bf16 %v659, %v659
    %663 = vrot.lane.b32.xlu0 %v311, 120
    %v664 = vpop.permute.xlu0 %663
    %v666 = vsel %vm318, %v660, 0
    %v669 = vsel %vm442, %v664, 0
    %671 = vmatprep.subr.bf16.mxu0 0
    %672 = vmatpush1.bf16.msra.mxu0 %v669
    %673 = vmatprep.subr.bf16.mxu0 0
    %674 = vmatpush1.bf16.msra.mxu0 0
    %675 = vmatprep.subr.bf16.mxu0 0
    %676 = vmatpush1.bf16.msra.mxu0 0
    %677 = vmatprep.subr.bf16.mxu0 0
    %678 = vmatpush1.bf16.msra.mxu0 0
    %679 = vmatprep.subr.bf16.mxu0 0
    %680 = vmatpush1.bf16.msra.mxu0 0
    %681 = vmatprep.subr.bf16.mxu0 0
    %682 = vmatpush1.bf16.msra.mxu0 0
    %683 = vmatprep.subr.bf16.mxu0 0
    %684 = vmatpush1.bf16.msra.mxu0 0
    %685 = vmatprep.subr.bf16.mxu0 0
    %686 = vmatpush1.bf16.msra.mxu0 0
    %687 = vmatprep.subr.bf16.mxu0 0
    %688 = vmatpush1.bf16.msra.mxu0 0
    %689 = vmatprep.subr.bf16.mxu0 0
    %690 = vmatpush1.bf16.msra.mxu0 0
    %691 = vmatprep.subr.bf16.mxu0 0
    %692 = vmatpush1.bf16.msra.mxu0 0
    %693 = vmatprep.subr.bf16.mxu0 0
    %694 = vmatpush1.bf16.msra.mxu0 0
    %695 = vmatprep.subr.bf16.mxu0 0
    %696 = vmatpush1.bf16.msra.mxu0 0
    %697 = vmatprep.subr.bf16.mxu0 0
    %698 = vmatpush1.bf16.msra.mxu0 0
    %699 = vmatprep.subr.bf16.mxu0 0
    %700 = vmatpush1.bf16.msra.mxu0 0
    %701 = vmatprep.subr.bf16.mxu0 0
    %702 = vmatpush1.bf16.msra.mxu0 0
    %703 = vmatprep.mubr.bf16.mxu0 0
    %704 = vmatmul.mubr.bf16.gmra.mrb[0].mxu0 %v666
    %v705 = vpop.f32.mrb[0].mxu0
    %v706 = vadd.f32 0.0, %v705
    %v707 = vpop.f32.mrb[0].mxu0
    %v708 = vpop.f32.mrb[0].mxu0
    %v709 = vpop.f32.mrb[0].mxu0
    %710 = vdwg.mxu0
    %712 = vrot.lane.b32.xlu0 %v312, 120
    %v713 = vpop.permute.xlu0 %712
    %v715 = vsel %vm318, %v661, 0
    %v718 = vsel %vm442, %v713, 0
    %720 = vmatprep.subr.bf16.mxu0 0
    %721 = vmatpush1.bf16.msra.mxu0 %v718
    %722 = vmatprep.subr.bf16.mxu0 0
    %723 = vmatpush1.bf16.msra.mxu0 0
    %724 = vmatprep.subr.bf16.mxu0 0
    %725 = vmatpush1.bf16.msra.mxu0 0
    %726 = vmatprep.subr.bf16.mxu0 0
    %727 = vmatpush1.bf16.msra.mxu0 0
    %728 = vmatprep.subr.bf16.mxu0 0
    %729 = vmatpush1.bf16.msra.mxu0 0
    %730 = vmatprep.subr.bf16.mxu0 0
    %731 = vmatpush1.bf16.msra.mxu0 0
    %732 = vmatprep.subr.bf16.mxu0 0
    %733 = vmatpush1.bf16.msra.mxu0 0
    %734 = vmatprep.subr.bf16.mxu0 0
    %735 = vmatpush1.bf16.msra.mxu0 0
    %736 = vmatprep.subr.bf16.mxu0 0
    %737 = vmatpush1.bf16.msra.mxu0 0
    %738 = vmatprep.subr.bf16.mxu0 0
    %739 = vmatpush1.bf16.msra.mxu0 0
    %740 = vmatprep.subr.bf16.mxu0 0
    %741 = vmatpush1.bf16.msra.mxu0 0
    %742 = vmatprep.subr.bf16.mxu0 0
    %743 = vmatpush1.bf16.msra.mxu0 0
    %744 = vmatprep.subr.bf16.mxu0 0
    %745 = vmatpush1.bf16.msra.mxu0 0
    %746 = vmatprep.subr.bf16.mxu0 0
    %747 = vmatpush1.bf16.msra.mxu0 0
    %748 = vmatprep.subr.bf16.mxu0 0
    %749 = vmatpush1.bf16.msra.mxu0 0
    %750 = vmatprep.subr.bf16.mxu0 0
    %751 = vmatpush1.bf16.msra.mxu0 0
    %752 = vmatprep.mubr.bf16.mxu0 0
    %753 = vmatmul.mubr.bf16.gmra.mrb[0].mxu0 %v715
    %v754 = vpop.f32.mrb[0].mxu0
    %v755 = vadd.f32 0.0, %v754
    %v756 = vpop.f32.mrb[0].mxu0
    %v757 = vpop.f32.mrb[0].mxu0
    %v758 = vpop.f32.mrb[0].mxu0
    %759 = vdwg.mxu0
    %760 = vrot.lane.b32.xlu0 %v193, 112
    %v761 = vpop.permute.xlu0 %760
    %762 = vrot.lane.b32.xlu0 %v252, 112
    %v763 = vpop.permute.xlu0 %762
    %v765 = vsel %vm318, %v761, 0
    %v768 = vsel %vm318, %v763, 0
    %770 = vmatprep.subr.bf16.mxu0 0
    %771 = vmatpush1.bf16.xpose.msra.mxu0 %v768
    %772 = vmatprep.subr.bf16.mxu0 0
    %773 = vmatpush1.bf16.xpose.msra.mxu0 0
    %774 = vmatprep.subr.bf16.mxu0 0
    %775 = vmatpush1.bf16.xpose.msra.mxu0 0
    %776 = vmatprep.subr.bf16.mxu0 0
    %777 = vmatpush1.bf16.xpose.msra.mxu0 0
    %778 = vmatprep.subr.bf16.mxu0 0
    %779 = vmatpush1.bf16.xpose.msra.mxu0 0
    %780 = vmatprep.subr.bf16.mxu0 0
    %781 = vmatpush1.bf16.xpose.msra.mxu0 0
    %782 = vmatprep.subr.bf16.mxu0 0
    %783 = vmatpush1.bf16.xpose.msra.mxu0 0
    %784 = vmatprep.subr.bf16.mxu0 0
    %785 = vmatpush1.bf16.xpose.msra.mxu0 0
    %786 = vmatprep.subr.bf16.mxu0 0
    %787 = vmatpush1.bf16.xpose.msra.mxu0 0
    %788 = vmatprep.subr.bf16.mxu0 0
    %789 = vmatpush1.bf16.xpose.msra.mxu0 0
    %790 = vmatprep.subr.bf16.mxu0 0
    %791 = vmatpush1.bf16.xpose.msra.mxu0 0
    %792 = vmatprep.subr.bf16.mxu0 0
    %793 = vmatpush1.bf16.xpose.msra.mxu0 0
    %794 = vmatprep.subr.bf16.mxu0 0
    %795 = vmatpush1.bf16.xpose.msra.mxu0 0
    %796 = vmatprep.subr.bf16.mxu0 0
    %797 = vmatpush1.bf16.xpose.msra.mxu0 0
    %798 = vmatprep.subr.bf16.mxu0 0
    %799 = vmatpush1.bf16.xpose.msra.mxu0 0
    %800 = vmatprep.subr.bf16.mxu0 0
    %801 = vmatpush1.bf16.xpose.msra.mxu0 0
    %802 = vmatprep.mubr.bf16.mxu0 0
    %803 = vmatmul.mubr.bf16.gmra.mrb[0].mxu0 %v765
    %v804 = vpop.f32.mrb[0].mxu0
    %v805 = vadd.f32 0.0, %v804
    %v806 = vpop.f32.mrb[0].mxu0
    %v807 = vpop.f32.mrb[0].mxu0
    %v808 = vpop.f32.mrb[0].mxu0
    %809 = vdwg.mxu0
    %810 = vrot.lane.b32.xlu0 %v194, 112
    %v811 = vpop.permute.xlu0 %810
    %812 = vrot.lane.b32.xlu0 %v253, 112
    %v813 = vpop.permute.xlu0 %812
    %v815 = vsel %vm318, %v811, 0
    %v818 = vsel %vm318, %v813, 0
    %820 = vmatprep.subr.bf16.mxu0 0
    %821 = vmatpush1.bf16.xpose.msra.mxu0 %v818
    %822 = vmatprep.subr.bf16.mxu0 0
    %823 = vmatpush1.bf16.xpose.msra.mxu0 0
    %824 = vmatprep.subr.bf16.mxu0 0
    %825 = vmatpush1.bf16.xpose.msra.mxu0 0
    %826 = vmatprep.subr.bf16.mxu0 0
    %827 = vmatpush1.bf16.xpose.msra.mxu0 0
    %828 = vmatprep.subr.bf16.mxu0 0
    %829 = vmatpush1.bf16.xpose.msra.mxu0 0
    %830 = vmatprep.subr.bf16.mxu0 0
    %831 = vmatpush1.bf16.xpose.msra.mxu0 0
    %832 = vmatprep.subr.bf16.mxu0 0
    %833 = vmatpush1.bf16.xpose.msra.mxu0 0
    %834 = vmatprep.subr.bf16.mxu0 0
    %835 = vmatpush1.bf16.xpose.msra.mxu0 0
    %836 = vmatprep.subr.bf16.mxu0 0
    %837 = vmatpush1.bf16.xpose.msra.mxu0 0
    %838 = vmatprep.subr.bf16.mxu0 0
    %839 = vmatpush1.bf16.xpose.msra.mxu0 0
    %840 = vmatprep.subr.bf16.mxu0 0
    %841 = vmatpush1.bf16.xpose.msra.mxu0 0
    %842 = vmatprep.subr.bf16.mxu0 0
    %843 = vmatpush1.bf16.xpose.msra.mxu0 0
    %844 = vmatprep.subr.bf16.mxu0 0
    %845 = vmatpush1.bf16.xpose.msra.mxu0 0
    %846 = vmatprep.subr.bf16.mxu0 0
    %847 = vmatpush1.bf16.xpose.msra.mxu0 0
    %848 = vmatprep.subr.bf16.mxu0 0
    %849 = vmatpush1.bf16.xpose.msra.mxu0 0
    %850 = vmatprep.subr.bf16.mxu0 0
    %851 = vmatpush1.bf16.xpose.msra.mxu0 0
    %852 = vmatprep.mubr.bf16.mxu0 0
    %853 = vmatmul.mubr.bf16.gmra.mrb[0].mxu0 %v815
    %v854 = vpop.f32.mrb[0].mxu0
    %v855 = vadd.f32 0.0, %v854
    %v856 = vpop.f32.mrb[0].mxu0
    %v857 = vpop.f32.mrb[0].mxu0
    %v858 = vpop.f32.mrb[0].mxu0
    %859 = vdwg.mxu0
    %v860 = vsel %vm412, %v805, -1e+30
    %v861 = vsel %vm412, %v855, -1e+30
    %v862 = vsel %vm318, %v860, -inf
    %863 = vmax.xlane.f32.xlu0 %v862
    %v864 = vpop.xlane.xlu0 %863
    %v865 = vsel %vm318, %v861, -inf
    %866 = vmax.xlane.f32.xlu0 %v865
    %v867 = vpop.xlane.xlu0 %866
    %v868 = vsub.f32 %v860, %v864
    %v869 = vsub.f32 %v861, %v867
    %v870 = vmul.f32 %v868, 1.442695
    %v871 = vpow.pop %v870
    %v872 = vmul.f32 %v869, 1.442695
    %v873 = vpow.pop %v872
    %v874 = vsel %vm318, %v871, 0.0
    %875 = vadd.xlane.f32.xlu0 %v874
    %v876 = vpop.xlane.xlu0 %875
    %v877 = vsel %vm318, %v873, 0.0
    %878 = vadd.xlane.f32.xlu0 %v877
    %v879 = vpop.xlane.xlu0 %878
    %v880 = vrcp.pop %v876
    %v881 = vmul.f32 %v871, %v880
    %v882 = vrcp.pop %v879
    %v883 = vmul.f32 %v873, %v882
    %v884 = vpack.c.bf16 %v881, %v881
    %v885 = vpack.c.bf16 %v883, %v883
    %886 = vrot.lane.b32.xlu0 %v311, 112
    %v887 = vpop.permute.xlu0 %886
    %v889 = vsel %vm318, %v884, 0
    %v892 = vsel %vm442, %v887, 0
    %894 = vmatprep.subr.bf16.mxu0 0
    %895 = vmatpush1.bf16.msra.mxu0 %v892
    %896 = vmatprep.subr.bf16.mxu0 0
    %897 = vmatpush1.bf16.msra.mxu0 0
    %898 = vmatprep.subr.bf16.mxu0 0
    %899 = vmatpush1.bf16.msra.mxu0 0
    %900 = vmatprep.subr.bf16.mxu0 0
    %901 = vmatpush1.bf16.msra.mxu0 0
    %902 = vmatprep.subr.bf16.mxu0 0
    %903 = vmatpush1.bf16.msra.mxu0 0
    %904 = vmatprep.subr.bf16.mxu0 0
    %905 = vmatpush1.bf16.msra.mxu0 0
    %906 = vmatprep.subr.bf16.mxu0 0
    %907 = vmatpush1.bf16.msra.mxu0 0
    %908 = vmatprep.subr.bf16.mxu0 0
    %909 = vmatpush1.bf16.msra.mxu0 0
    %910 = vmatprep.subr.bf16.mxu0 0
    %911 = vmatpush1.bf16.msra.mxu0 0
    %912 = vmatprep.subr.bf16.mxu0 0
    %913 = vmatpush1.bf16.msra.mxu0 0
    %914 = vmatprep.subr.bf16.mxu0 0
    %915 = vmatpush1.bf16.msra.mxu0 0
    %916 = vmatprep.subr.bf16.mxu0 0
    %917 = vmatpush1.bf16.msra.mxu0 0
    %918 = vmatprep.subr.bf16.mxu0 0
    %919 = vmatpush1.bf16.msra.mxu0 0
    %920 = vmatprep.subr.bf16.mxu0 0
    %921 = vmatpush1.bf16.msra.mxu0 0
    %922 = vmatprep.subr.bf16.mxu0 0
    %923 = vmatpush1.bf16.msra.mxu0 0
    %924 = vmatprep.subr.bf16.mxu0 0
    %925 = vmatpush1.bf16.msra.mxu0 0
    %926 = vmatprep.mubr.bf16.mxu0 0
    %927 = vmatmul.mubr.bf16.gmra.mrb[0].mxu0 %v889
    %v928 = vpop.f32.mrb[0].mxu0
    %v929 = vadd.f32 0.0, %v928
    %v930 = vpop.f32.mrb[0].mxu0
    %v931 = vpop.f32.mrb[0].mxu0
    %v932 = vpop.f32.mrb[0].mxu0
    %933 = vdwg.mxu0
    %934 = vrot.lane.b32.xlu0 %v312, 112
    %v935 = vpop.permute.xlu0 %934
    %v937 = vsel %vm318, %v885, 0
    %v940 = vsel %vm442, %v935, 0
    %942 = vmatprep.subr.bf16.mxu0 0
    %943 = vmatpush1.bf16.msra.mxu0 %v940
    %944 = vmatprep.subr.bf16.mxu0 0
    %945 = vmatpush1.bf16.msra.mxu0 0
    %946 = vmatprep.subr.bf16.mxu0 0
    %947 = vmatpush1.bf16.msra.mxu0 0
    %948 = vmatprep.subr.bf16.mxu0 0
    %949 = vmatpush1.bf16.msra.mxu0 0
    %950 = vmatprep.subr.bf16.mxu0 0
    %951 = vmatpush1.bf16.msra.mxu0 0
    %952 = vmatprep.subr.bf16.mxu0 0
    %953 = vmatpush1.bf16.msra.mxu0 0
    %954 = vmatprep.subr.bf16.mxu0 0
    %955 = vmatpush1.bf16.msra.mxu0 0
    %956 = vmatprep.subr.bf16.mxu0 0
    %957 = vmatpush1.bf16.msra.mxu0 0
    %958 = vmatprep.subr.bf16.mxu0 0
    %959 = vmatpush1.bf16.msra.mxu0 0
    %960 = vmatprep.subr.bf16.mxu0 0
    %961 = vmatpush1.bf16.msra.mxu0 0
    %962 = vmatprep.subr.bf16.mxu0 0
    %963 = vmatpush1.bf16.msra.mxu0 0
    %964 = vmatprep.subr.bf16.mxu0 0
    %965 = vmatpush1.bf16.msra.mxu0 0
    %966 = vmatprep.subr.bf16.mxu0 0
    %967 = vmatpush1.bf16.msra.mxu0 0
    %968 = vmatprep.subr.bf16.mxu0 0
    %969 = vmatpush1.bf16.msra.mxu0 0
    %970 = vmatprep.subr.bf16.mxu0 0
    %971 = vmatpush1.bf16.msra.mxu0 0
    %972 = vmatprep.subr.bf16.mxu0 0
    %973 = vmatpush1.bf16.msra.mxu0 0
    %974 = vmatprep.mubr.bf16.mxu0 0
    %975 = vmatmul.mubr.bf16.gmra.mrb[0].mxu0 %v937
    %v976 = vpop.f32.mrb[0].mxu0
    %v977 = vadd.f32 0.0, %v976
    %v978 = vpop.f32.mrb[0].mxu0
    %v979 = vpop.f32.mrb[0].mxu0
    %v980 = vpop.f32.mrb[0].mxu0
    %981 = vdwg.mxu0
    %982 = vrot.lane.b32.xlu0 %v193, 104
    %v983 = vpop.permute.xlu0 %982
    %984 = vrot.lane.b32.xlu0 %v252, 104
    %v985 = vpop.permute.xlu0 %984
    %v987 = vsel %vm318, %v983, 0
    %v990 = vsel %vm318, %v985, 0
    %992 = vmatprep.subr.bf16.mxu0 0
    %993 = vmatpush1.bf16.xpose.msra.mxu0 %v990
    %994 = vmatprep.subr.bf16.mxu0 0
    %995 = vmatpush1.bf16.xpose.msra.mxu0 0
    %996 = vmatprep.subr.bf16.mxu0 0
    %997 = vmatpush1.bf16.xpose.msra.mxu0 0
    %998 = vmatprep.subr.bf16.mxu0 0
    %999 = vmatpush1.bf16.xpose.msra.mxu0 0
    %1000 = vmatprep.subr.bf16.mxu0 0
    %1001 = vmatpush1.bf16.xpose.msra.mxu0 0
    %1002 = vmatprep.subr.bf16.mxu0 0
    %1003 = vmatpush1.bf16.xpose.msra.mxu0 0
    %1004 = vmatprep.subr.bf16.mxu0 0
    %1005 = vmatpush1.bf16.xpose.msra.mxu0 0
    %1006 = vmatprep.subr.bf16.mxu0 0
    %1007 = vmatpush1.bf16.xpose.msra.mxu0 0
    %1008 = vmatprep.subr.bf16.mxu0 0
    %1009 = vmatpush1.bf16.xpose.msra.mxu0 0
    %1010 = vmatprep.subr.bf16.mxu0 0
    %1011 = vmatpush1.bf16.xpose.msra.mxu0 0
    %1012 = vmatprep.subr.bf16.mxu0 0
    %1013 = vmatpush1.bf16.xpose.msra.mxu0 0
    %1014 = vmatprep.subr.bf16.mxu0 0
    %1015 = vmatpush1.bf16.xpose.msra.mxu0 0
    %1016 = vmatprep.subr.bf16.mxu0 0
    %1017 = vmatpush1.bf16.xpose.msra.mxu0 0
    %1018 = vmatprep.subr.bf16.mxu0 0
    %1019 = vmatpush1.bf16.xpose.msra.mxu0 0
    %1020 = vmatprep.subr.bf16.mxu0 0
    %1021 = vmatpush1.bf16.xpose.msra.mxu0 0
    %1022 = vmatprep.subr.bf16.mxu0 0
    %1023 = vmatpush1.bf16.xpose.msra.mxu0 0
    %1024 = vmatprep.mubr.bf16.mxu0 0
    %1025 = vmatmul.mubr.bf16.gmra.mrb[0].mxu0 %v987
    %v1026 = vpop.f32.mrb[0].mxu0
    %v1027 = vadd.f32 0.0, %v1026
    %v1028 = vpop.f32.mrb[0].mxu0
    %v1029 = vpop.f32.mrb[0].mxu0
    %v1030 = vpop.f32.mrb[0].mxu0
    %1031 = vdwg.mxu0
    %1032 = vrot.lane.b32.xlu0 %v194, 104
    %v1033 = vpop.permute.xlu0 %1032
    %1034 = vrot.lane.b32.xlu0 %v253, 104
    %v1035 = vpop.permute.xlu0 %1034
    %v1037 = vsel %vm318, %v1033, 0
    %v1040 = vsel %vm318, %v1035, 0
    %1042 = vmatprep.subr.bf16.mxu0 0
    %1043 = vmatpush1.bf16.xpose.msra.mxu0 %v1040
    %1044 = vmatprep.subr.bf16.mxu0 0
    %1045 = vmatpush1.bf16.xpose.msra.mxu0 0
    %1046 = vmatprep.subr.bf16.mxu0 0
    %1047 = vmatpush1.bf16.xpose.msra.mxu0 0
    %1048 = vmatprep.subr.bf16.mxu0 0
    %1049 = vmatpush1.bf16.xpose.msra.mxu0 0
    %1050 = vmatprep.subr.bf16.mxu0 0
    %1051 = vmatpush1.bf16.xpose.msra.mxu0 0
    %1052 = vmatprep.subr.bf16.mxu0 0
    %1053 = vmatpush1.bf16.xpose.msra.mxu0 0
    %1054 = vmatprep.subr.bf16.mxu0 0
    %1055 = vmatpush1.bf16.xpose.msra.mxu0 0
    %1056 = vmatprep.subr.bf16.mxu0 0
    %1057 = vmatpush1.bf16.xpose.msra.mxu0 0
    %1058 = vmatprep.subr.bf16.mxu0 0
    %1059 = vmatpush1.bf16.xpose.msra.mxu0 0
    %1060 = vmatprep.subr.bf16.mxu0 0
    %1061 = vmatpush1.bf16.xpose.msra.mxu0 0
    %1062 = vmatprep.subr.bf16.mxu0 0
    %1063 = vmatpush1.bf16.xpose.msra.mxu0 0
    %1064 = vmatprep.subr.bf16.mxu0 0
    %1065 = vmatpush1.bf16.xpose.msra.mxu0 0
    %1066 = vmatprep.subr.bf16.mxu0 0
    %1067 = vmatpush1.bf16.xpose.msra.mxu0 0
    %1068 = vmatprep.subr.bf16.mxu0 0
    %1069 = vmatpush1.bf16.xpose.msra.mxu0 0
    %1070 = vmatprep.subr.bf16.mxu0 0
    %1071 = vmatpush1.bf16.xpose.msra.mxu0 0
    %1072 = vmatprep.subr.bf16.mxu0 0
    %1073 = vmatpush1.bf16.xpose.msra.mxu0 0
    %1074 = vmatprep.mubr.bf16.mxu0 0
    %1075 = vmatmul.mubr.bf16.gmra.mrb[0].mxu0 %v1037
    %v1076 = vpop.f32.mrb[0].mxu0
    %v1077 = vadd.f32 0.0, %v1076
    %v1078 = vpop.f32.mrb[0].mxu0
    %v1079 = vpop.f32.mrb[0].mxu0
    %v1080 = vpop.f32.mrb[0].mxu0
    %1081 = vdwg.mxu0
    %v1082 = vsel %vm412, %v1027, -1e+30
    %v1083 = vsel %vm412, %v1077, -1e+30
    %v1084 = vsel %vm318, %v1082, -inf
    %1085 = vmax.xlane.f32.xlu0 %v1084
    %v1086 = vpop.xlane.xlu0 %1085
    %v1087 = vsel %vm318, %v1083, -inf
    %1088 = vmax.xlane.f32.xlu0 %v1087
    %v1089 = vpop.xlane.xlu0 %1088
    %v1090 = vsub.f32 %v1082, %v1086
    %v1091 = vsub.f32 %v1083, %v1089
    %v1092 = vmul.f32 %v1090, 1.442695
    %v1093 = vpow.pop %v1092
    %v1094 = vmul.f32 %v1091, 1.442695
    %v1095 = vpow.pop %v1094
    %v1096 = vsel %vm318, %v1093, 0.0
    %1097 = vadd.xlane.f32.xlu0 %v1096
    %v1098 = vpop.xlane.xlu0 %1097
    %v1099 = vsel %vm318, %v1095, 0.0
    %1100 = vadd.xlane.f32.xlu0 %v1099
    %v1101 = vpop.xlane.xlu0 %1100
    %v1102 = vrcp.pop %v1098
    %v1103 = vmul.f32 %v1093, %v1102
    %v1104 = vrcp.pop %v1101
    %v1105 = vmul.f32 %v1095, %v1104
    %v1106 = vpack.c.bf16 %v1103, %v1103
    %v1107 = vpack.c.bf16 %v1105, %v1105
    %1108 = vrot.lane.b32.xlu0 %v311, 104
    %v1109 = vpop.permute.xlu0 %1108
    %v1111 = vsel %vm318, %v1106, 0
    %v1114 = vsel %vm442, %v1109, 0
    %1116 = vmatprep.subr.bf16.mxu0 0
    %1117 = vmatpush1.bf16.msra.mxu0 %v1114
    %1118 = vmatprep.subr.bf16.mxu0 0
    %1119 = vmatpush1.bf16.msra.mxu0 0
    %1120 = vmatprep.subr.bf16.mxu0 0
    %1121 = vmatpush1.bf16.msra.mxu0 0
    %1122 = vmatprep.subr.bf16.mxu0 0
    %1123 = vmatpush1.bf16.msra.mxu0 0
    %1124 = vmatprep.subr.bf16.mxu0 0
    %1125 = vmatpush1.bf16.msra.mxu0 0
    %1126 = vmatprep.subr.bf16.mxu0 0
    %1127 = vmatpush1.bf16.msra.mxu0 0
    %1128 = vmatprep.subr.bf16.mxu0 0
    %1129 = vmatpush1.bf16.msra.mxu0 0
    %1130 = vmatprep.subr.bf16.mxu0 0
    %1131 = vmatpush1.bf16.msra.mxu0 0
    %1132 = vmatprep.subr.bf16.mxu0 0
    %1133 = vmatpush1.bf16.msra.mxu0 0
    %1134 = vmatprep.subr.bf16.mxu0 0
    %1135 = vmatpush1.bf16.msra.mxu0 0
    %1136 = vmatprep.subr.bf16.mxu0 0
    %1137 = vmatpush1.bf16.msra.mxu0 0
    %1138 = vmatprep.subr.bf16.mxu0 0
    %1139 = vmatpush1.bf16.msra.mxu0 0
    %1140 = vmatprep.subr.bf16.mxu0 0
    %1141 = vmatpush1.bf16.msra.mxu0 0
    %1142 = vmatprep.subr.bf16.mxu0 0
    %1143 = vmatpush1.bf16.msra.mxu0 0
    %1144 = vmatprep.subr.bf16.mxu0 0
    %1145 = vmatpush1.bf16.msra.mxu0 0
    %1146 = vmatprep.subr.bf16.mxu0 0
    %1147 = vmatpush1.bf16.msra.mxu0 0
    %1148 = vmatprep.mubr.bf16.mxu0 0
    %1149 = vmatmul.mubr.bf16.gmra.mrb[0].mxu0 %v1111
    %v1150 = vpop.f32.mrb[0].mxu0
    %v1151 = vadd.f32 0.0, %v1150
    %v1152 = vpop.f32.mrb[0].mxu0
    %v1153 = vpop.f32.mrb[0].mxu0
    %v1154 = vpop.f32.mrb[0].mxu0
    %1155 = vdwg.mxu0
    %1156 = vrot.lane.b32.xlu0 %v312, 104
    %v1157 = vpop.permute.xlu0 %1156
    %v1159 = vsel %vm318, %v1107, 0
    %v1162 = vsel %vm442, %v1157, 0
    %1164 = vmatprep.subr.bf16.mxu0 0
    %1165 = vmatpush1.bf16.msra.mxu0 %v1162
    %1166 = vmatprep.subr.bf16.mxu0 0
    %1167 = vmatpush1.bf16.msra.mxu0 0
    %1168 = vmatprep.subr.bf16.mxu0 0
    %1169 = vmatpush1.bf16.msra.mxu0 0
    %1170 = vmatprep.subr.bf16.mxu0 0
    %1171 = vmatpush1.bf16.msra.mxu0 0
    %1172 = vmatprep.subr.bf16.mxu0 0
    %1173 = vmatpush1.bf16.msra.mxu0 0
    %1174 = vmatprep.subr.bf16.mxu0 0
    %1175 = vmatpush1.bf16.msra.mxu0 0
    %1176 = vmatprep.subr.bf16.mxu0 0
    %1177 = vmatpush1.bf16.msra.mxu0 0
    %1178 = vmatprep.subr.bf16.mxu0 0
    %1179 = vmatpush1.bf16.msra.mxu0 0
    %1180 = vmatprep.subr.bf16.mxu0 0
    %1181 = vmatpush1.bf16.msra.mxu0 0
    %1182 = vmatprep.subr.bf16.mxu0 0
    %1183 = vmatpush1.bf16.msra.mxu0 0
    %1184 = vmatprep.subr.bf16.mxu0 0
    %1185 = vmatpush1.bf16.msra.mxu0 0
    %1186 = vmatprep.subr.bf16.mxu0 0
    %1187 = vmatpush1.bf16.msra.mxu0 0
    %1188 = vmatprep.subr.bf16.mxu0 0
    %1189 = vmatpush1.bf16.msra.mxu0 0
    %1190 = vmatprep.subr.bf16.mxu0 0
    %1191 = vmatpush1.bf16.msra.mxu0 0
    %1192 = vmatprep.subr.bf16.mxu0 0
    %1193 = vmatpush1.bf16.msra.mxu0 0
    %1194 = vmatprep.subr.bf16.mxu0 0
    %1195 = vmatpush1.bf16.msra.mxu0 0
    %1196 = vmatprep.mubr.bf16.mxu0 0
    %1197 = vmatmul.mubr.bf16.gmra.mrb[0].mxu0 %v1159
    %v1198 = vpop.f32.mrb[0].mxu0
    %v1199 = vadd.f32 0.0, %v1198
    %v1200 = vpop.f32.mrb[0].mxu0
    %v1201 = vpop.f32.mrb[0].mxu0
    %v1202 = vpop.f32.mrb[0].mxu0
    %1203 = vdwg.mxu0
    %1206 = vrot.lane.b32.xlu0 %v706, 8
    %v1207 = vpop.permute.xlu0 %1206
    %1208 = vrot.lane.b32.xlu0 %v755, 8
    %v1209 = vpop.permute.xlu0 %1208
    %1214 = vrot.lane.b32.xlu0 %v929, 16
    %v1215 = vpop.permute.xlu0 %1214
    %1216 = vrot.lane.b32.xlu0 %v977, 16
    %v1217 = vpop.permute.xlu0 %1216
    %1222 = vrot.lane.b32.xlu0 %v1151, 24
    %v1223 = vpop.permute.xlu0 %1222
    %1224 = vrot.lane.b32.xlu0 %v1199, 24
    %v1225 = vpop.permute.xlu0 %1224
    %v1228 = vsel %vm318, %v481, %v1207
    %v1229 = vsel %vm318, %v527, %v1209
    %vm1230 = vcmask 130048
    %v1231 = vsel %vm1230, %v1228, %v1215
    %v1232 = vsel %vm1230, %v1229, %v1217
    %vm1233 = vcmask 195584
    %v1234 = vsel %vm1233, %v1231, %v1223
    %v1235 = vsel %vm1233, %v1232, %v1225
    %v1236 = vpack.c.bf16 %v1235, %v1234
    %v1237 = vld [vmem:[%s6] sm:$0xf]
    %v1238 = vld [vmem:[%s6 + $0x4] sm:$0xf]
    %v1239 = vld [vmem:[%s6 + $0x8] sm:$0xf]
    %v1240 = vld [vmem:[%s6 + $0xc] sm:$0xf]
    %v1241 = vld [vmem:[#allocation2] sm:$0x1]
    %v1243 = vlaneseq
    %v1244 = vshrl.u32 %v1243, 7
    %v1245 = vsub.s32 0, %v1244
    %v1246 = vrot.slane %v1241, %v1245
    %v1252 = vunpack.c.l.b16 %v1237
    %v1253 = vunpack.c.l.b16 %v1238
    %v1254 = vunpack.c.l.b16 %v1239
    %v1255 = vunpack.c.l.b16 %v1240
    %v1256 = vpack.c.b16 %v1253, %v1252
    %v1257 = vpack.c.b16 %v1255, %v1254
    %v1261 = vsel %vm88, %v1236, 0
    %1263 = vmatprep.subr.bf16.mxu0 0
    %1264 = vmatpush1.bf16.msra.mxu0 %v1256
    %1265 = vmatprep.subr.bf16.mxu0 0
    %1266 = vmatpush1.bf16.msra.mxu0 %v1257
    %1267 = vmatprep.subr.bf16.mxu0 0
    %1268 = vmatpush1.bf16.msra.mxu0 0
    %1269 = vmatprep.subr.bf16.mxu0 0
    %1270 = vmatpush1.bf16.msra.mxu0 0
    %1271 = vmatprep.subr.bf16.mxu0 0
    %1272 = vmatpush1.bf16.msra.mxu0 0
    %1273 = vmatprep.subr.bf16.mxu0 0
    %1274 = vmatpush1.bf16.msra.mxu0 0
    %1275 = vmatprep.subr.bf16.mxu0 0
    %1276 = vmatpush1.bf16.msra.mxu0 0
    %1277 = vmatprep.subr.bf16.mxu0 0
    %1278 = vmatpush1.bf16.msra.mxu0 0
    %1279 = vmatprep.subr.bf16.mxu0 0
    %1280 = vmatpush1.bf16.msra.mxu0 0
    %1281 = vmatprep.subr.bf16.mxu0 0
    %1282 = vmatpush1.bf16.msra.mxu0 0
    %1283 = vmatprep.subr.bf16.mxu0 0
    %1284 = vmatpush1.bf16.msra.mxu0 0
    %1285 = vmatprep.subr.bf16.mxu0 0
    %1286 = vmatpush1.bf16.msra.mxu0 0
    %1287 = vmatprep.subr.bf16.mxu0 0
    %1288 = vmatpush1.bf16.msra.mxu0 0
    %1289 = vmatprep.subr.bf16.mxu0 0
    %1290 = vmatpush1.bf16.msra.mxu0 0
    %1291 = vmatprep.subr.bf16.mxu0 0
    %1292 = vmatpush1.bf16.msra.mxu0 0
    %1293 = vmatprep.subr.bf16.mxu0 0
    %1294 = vmatpush1.bf16.msra.mxu0 0
    %1295 = vmatprep.mubr.bf16.mxu0 0
    %1296 = vmatmul.mubr.bf16.gmra.mrb[0].mxu0 %v1261
    %v1297 = vpop.f32.mrb[0].mxu0
    %v1298 = vadd.f32 %v1246, %v1297
    %v1299 = vpop.f32.mrb[0].mxu0
    %v1300 = vpop.f32.mrb[0].mxu0
    %v1301 = vadd.f32 %v1246, %v1300
    %v1302 = vpop.f32.mrb[0].mxu0
    %1303 = vdwg.mxu0
    %v1304 = vadd.f32 %v84, %v1298
    %v1305 = vadd.f32 %v85, %v1301
    %v1306 = vld [vmem:[#allocation5] sm:$0x1]
    %v1307 = vld [vmem:[#allocation7] sm:$0x1]
    %v1308 = vsel %vm88, %v1304, 0.0
    %1309 = vadd.xlane.f32.xlu0 %v1308
    %v1310 = vpop.xlane.xlu0 %1309
    %v1311 = vsel %vm88, %v1305, 0.0
    %1312 = vadd.xlane.f32.xlu0 %v1311
    %v1313 = vpop.xlane.xlu0 %1312
    %v1314 = vmul.f32 %v1310, %v95
    %v1315 = vmul.f32 %v1313, %v95
    %v1316 = vsub.f32 %v1304, %v1314
    %v1317 = vsub.f32 %v1305, %v1315
    %v1318 = vmul.f32 %v1316, %v1316
    %v1319 = vmul.f32 %v1317, %v1317
    %v1320 = vsel %vm88, %v1318, 0.0
    %1321 = vadd.xlane.f32.xlu0 %v1320
    %v1322 = vpop.xlane.xlu0 %1321
    %v1323 = vsel %vm88, %v1319, 0.0
    %1324 = vadd.xlane.f32.xlu0 %v1323
    %v1325 = vpop.xlane.xlu0 %1324
    %v1326 = vmul.f32 %v1322, %v95
    %v1327 = vmul.f32 %v1325, %v95
    %v1328 = vadd.f32 %v1326, 1e-05
    %v1329 = vadd.f32 %v1327, 1e-05
    %v1330 = vrsqrt.pop %v1328
    %v1331 = vrsqrt.pop %v1329
    %v1332 = vmul.f32 %v1316, %v1330
    %v1333 = vmul.f32 %v1317, %v1331
    %v1335 = vlaneseq
    %v1336 = vshrl.u32 %v1335, 7
    %v1337 = vsub.s32 0, %v1336
    %v1338 = vrot.slane %v1306, %v1337
    %v1340 = vmul.f32 %v1332, %v1338
    %v1341 = vmul.f32 %v1333, %v1338
    %v1343 = vlaneseq
    %v1344 = vshrl.u32 %v1343, 7
    %v1345 = vsub.s32 0, %v1344
    %v1346 = vrot.slane %v1307, %v1345
    %v1348 = vadd.f32 %v1340, %v1346
    %v1349 = vadd.f32 %v1341, %v1346
    %v1350 = vpack.c.bf16 %v1349, %v1348
    %v1351 = vld [vmem:[%s10] sm:$0xf]
    %v1352 = vld [vmem:[%s10 + $0x4] sm:$0xf]
    %v1353 = vld [vmem:[%s10 + $0x8] sm:$0xf]
    %v1354 = vld [vmem:[%s10 + $0xc] sm:$0xf]
    %v1355 = vld [vmem:[%s11] sm:$0x1]
    %v1357 = vlaneseq
    %v1358 = vshrl.u32 %v1357, 7
    %v1359 = vsub.s32 0, %v1358
    %v1360 = vrot.slane %v1355, %v1359
    %v1366 = vunpack.c.l.b16 %v1351
    %v1367 = vunpack.c.l.b16 %v1352
    %v1368 = vunpack.c.l.b16 %v1353
    %v1369 = vunpack.c.l.b16 %v1354
    %v1370 = vpack.c.b16 %v1367, %v1366
    %v1371 = vpack.c.b16 %v1369, %v1368
    %v1375 = vsel %vm88, %v1350, 0
    %1377 = vmatprep.subr.bf16.mxu0 0
    %1378 = vmatpush1.bf16.msra.mxu0 %v1370
    %1379 = vmatprep.subr.bf16.mxu0 0
    %1380 = vmatpush1.bf16.msra.mxu0 %v1371
    %1381 = vmatprep.subr.bf16.mxu0 0
    %1382 = vmatpush1.bf16.msra.mxu0 0
    %1383 = vmatprep.subr.bf16.mxu0 0
    %1384 = vmatpush1.bf16.msra.mxu0 0
    %1385 = vmatprep.subr.bf16.mxu0 0
    %1386 = vmatpush1.bf16.msra.mxu0 0
    %1387 = vmatprep.subr.bf16.mxu0 0
    %1388 = vmatpush1.bf16.msra.mxu0 0
    %1389 = vmatprep.subr.bf16.mxu0 0
    %1390 = vmatpush1.bf16.msra.mxu0 0
    %1391 = vmatprep.subr.bf16.mxu0 0
    %1392 = vmatpush1.bf16.msra.mxu0 0
    %1393 = vmatprep.subr.bf16.mxu0 0
    %1394 = vmatpush1.bf16.msra.mxu0 0
    %1395 = vmatprep.subr.bf16.mxu0 0
    %1396 = vmatpush1.bf16.msra.mxu0 0
    %1397 = vmatprep.subr.bf16.mxu0 0
    %1398 = vmatpush1.bf16.msra.mxu0 0
    %1399 = vmatprep.subr.bf16.mxu0 0
    %1400 = vmatpush1.bf16.msra.mxu0 0
    %1401 = vmatprep.subr.bf16.mxu0 0
    %1402 = vmatpush1.bf16.msra.mxu0 0
    %1403 = vmatprep.subr.bf16.mxu0 0
    %1404 = vmatpush1.bf16.msra.mxu0 0
    %1405 = vmatprep.subr.bf16.mxu0 0
    %1406 = vmatpush1.bf16.msra.mxu0 0
    %1407 = vmatprep.subr.bf16.mxu0 0
    %1408 = vmatpush1.bf16.msra.mxu0 0
    %1409 = vmatprep.mubr.bf16.mxu0 0
    %1410 = vmatmul.mubr.bf16.gmra.mrb[0].mxu0 %v1375
    %v1411 = vpop.f32.mrb[0].mxu0
    %v1412 = vadd.f32 %v1360, %v1411
    %v1413 = vpop.f32.mrb[0].mxu0
    %v1414 = vpop.f32.mrb[0].mxu0
    %v1415 = vadd.f32 %v1360, %v1414
    %v1416 = vpop.f32.mrb[0].mxu0
    %1417 = vdwg.mxu0
    %v1418 = vmax.f32 %v1412, 0.0
    %v1419 = vmax.f32 %v1415, 0.0
    %v1420 = vpack.c.bf16 %v1419, %v1418
    %v1421 = vld [vmem:[%s12] sm:$0xf]
    %v1422 = vld [vmem:[%s12 + $0x4] sm:$0xf]
    %v1423 = vld [vmem:[%s12 + $0x8] sm:$0xf]
    %v1424 = vld [vmem:[%s12 + $0xc] sm:$0xf]
    %v1425 = vld [vmem:[%s12 + $0x10] sm:$0xf]
    %v1426 = vld [vmem:[%s12 + $0x14] sm:$0xf]
    %v1427 = vld [vmem:[%s12 + $0x18] sm:$0xf]
    %v1428 = vld [vmem:[%s12 + $0x1c] sm:$0xf]
    %v1429 = vld [vmem:[%s12 + $0x20] sm:$0xf]
    %v1430 = vld [vmem:[%s12 + $0x24] sm:$0xf]
    %v1431 = vld [vmem:[%s12 + $0x28] sm:$0xf]
    %v1432 = vld [vmem:[%s12 + $0x2c] sm:$0xf]
    %v1433 = vld [vmem:[%s12 + $0x30] sm:$0xf]
    %v1434 = vld [vmem:[%s12 + $0x34] sm:$0xf]
    %v1435 = vld [vmem:[%s12 + $0x38] sm:$0xf]
    %v1436 = vld [vmem:[%s12 + $0x3c] sm:$0xf]
    %v1437 = vld [vmem:[%s13] sm:$0x1]
    %v1439 = vlaneseq
    %v1440 = vshrl.u32 %v1439, 7
    %v1441 = vsub.s32 0, %v1440
    %v1442 = vrot.slane %v1437, %v1441
    %v1460 = vunpack.c.l.b16 %v1421
    %v1461 = vunpack.c.l.b16 %v1422
    %v1462 = vunpack.c.l.b16 %v1423
    %v1463 = vunpack.c.l.b16 %v1424
    %v1464 = vunpack.c.l.b16 %v1425
    %v1465 = vunpack.c.l.b16 %v1426
    %v1466 = vunpack.c.l.b16 %v1427
    %v1467 = vunpack.c.l.b16 %v1428
    %v1468 = vunpack.c.l.b16 %v1429
    %v1469 = vunpack.c.l.b16 %v1430
    %v1470 = vunpack.c.l.b16 %v1431
    %v1471 = vunpack.c.l.b16 %v1432
    %v1472 = vunpack.c.l.b16 %v1433
    %v1473 = vunpack.c.l.b16 %v1434
    %v1474 = vunpack.c.l.b16 %v1435
    %v1475 = vunpack.c.l.b16 %v1436
    %v1476 = vpack.c.b16 %v1461, %v1460
    %v1477 = vpack.c.b16 %v1463, %v1462
    %v1478 = vpack.c.b16 %v1465, %v1464
    %v1479 = vpack.c.b16 %v1467, %v1466
    %v1480 = vpack.c.b16 %v1469, %v1468
    %v1481 = vpack.c.b16 %v1471, %v1470
    %v1482 = vpack.c.b16 %v1473, %v1472
    %v1483 = vpack.c.b16 %v1475, %v1474
    %1492 = vmatprep.subr.bf16.mxu0 0
    %1493 = vmatpush1.bf16.msra.mxu0 %v1476
    %1494 = vmatprep.subr.bf16.mxu0 0
    %1495 = vmatpush1.bf16.msra.mxu0 %v1477
    %1496 = vmatprep.subr.bf16.mxu0 0
    %1497 = vmatpush1.bf16.msra.mxu0 %v1478
    %1498 = vmatprep.subr.bf16.mxu0 0
    %1499 = vmatpush1.bf16.msra.mxu0 %v1479
    %1500 = vmatprep.subr.bf16.mxu0 0
    %1501 = vmatpush1.bf16.msra.mxu0 %v1480
    %1502 = vmatprep.subr.bf16.mxu0 0
    %1503 = vmatpush1.bf16.msra.mxu0 %v1481
    %1504 = vmatprep.subr.bf16.mxu0 0
    %1505 = vmatpush1.bf16.msra.mxu0 %v1482
    %1506 = vmatprep.subr.bf16.mxu0 0
    %1507 = vmatpush1.bf16.msra.mxu0 %v1483
    %1508 = vmatprep.subr.bf16.mxu0 0
    %1509 = vmatpush1.bf16.msra.mxu0 0
    %1510 = vmatprep.subr.bf16.mxu0 0
    %1511 = vmatpush1.bf16.msra.mxu0 0
    %1512 = vmatprep.subr.bf16.mxu0 0
    %1513 = vmatpush1.bf16.msra.mxu0 0
    %1514 = vmatprep.subr.bf16.mxu0 0
    %1515 = vmatpush1.bf16.msra.mxu0 0
    %1516 = vmatprep.subr.bf16.mxu0 0
    %1517 = vmatpush1.bf16.msra.mxu0 0
    %1518 = vmatprep.subr.bf16.mxu0 0
    %1519 = vmatpush1.bf16.msra.mxu0 0
    %1520 = vmatprep.subr.bf16.mxu0 0
    %1521 = vmatpush1.bf16.msra.mxu0 0
    %1522 = vmatprep.subr.bf16.mxu0 0
    %1523 = vmatpush1.bf16.msra.mxu0 0
    %1524 = vmatprep.mubr.bf16.mxu0 0
    %1525 = vmatmul.mubr.bf16.gmra.mrb[0].mxu0 %v1420
    %v1526 = vpop.f32.mrb[0].mxu0
    %v1527 = vadd.f32 %v1442, %v1526
    %v1528 = vpop.f32.mrb[0].mxu0
    %v1529 = vpop.f32.mrb[0].mxu0
    %v1530 = vadd.f32 %v1442, %v1529
    %v1531 = vpop.f32.mrb[0].mxu0
    %1532 = vdwg.mxu0
    %v1533 = vadd.f32 %v1304, %v1527
    %v1534 = vadd.f32 %v1305, %v1530
    %1535 = vst.msk [vmem:[#allocation8] sm:$0xff] %vm88, %v1533
    %1536 = vst.msk [vmem:[#allocation8 + $0x8] sm:$0xff] %vm88, %v1534
    // Predicated region
    $region70: #{tpu_custom_call.1} parent=1 // pred_check
      _
    $region71: #{tpu_custom_call.1} parent=1 // pred_check_branch
      %1538 = sbr.rel (0) target = $region73
    $region72: #{tpu_custom_call.1} parent=1 // pred_region
      %s1540 = ssub.s32 256, 256
      %1541 = vsyncadd [#allocation4], %s1540
      %s1542 = sshll.u32 [#allocation8], 4
      %s1543 = int_to_ptr.vmem [resolvable:$true] %s1542
      %1548 = dma.vmem_to_hbm [thread:$0]  %s1543, 256, %s14, [#allocation4], 128, 128, 8
    $region73: #{tpu_custom_call.1} parent=1 // pred_fallthru
      _
    // Predicated region
    $region74: #{tpu_custom_call.1} parent=1 // pred_check
      _
    $region75: #{tpu_custom_call.1} parent=1 // pred_check_branch
      %1550 = sbr.rel (0) target = $region77
    $region76: #{tpu_custom_call.1} parent=1 // pred_region
      %1551 = dma.done [#allocation4], 256
    $region77: #{tpu_custom_call.1} parent=1 // pred_fallthru
      _
    %1552 = vsyncpa [#allocation3], 1
    %1553 = vsyncpa [#allocation6], 1
    %1554 = vsyncpa [#allocation4], 1

</llo_original>
